<compile_context>
chip_gen: v7x
topology: tpu7x:2x2x1
jax: 0.10.0
libtpu: 0.0.40
codegen_flags: <defaults>
</compile_context>

<pallas_src>
import jax
import jax.numpy as jnp
import numpy as np
from jax.experimental import pallas as pl
from jax.experimental.pallas import tpu as pltpu


# ----------------------------------------------------------------------------
# helpers
# ----------------------------------------------------------------------------

def _bn_fold(bn, eps=1e-5):
    """Inference BN -> per-channel (scale, bias) flat vectors."""
    scale = bn['gamma'] * jax.lax.rsqrt(bn['var'] + eps)
    bias = bn['beta'] - bn['mean'] * scale
    return scale, bias


def _silu(x):
    return x * jax.nn.sigmoid(x)


# ----------------------------------------------------------------------------
# In-kernel building blocks
# ----------------------------------------------------------------------------

def _dw3x3_silu(act_sm, wdw, bdw, ho, wo):
    """Depthwise 3x3 (pad 1, BN scale folded into wdw) + BN bias + SiLU.

    act_sm: (ho*wo, cin) f32 spatial-major value.  Zero padding is built
    in-register with concatenate (no HBM pad between stages); the 3 column
    shifts are hoisted so only 2 unaligned sublane slices are taken.
    """
    cin = act_sm.shape[-1]
    a = act_sm.reshape(ho, wo, cin)
    zrow = jnp.zeros((1, wo, cin), jnp.float32)
    zcol = jnp.zeros((ho + 2, 1, cin), jnp.float32)
    ap = jnp.concatenate([zrow, a, zrow], axis=0)            # (ho+2, wo,   cin)
    ap = jnp.concatenate([zcol, ap, zcol], axis=1)           # (ho+2, wo+2, cin)
    cols = tuple(ap[:, dx:dx + wo, :] for dx in range(3))    # 3 x (ho+2, wo, cin)
    acc = jnp.zeros((ho, wo, cin), jnp.float32)
    for dy in range(3):
        for dx in range(3):
            acc = acc + cols[dx][dy:dy + ho] * wdw[dy, dx]
    hid = acc.reshape(ho * wo, cin) + bdw                    # + folded BN bias
    return _silu(hid)


def _make_encoder_kernel(ho, wo, residuals):
    """Builds the fused kernel (closure over static spatial dims / block list)."""
    nb = len(residuals)
    hw = ho * wo

    def kernel(*refs):
        ph_ref = refs[0]
        (wstem_sm_ref, s1_sm_ref, b1_sm_ref,
         wstem_cm_ref, s1_cm_ref, b1_cm_ref) = refs[1:7]
        blk_refs = refs[7:7 + 6 * nb]
        whead_cm_ref, s2_cm_ref, b2_cm_ref = refs[7 + 6 * nb:10 + 6 * nb]
        outs = refs[10 + 6 * nb:]
        stem_ref, bn1_ref, act1_ref = outs[0:3]
        blk_out_refs = outs[3:3 + nb]
        head_ref, bn2_ref, act2_ref = outs[3 + nb:]

        cin = ph_ref.shape[-1]

        # ---- conv_stem (3x3, stride 2): gather the 9 taps from the 4 phase
        #      slabs and fuse them into ONE K=9*cin MXU pass. ----
        taps = []
        for dy in range(3):
            for dx in range(3):
                pi = (dy % 2) * 2 + (dx % 2)
                t = ph_ref[pi, dy // 2:dy // 2 + ho, dx // 2:dx // 2 + wo, :]
                taps.append(t.reshape(hw, cin))
        # one bf16 cast of the concatenated tap matrix (instead of 9 per-tap casts)
        taps = jnp.concatenate(taps, axis=-1).astype(jnp.bfloat16)   # (hw, 9*cin)

        # channel-major results (stored; HBM layout == NCHW)
        conv_cm = jnp.einsum('ck,nk->cn', wstem_cm_ref[...], taps,
                             preferred_element_type=jnp.float32)     # (c0, hw)
        bn1_cm = conv_cm * s1_cm_ref[...] + b1_cm_ref[...]
        act1_cm = _silu(bn1_cm)
        stem_ref[...] = conv_cm
        bn1_ref[...] = bn1_cm
        act1_ref[...] = act1_cm

        # spatial-major copy of act1 feeds the first depthwise; the duplicated
        # tiny GEMM is cheaper than a vreg transpose / masked narrow store.
        prev_cm = act1_cm
        prev_sm = None
        if nb > 0:
            conv_sm = jnp.dot(taps, wstem_sm_ref[...],
                              preferred_element_type=jnp.float32)    # (hw, c0)
            prev_sm = _silu(conv_sm * s1_sm_ref[...] + b1_sm_ref[...])

        # ---- MBConv-style blocks: dw3x3(+BN)+SiLU -> pw1x1(+BN) [+residual] ----
        for bi in range(nb):
            (wdw_ref, bdw_ref, wpw_sm_ref, bpw_sm_ref,
             wpw_cm_ref, bpw_cm_ref) = blk_refs[6 * bi:6 * bi + 6]
            hid = _dw3x3_silu(prev_sm, wdw_ref[...], bdw_ref[...], ho, wo)
            hid_b = hid.astype(jnp.bfloat16)                         # (hw, cin)
            y_cm = jnp.einsum('ck,nk->cn', wpw_cm_ref[...], hid_b,
                              preferred_element_type=jnp.float32)    # (cout, hw)
            y_cm = y_cm + bpw_cm_ref[...]
            if residuals[bi]:
                y_cm = y_cm + prev_cm
            blk_out_refs[bi][...] = y_cm
            if bi + 1 < nb:   # next block's depthwise needs a spatial-major copy
                y_sm = jnp.dot(hid_b, wpw_sm_ref[...],
                               preferred_element_type=jnp.float32)
                y_sm = y_sm + bpw_sm_ref[...]
                if residuals[bi]:
                    y_sm = y_sm + prev_sm
                prev_sm = y_sm
            prev_cm = y_cm

        # ---- conv_head (1x1) + bn2 + act2, all channel-major ----
        head_cm = jnp.dot(whead_cm_ref[...], prev_cm.astype(jnp.bfloat16),
                          preferred_element_type=jnp.float32)        # (chead, hw)
        bn2_cm = head_cm * s2_cm_ref[...] + b2_cm_ref[...]
        head_ref[...] = head_cm
        bn2_ref[...] = bn2_cm
        act2_ref[...] = _silu(bn2_cm)

    return kernel


# ----------------------------------------------------------------------------
# Encoder_EffNet forward (single fused pallas_call) — returns NCHW features.
# ----------------------------------------------------------------------------

def encoder_effnet_forward(x_nchw, params):
    """[x, conv_stem, bn1, act1, block_0, ..., conv_head, bn2, act2] (NCHW)."""
    n, cin, h, w = x_nchw.shape
    assert h % 2 == 0 and w % 2 == 0, "stride-2 phase split assumes even H, W"
    ho, wo = h // 2, w // 2
    hw = ho * wo

    # ---- input prep (one-time XLA layout plumbing, ~1x the input bytes) ----
    x_nhwc = jnp.transpose(x_nchw, (0, 2, 3, 1))
    xp = jnp.pad(x_nhwc, ((0, 0), (1, 1), (1, 1), (0, 0)))
    # stride-2 phase decomposition stacked into ONE input slab (single DMA/step).
    # Kept f32 so in-kernel tap slicing stays on robust unpacked sublane layouts.
    phases = jnp.stack(
        [xp[:, py::2, px::2, :] for py in range(2) for px in range(2)],
        axis=1)                                            # (n, 4, hp, wp, cin)
    hp, wp = phases.shape[2], phases.shape[3]

    # ---- fold weights / BN (tiny f32 tensors, done once in XLA) ----
    w_oihw = params['conv_stem']                           # (c0, cin, 3, 3)
    c0 = w_oihw.shape[0]
    K = 9 * cin
    wstem_sm = jnp.transpose(w_oihw, (2, 3, 1, 0)).reshape(K, c0).astype(jnp.bfloat16)
    wstem_cm = jnp.transpose(w_oihw, (0, 2, 3, 1)).reshape(c0, K).astype(jnp.bfloat16)
    s1, b1 = _bn_fold(params['bn1'])
    stem_inputs = [wstem_sm, s1.reshape(1, c0), b1.reshape(1, c0),
                   wstem_cm, s1.reshape(c0, 1), b1.reshape(c0, 1)]

    blk_inputs, residuals, block_channels = [], [], []
    for blk in params['blocks']:
        s_dw, b_dw = _bn_fold(blk['bn_dw'])
        s_pw, b_pw = _bn_fold(blk['bn_pw'])
        cin_b = blk['dw_w'].shape[0]
        cout_b = blk['pw_w'].shape[0]
        wdw = jnp.transpose(blk['dw_w'][:, 0], (1, 2, 0)) * s_dw      # (3,3,cin)
        pw = blk['pw_w'][:, :, 0, 0] * s_pw[:, None]                  # (cout,cin)
        blk_inputs += [
            wdw,
            b_dw.reshape(1, cin_b),
            jnp.transpose(pw, (1, 0)).astype(jnp.bfloat16),           # wpw_sm
            b_pw.reshape(1, cout_b),
            pw.astype(jnp.bfloat16),                                  # wpw_cm
            b_pw.reshape(cout_b, 1),
        ]
        residuals.append(bool(blk['residual']))
        block_channels.append(cout_b)

    chead = params['conv_head'].shape[0]
    whead_cm = params['conv_head'][:, :, 0, 0].astype(jnp.bfloat16)   # (chead, c1)
    s2, b2 = _bn_fold(params['bn2'])
    head_inputs = [whead_cm, s2.reshape(chead, 1), b2.reshape(chead, 1)]

    weight_inputs = stem_inputs + blk_inputs + head_inputs

    # ---- pallas_call plumbing ----
    out_channels = [c0, c0, c0] + block_channels + [chead, chead, chead]
    out_shape = [jax.ShapeDtypeStruct((n, c, hw), jnp.float32) for c in out_channels]
    out_specs = [pl.BlockSpec((None, c, hw), lambda b: (b, 0, 0)) for c in out_channels]

    def _wspec(arr):
        nd = arr.ndim
        return pl.BlockSpec(arr.shape, lambda b, _nd=nd: (0,) * _nd)

    in_specs = [pl.BlockSpec((None, 4, hp, wp, cin), lambda b: (b, 0, 0, 0, 0))]
    in_specs += [_wspec(a) for a in weight_inputs]

    kernel = _make_encoder_kernel(ho, wo, tuple(residuals))
    feats = pl.pallas_call(
        kernel,
        out_shape=out_shape,
        grid=(n,),
        in_specs=in_specs,
        out_specs=out_specs,
        compiler_params=pltpu.CompilerParams(
            dimension_semantics=("parallel",)),
    )(phases, *weight_inputs)

    # (n, C, h*w) -> (n, C, h, w) is a free reshape: layout is already NCHW.
    return [x_nchw] + [f.reshape(n, c, ho, wo) for f, c in zip(feats, out_channels)]


# ----------------------------------------------------------------------------
# Synthetic EfficientNet-style backend parameters (deterministic).
# ----------------------------------------------------------------------------

def init_params(key, cin=4, c0=8, c1=16, chead=32):
    keys = iter(jax.random.split(key, 32))

    def conv_w(cout, cin_, kh, kw):
        fan_in = cin_ * kh * kw
        return jax.random.normal(next(keys), (cout, cin_, kh, kw), jnp.float32) / jnp.sqrt(
            jnp.float32(fan_in))

    def bn_p(c):
        k1, k2, k3, k4 = jax.random.split(next(keys), 4)
        return dict(
            gamma=1.0 + 0.1 * jax.random.normal(k1, (c,), jnp.float32),
            beta=0.1 * jax.random.normal(k2, (c,), jnp.float32),
            mean=0.1 * jax.random.normal(k3, (c,), jnp.float32),
            var=1.0 + 0.1 * jnp.abs(jax.random.normal(k4, (c,), jnp.float32)),
        )

    def block(cin_, cout):
        return dict(
            dw_w=conv_w(cin_, 1, 3, 3),       # depthwise (C, 1, 3, 3)
            bn_dw=bn_p(cin_),
            pw_w=conv_w(cout, cin_, 1, 1),    # pointwise (Cout, Cin, 1, 1)
            bn_pw=bn_p(cout),
            residual=(cin_ == cout),
        )

    return dict(
        conv_stem=conv_w(c0, cin, 3, 3),      # 3x3, stride 2, pad 1
        bn1=bn_p(c0),
        blocks=[block(c0, c1), block(c1, c1)],
        conv_head=conv_w(chead, c1, 1, 1),
        bn2=bn_p(chead),
    )


# ----------------------------------------------------------------------------
# Pure-JAX reference (NCHW, full f32 precision) for validation.
# ----------------------------------------------------------------------------

def _ref_conv(x, w, stride, padding, groups=1):
    return jax.lax.conv_general_dilated(
        x, w, (stride, stride), [(padding, padding)] * 2,
        dimension_numbers=('NCHW', 'OIHW', 'NCHW'),
        feature_group_count=groups,
        precision=jax.lax.Precision.HIGHEST)


def _ref_bn(x, gamma, beta, mean, var, eps=1e-5):
    scale = gamma * jax.lax.rsqrt(var + eps)
    bias = beta - mean * scale
    return x * scale[None, :, None, None] + bias[None, :, None, None]


def ref_forward(x, params):
    feats = [x]
    feats.append(_ref_conv(feats[-1], params['conv_stem'], 2, 1))
    feats.append(_ref_bn(feats[-1], **params['bn1']))
    feats.append(feats[-1] * jax.nn.sigmoid(feats[-1]))
    for blk in params['blocks']:
        xin = feats[-1]
        y = _ref_conv(xin, blk['dw_w'], 1, 1, groups=xin.shape[1])
        y = _ref_bn(y, **blk['bn_dw'])
        y = y * jax.nn.sigmoid(y)
        y = _ref_conv(y, blk['pw_w'], 1, 0)
        y = _ref_bn(y, **blk['bn_pw'])
        if blk['residual']:
            y = y + xin
        feats.append(y)
    feats.append(_ref_conv(feats[-1], params['conv_head'], 1, 0))
    feats.append(_ref_bn(feats[-1], **params['bn2']))
    feats.append(feats[-1] * jax.nn.sigmoid(feats[-1]))
    return feats


# ----------------------------------------------------------------------------

if __name__ == "__main__":
    key = jax.random.PRNGKey(0)
    pkey, xkey = jax.random.split(key)
    params = init_params(pkey)
    x = jax.random.normal(xkey, (2, 4, 16, 16), jnp.float32)  # NCHW, like PyTorch

    fwd = jax.jit(lambda inp: encoder_effnet_forward(inp, params))
    feats = jax.block_until_ready(fwd(x))

    ref_feats = jax.block_until_ready(ref_forward(x, params))
    assert len(feats) == len(ref_feats) == 9
    for f, r in zip(feats, ref_feats):
        assert f.shape == r.shape, (f.shape, r.shape)
        # bf16 MXU operands (single native pass) chained over 4 stages =>
        # O(1e-2) relative error; tightened from the previous 5e-2.
        np.testing.assert_allclose(np.asarray(f), np.asarray(r), rtol=3e-2, atol=3e-2)

    print("KERNEL_OK")
</pallas_src>

<mosaic_0001>
module attributes {stable_mosaic.version = 11 : i64} {
  func.func @kernel(%arg0: i32, %arg1: memref<1x4x9x9x4xf32, #tpu.memory_space<vmem>>, %arg2: memref<36x8xbf16, #tpu.memory_space<vmem>>, %arg3: memref<1x8xf32, #tpu.memory_space<vmem>>, %arg4: memref<1x8xf32, #tpu.memory_space<vmem>>, %arg5: memref<8x36xbf16, #tpu.memory_space<vmem>>, %arg6: memref<8x1xf32, #tpu.memory_space<vmem>>, %arg7: memref<8x1xf32, #tpu.memory_space<vmem>>, %arg8: memref<3x3x8xf32, #tpu.memory_space<vmem>>, %arg9: memref<1x8xf32, #tpu.memory_space<vmem>>, %arg10: memref<8x16xbf16, #tpu.memory_space<vmem>>, %arg11: memref<1x16xf32, #tpu.memory_space<vmem>>, %arg12: memref<16x8xbf16, #tpu.memory_space<vmem>>, %arg13: memref<16x1xf32, #tpu.memory_space<vmem>>, %arg14: memref<3x3x16xf32, #tpu.memory_space<vmem>>, %arg15: memref<1x16xf32, #tpu.memory_space<vmem>>, %arg16: memref<16x16xbf16, #tpu.memory_space<vmem>>, %arg17: memref<1x16xf32, #tpu.memory_space<vmem>>, %arg18: memref<16x16xbf16, #tpu.memory_space<vmem>>, %arg19: memref<16x1xf32, #tpu.memory_space<vmem>>, %arg20: memref<32x16xbf16, #tpu.memory_space<vmem>>, %arg21: memref<32x1xf32, #tpu.memory_space<vmem>>, %arg22: memref<32x1xf32, #tpu.memory_space<vmem>>, %arg23: memref<1x8x64xf32, #tpu.memory_space<vmem>>, %arg24: memref<1x8x64xf32, #tpu.memory_space<vmem>>, %arg25: memref<1x8x64xf32, #tpu.memory_space<vmem>>, %arg26: memref<1x16x64xf32, #tpu.memory_space<vmem>>, %arg27: memref<1x16x64xf32, #tpu.memory_space<vmem>>, %arg28: memref<1x32x64xf32, #tpu.memory_space<vmem>>, %arg29: memref<1x32x64xf32, #tpu.memory_space<vmem>>, %arg30: memref<1x32x64xf32, #tpu.memory_space<vmem>>) attributes {dimension_semantics = [#tpu.dimension_semantics<parallel>], iteration_bounds = array<i64: 2>, scalar_prefetch = 0 : i64, scratch_operands = 0 : i64, tpu.core_type = #tpu.core_type<tc>, window_params = [{transform_indices = @transform_0, window_bounds = array<i64: 1, 4, 9, 9, 4>}, {pipeline_mode = #tpu.pipeline_mode<synchronous>, transform_indices = @transform_1, window_bounds = array<i64: 36, 8>}, {pipeline_mode = #tpu.pipeline_mode<synchronous>, transform_indices = @transform_2, window_bounds = array<i64: 1, 8>}, {pipeline_mode = #tpu.pipeline_mode<synchronous>, transform_indices = @transform_3, window_bounds = array<i64: 1, 8>}, {pipeline_mode = #tpu.pipeline_mode<synchronous>, transform_indices = @transform_4, window_bounds = array<i64: 8, 36>}, {pipeline_mode = #tpu.pipeline_mode<synchronous>, transform_indices = @transform_5, window_bounds = array<i64: 8, 1>}, {pipeline_mode = #tpu.pipeline_mode<synchronous>, transform_indices = @transform_6, window_bounds = array<i64: 8, 1>}, {pipeline_mode = #tpu.pipeline_mode<synchronous>, transform_indices = @transform_7, window_bounds = array<i64: 3, 3, 8>}, {pipeline_mode = #tpu.pipeline_mode<synchronous>, transform_indices = @transform_8, window_bounds = array<i64: 1, 8>}, {pipeline_mode = #tpu.pipeline_mode<synchronous>, transform_indices = @transform_9, window_bounds = array<i64: 8, 16>}, {pipeline_mode = #tpu.pipeline_mode<synchronous>, transform_indices = @transform_10, window_bounds = array<i64: 1, 16>}, {pipeline_mode = #tpu.pipeline_mode<synchronous>, transform_indices = @transform_11, window_bounds = array<i64: 16, 8>}, {pipeline_mode = #tpu.pipeline_mode<synchronous>, transform_indices = @transform_12, window_bounds = array<i64: 16, 1>}, {pipeline_mode = #tpu.pipeline_mode<synchronous>, transform_indices = @transform_13, window_bounds = array<i64: 3, 3, 16>}, {pipeline_mode = #tpu.pipeline_mode<synchronous>, transform_indices = @transform_14, window_bounds = array<i64: 1, 16>}, {pipeline_mode = #tpu.pipeline_mode<synchronous>, transform_indices = @transform_15, window_bounds = array<i64: 16, 16>}, {pipeline_mode = #tpu.pipeline_mode<synchronous>, transform_indices = @transform_16, window_bounds = array<i64: 1, 16>}, {pipeline_mode = #tpu.pipeline_mode<synchronous>, transform_indices = @transform_17, window_bounds = array<i64: 16, 16>}, {pipeline_mode = #tpu.pipeline_mode<synchronous>, transform_indices = @transform_18, window_bounds = array<i64: 16, 1>}, {pipeline_mode = #tpu.pipeline_mode<synchronous>, transform_indices = @transform_19, window_bounds = array<i64: 32, 16>}, {pipeline_mode = #tpu.pipeline_mode<synchronous>, transform_indices = @transform_20, window_bounds = array<i64: 32, 1>}, {pipeline_mode = #tpu.pipeline_mode<synchronous>, transform_indices = @transform_21, window_bounds = array<i64: 32, 1>}, {transform_indices = @transform_22, window_bounds = array<i64: 1, 8, 64>}, {transform_indices = @transform_23, window_bounds = array<i64: 1, 8, 64>}, {transform_indices = @transform_24, window_bounds = array<i64: 1, 8, 64>}, {transform_indices = @transform_25, window_bounds = array<i64: 1, 16, 64>}, {transform_indices = @transform_26, window_bounds = array<i64: 1, 16, 64>}, {transform_indices = @transform_27, window_bounds = array<i64: 1, 32, 64>}, {transform_indices = @transform_28, window_bounds = array<i64: 1, 32, 64>}, {transform_indices = @transform_29, window_bounds = array<i64: 1, 32, 64>}]} {
    %c0 = arith.constant 0 : index
    %c0_0 = arith.constant 0 : index
    %c0_1 = arith.constant 0 : index
    %c0_2 = arith.constant 0 : index
    %c0_3 = arith.constant 0 : index
    %0 = vector.load %arg1[%c0, %c0_0, %c0_1, %c0_2, %c0_3] : memref<1x4x9x9x4xf32, #tpu.memory_space<vmem>>, vector<1x1x8x8x4xf32>
    %1 = vector.shape_cast %0 : vector<1x1x8x8x4xf32> to vector<8x8x4xf32>
    %2 = vector.shape_cast %1 : vector<8x8x4xf32> to vector<64x4xf32>
    %c0_4 = arith.constant 0 : index
    %c1 = arith.constant 1 : index
    %c0_5 = arith.constant 0 : index
    %c0_6 = arith.constant 0 : index
    %c0_7 = arith.constant 0 : index
    %3 = vector.load %arg1[%c0_4, %c1, %c0_5, %c0_6, %c0_7] : memref<1x4x9x9x4xf32, #tpu.memory_space<vmem>>, vector<1x1x8x8x4xf32>
    %4 = vector.shape_cast %3 : vector<1x1x8x8x4xf32> to vector<8x8x4xf32>
    %5 = vector.shape_cast %4 : vector<8x8x4xf32> to vector<64x4xf32>
    %c0_8 = arith.constant 0 : index
    %c0_9 = arith.constant 0 : index
    %c0_10 = arith.constant 0 : index
    %c1_11 = arith.constant 1 : index
    %c0_12 = arith.constant 0 : index
    %6 = vector.load %arg1[%c0_8, %c0_9, %c0_10, %c1_11, %c0_12] : memref<1x4x9x9x4xf32, #tpu.memory_space<vmem>>, vector<1x1x8x8x4xf32>
    %7 = vector.shape_cast %6 : vector<1x1x8x8x4xf32> to vector<8x8x4xf32>
    %8 = vector.shape_cast %7 : vector<8x8x4xf32> to vector<64x4xf32>
    %c0_13 = arith.constant 0 : index
    %c2 = arith.constant 2 : index
    %c0_14 = arith.constant 0 : index
    %c0_15 = arith.constant 0 : index
    %c0_16 = arith.constant 0 : index
    %9 = vector.load %arg1[%c0_13, %c2, %c0_14, %c0_15, %c0_16] : memref<1x4x9x9x4xf32, #tpu.memory_space<vmem>>, vector<1x1x8x8x4xf32>
    %10 = vector.shape_cast %9 : vector<1x1x8x8x4xf32> to vector<8x8x4xf32>
    %11 = vector.shape_cast %10 : vector<8x8x4xf32> to vector<64x4xf32>
    %c0_17 = arith.constant 0 : index
    %c3 = arith.constant 3 : index
    %c0_18 = arith.constant 0 : index
    %c0_19 = arith.constant 0 : index
    %c0_20 = arith.constant 0 : index
    %12 = vector.load %arg1[%c0_17, %c3, %c0_18, %c0_19, %c0_20] : memref<1x4x9x9x4xf32, #tpu.memory_space<vmem>>, vector<1x1x8x8x4xf32>
    %13 = vector.shape_cast %12 : vector<1x1x8x8x4xf32> to vector<8x8x4xf32>
    %14 = vector.shape_cast %13 : vector<8x8x4xf32> to vector<64x4xf32>
    %c0_21 = arith.constant 0 : index
    %c2_22 = arith.constant 2 : index
    %c0_23 = arith.constant 0 : index
    %c1_24 = arith.constant 1 : index
    %c0_25 = arith.constant 0 : index
    %15 = vector.load %arg1[%c0_21, %c2_22, %c0_23, %c1_24, %c0_25] : memref<1x4x9x9x4xf32, #tpu.memory_space<vmem>>, vector<1x1x8x8x4xf32>
    %16 = vector.shape_cast %15 : vector<1x1x8x8x4xf32> to vector<8x8x4xf32>
    %17 = vector.shape_cast %16 : vector<8x8x4xf32> to vector<64x4xf32>
    %c0_26 = arith.constant 0 : index
    %c0_27 = arith.constant 0 : index
    %c1_28 = arith.constant 1 : index
    %c0_29 = arith.constant 0 : index
    %c0_30 = arith.constant 0 : index
    %18 = vector.load %arg1[%c0_26, %c0_27, %c1_28, %c0_29, %c0_30] : memref<1x4x9x9x4xf32, #tpu.memory_space<vmem>>, vector<1x1x8x8x4xf32>
    %19 = vector.shape_cast %18 : vector<1x1x8x8x4xf32> to vector<8x8x4xf32>
    %20 = vector.shape_cast %19 : vector<8x8x4xf32> to vector<64x4xf32>
    %c0_31 = arith.constant 0 : index
    %c1_32 = arith.constant 1 : index
    %c1_33 = arith.constant 1 : index
    %c0_34 = arith.constant 0 : index
    %c0_35 = arith.constant 0 : index
    %21 = vector.load %arg1[%c0_31, %c1_32, %c1_33, %c0_34, %c0_35] : memref<1x4x9x9x4xf32, #tpu.memory_space<vmem>>, vector<1x1x8x8x4xf32>
    %22 = vector.shape_cast %21 : vector<1x1x8x8x4xf32> to vector<8x8x4xf32>
    %23 = vector.shape_cast %22 : vector<8x8x4xf32> to vector<64x4xf32>
    %c0_36 = arith.constant 0 : index
    %c0_37 = arith.constant 0 : index
    %c1_38 = arith.constant 1 : index
    %c1_39 = arith.constant 1 : index
    %c0_40 = arith.constant 0 : index
    %24 = vector.load %arg1[%c0_36, %c0_37, %c1_38, %c1_39, %c0_40] : memref<1x4x9x9x4xf32, #tpu.memory_space<vmem>>, vector<1x1x8x8x4xf32>
    %25 = vector.shape_cast %24 : vector<1x1x8x8x4xf32> to vector<8x8x4xf32>
    %26 = vector.shape_cast %25 : vector<8x8x4xf32> to vector<64x4xf32>
    %27 = tpu.concatenate %2, %5, %8, %11, %14, %17, %20, %23, %26 in 1 : vector<64x4xf32>, vector<64x4xf32>, vector<64x4xf32>, vector<64x4xf32>, vector<64x4xf32>, vector<64x4xf32>, vector<64x4xf32>, vector<64x4xf32>, vector<64x4xf32> -> vector<64x36xf32>
    %28 = arith.truncf %27 : vector<64x36xf32> to vector<64x36xbf16>
    %c0_41 = arith.constant 0 : index
    %c0_42 = arith.constant 0 : index
    %29 = vector.load %arg5[%c0_41, %c0_42] : memref<8x36xbf16, #tpu.memory_space<vmem>>, vector<8x36xbf16>
    "tpu.trace_start"() <{level = 10 : i32, message = "ck,nk->cn"}> : () -> ()
    %cst = arith.constant dense<0.000000e+00> : vector<8x64xf32>
    %30 = tpu.matmul %29, %28, %cst {dimension_numbers = #tpu.dot_dimension_numbers<[1], [1], [0], [0], [0, 0, 1, 0], [], []>} : vector<8x36xbf16>, vector<64x36xbf16>, vector<8x64xf32> -> vector<8x64xf32>
    "tpu.trace_stop"() : () -> ()
    %c0_43 = arith.constant 0 : index
    %c0_44 = arith.constant 0 : index
    %31 = vector.load %arg6[%c0_43, %c0_44] : memref<8x1xf32, #tpu.memory_space<vmem>>, vector<8x1xf32>
    %32 = vector.broadcast %31 : vector<8x1xf32> to vector<8x64xf32>
    %33 = arith.mulf %30, %32 : vector<8x64xf32>
    %c0_45 = arith.constant 0 : index
    %c0_46 = arith.constant 0 : index
    %34 = vector.load %arg7[%c0_45, %c0_46] : memref<8x1xf32, #tpu.memory_space<vmem>>, vector<8x1xf32>
    %35 = vector.broadcast %34 : vector<8x1xf32> to vector<8x64xf32>
    %36 = arith.addf %33, %35 : vector<8x64xf32>
    %37 = arith.negf %36 : vector<8x64xf32>
    %38 = math.exp %37 : vector<8x64xf32>
    %cst_47 = arith.constant 1.000000e+00 : f32
    %39 = vector.broadcast %cst_47 : f32 to vector<8x64xf32>
    %40 = arith.addf %39, %38 : vector<8x64xf32>
    %41 = arith.divf %39, %40 : vector<8x64xf32>
    %42 = arith.mulf %36, %41 : vector<8x64xf32>
    %c0_48 = arith.constant 0 : index
    %c0_49 = arith.constant 0 : index
    %c0_50 = arith.constant 0 : index
    %43 = vector.load %arg23[%c0_48, %c0_49, %c0_50] : memref<1x8x64xf32, #tpu.memory_space<vmem>>, vector<1x8x64xf32>
    %44 = vector.shape_cast %43 : vector<1x8x64xf32> to vector<8x64xf32>
    %45 = vector.shape_cast %30 : vector<8x64xf32> to vector<1x8x64xf32>
    tpu.vector_store %arg23[%c0_48, %c0_49, %c0_50], %45 {strides = array<i32>} : memref<1x8x64xf32, #tpu.memory_space<vmem>>, vector<1x8x64xf32>,
    %c0_51 = arith.constant 0 : index
    %c0_52 = arith.constant 0 : index
    %c0_53 = arith.constant 0 : index
    %46 = vector.load %arg24[%c0_51, %c0_52, %c0_53] : memref<1x8x64xf32, #tpu.memory_space<vmem>>, vector<1x8x64xf32>
    %47 = vector.shape_cast %46 : vector<1x8x64xf32> to vector<8x64xf32>
    %48 = vector.shape_cast %36 : vector<8x64xf32> to vector<1x8x64xf32>
    tpu.vector_store %arg24[%c0_51, %c0_52, %c0_53], %48 {strides = array<i32>} : memref<1x8x64xf32, #tpu.memory_space<vmem>>, vector<1x8x64xf32>,
    %c0_54 = arith.constant 0 : index
    %c0_55 = arith.constant 0 : index
    %c0_56 = arith.constant 0 : index
    %49 = vector.load %arg25[%c0_54, %c0_55, %c0_56] : memref<1x8x64xf32, #tpu.memory_space<vmem>>, vector<1x8x64xf32>
    %50 = vector.shape_cast %49 : vector<1x8x64xf32> to vector<8x64xf32>
    %51 = vector.shape_cast %42 : vector<8x64xf32> to vector<1x8x64xf32>
    tpu.vector_store %arg25[%c0_54, %c0_55, %c0_56], %51 {strides = array<i32>} : memref<1x8x64xf32, #tpu.memory_space<vmem>>, vector<1x8x64xf32>,
    %c0_57 = arith.constant 0 : index
    %c0_58 = arith.constant 0 : index
    %52 = vector.load %arg2[%c0_57, %c0_58] : memref<36x8xbf16, #tpu.memory_space<vmem>>, vector<36x8xbf16>
    %cst_59 = arith.constant dense<0.000000e+00> : vector<64x8xf32>
    %53 = tpu.matmul %28, %52, %cst_59 {dimension_numbers = #tpu.dot_dimension_numbers<[1], [0], [0], [1], [0, 0, 1, 1], [], []>} : vector<64x36xbf16>, vector<36x8xbf16>, vector<64x8xf32> -> vector<64x8xf32>
    %c0_60 = arith.constant 0 : index
    %c0_61 = arith.constant 0 : index
    %54 = vector.load %arg3[%c0_60, %c0_61] : memref<1x8xf32, #tpu.memory_space<vmem>>, vector<1x8xf32>
    %55 = vector.broadcast %54 : vector<1x8xf32> to vector<64x8xf32>
    %56 = arith.mulf %53, %55 : vector<64x8xf32>
    %c0_62 = arith.constant 0 : index
    %c0_63 = arith.constant 0 : index
    %57 = vector.load %arg4[%c0_62, %c0_63] : memref<1x8xf32, #tpu.memory_space<vmem>>, vector<1x8xf32>
    %58 = vector.broadcast %57 : vector<1x8xf32> to vector<64x8xf32>
    %59 = arith.addf %56, %58 : vector<64x8xf32>
    %60 = arith.negf %59 : vector<64x8xf32>
    %61 = math.exp %60 : vector<64x8xf32>
    %cst_64 = arith.constant 1.000000e+00 : f32
    %62 = vector.broadcast %cst_64 : f32 to vector<64x8xf32>
    %63 = arith.addf %62, %61 : vector<64x8xf32>
    %64 = arith.divf %62, %63 : vector<64x8xf32>
    %65 = arith.mulf %59, %64 : vector<64x8xf32>
    %c0_65 = arith.constant 0 : index
    %c0_66 = arith.constant 0 : index
    %c0_67 = arith.constant 0 : index
    %66 = vector.load %arg8[%c0_65, %c0_66, %c0_67] : memref<3x3x8xf32, #tpu.memory_space<vmem>>, vector<3x3x8xf32>
    %c0_68 = arith.constant 0 : index
    %c0_69 = arith.constant 0 : index
    %67 = vector.load %arg9[%c0_68, %c0_69] : memref<1x8xf32, #tpu.memory_space<vmem>>, vector<1x8xf32>
    %68 = vector.shape_cast %65 : vector<64x8xf32> to vector<8x8x8xf32>
    %cst_70 = arith.constant 0.000000e+00 : f32
    %69 = vector.broadcast %cst_70 : f32 to vector<1x8x8xf32>
    %cst_71 = arith.constant 0.000000e+00 : f32
    %70 = vector.broadcast %cst_71 : f32 to vector<10x1x8xf32>
    %71 = tpu.concatenate %69, %68, %69 in 0 : vector<1x8x8xf32>, vector<8x8x8xf32>, vector<1x8x8xf32> -> vector<10x8x8xf32>
    %72 = tpu.concatenate %70, %71, %70 in 1 : vector<10x1x8xf32>, vector<10x8x8xf32>, vector<10x1x8xf32> -> vector<10x10x8xf32>
    %73 = vector.extract_strided_slice %72 {offsets = [0, 0, 0], sizes = [10, 8, 8], strides = [1, 1, 1]} : vector<10x10x8xf32> to vector<10x8x8xf32>
    %74 = vector.extract_strided_slice %72 {offsets = [0, 1, 0], sizes = [10, 8, 8], strides = [1, 1, 1]} : vector<10x10x8xf32> to vector<10x8x8xf32>
    %75 = vector.extract_strided_slice %72 {offsets = [0, 2, 0], sizes = [10, 8, 8], strides = [1, 1, 1]} : vector<10x10x8xf32> to vector<10x8x8xf32>
    %cst_72 = arith.constant 0.000000e+00 : f32
    %76 = vector.broadcast %cst_72 : f32 to vector<8x8x8xf32>
    %77 = vector.extract_strided_slice %73 {offsets = [0, 0, 0], sizes = [8, 8, 8], strides = [1, 1, 1]} : vector<10x8x8xf32> to vector<8x8x8xf32>
    %78 = vector.extract_strided_slice %66 {offsets = [0, 0, 0], sizes = [1, 1, 8], strides = [1, 1, 1]} : vector<3x3x8xf32> to vector<1x1x8xf32>
    %79 = vector.shape_cast %78 : vector<1x1x8xf32> to vector<8xf32>
    %80 = vector.shape_cast %79 : vector<8xf32> to vector<1x1x8xf32>
    %81 = vector.broadcast %80 : vector<1x1x8xf32> to vector<8x8x8xf32>
    %82 = arith.mulf %77, %81 : vector<8x8x8xf32>
    %83 = arith.addf %76, %82 : vector<8x8x8xf32>
    %84 = vector.extract_strided_slice %74 {offsets = [0, 0, 0], sizes = [8, 8, 8], strides = [1, 1, 1]} : vector<10x8x8xf32> to vector<8x8x8xf32>
    %85 = vector.extract_strided_slice %66 {offsets = [0, 1, 0], sizes = [1, 1, 8], strides = [1, 1, 1]} : vector<3x3x8xf32> to vector<1x1x8xf32>
    %86 = vector.shape_cast %85 : vector<1x1x8xf32> to vector<8xf32>
    %87 = vector.shape_cast %86 : vector<8xf32> to vector<1x1x8xf32>
    %88 = vector.broadcast %87 : vector<1x1x8xf32> to vector<8x8x8xf32>
    %89 = arith.mulf %84, %88 : vector<8x8x8xf32>
    %90 = arith.addf %83, %89 : vector<8x8x8xf32>
    %91 = vector.extract_strided_slice %75 {offsets = [0, 0, 0], sizes = [8, 8, 8], strides = [1, 1, 1]} : vector<10x8x8xf32> to vector<8x8x8xf32>
    %92 = vector.extract_strided_slice %66 {offsets = [0, 2, 0], sizes = [1, 1, 8], strides = [1, 1, 1]} : vector<3x3x8xf32> to vector<1x1x8xf32>
    %93 = vector.shape_cast %92 : vector<1x1x8xf32> to vector<8xf32>
    %94 = vector.shape_cast %93 : vector<8xf32> to vector<1x1x8xf32>
    %95 = vector.broadcast %94 : vector<1x1x8xf32> to vector<8x8x8xf32>
    %96 = arith.mulf %91, %95 : vector<8x8x8xf32>
    %97 = arith.addf %90, %96 : vector<8x8x8xf32>
    %98 = vector.extract_strided_slice %73 {offsets = [1, 0, 0], sizes = [8, 8, 8], strides = [1, 1, 1]} : vector<10x8x8xf32> to vector<8x8x8xf32>
    %99 = vector.extract_strided_slice %66 {offsets = [1, 0, 0], sizes = [1, 1, 8], strides = [1, 1, 1]} : vector<3x3x8xf32> to vector<1x1x8xf32>
    %100 = vector.shape_cast %99 : vector<1x1x8xf32> to vector<8xf32>
    %101 = vector.shape_cast %100 : vector<8xf32> to vector<1x1x8xf32>
    %102 = vector.broadcast %101 : vector<1x1x8xf32> to vector<8x8x8xf32>
    %103 = arith.mulf %98, %102 : vector<8x8x8xf32>
    %104 = arith.addf %97, %103 : vector<8x8x8xf32>
    %105 = vector.extract_strided_slice %74 {offsets = [1, 0, 0], sizes = [8, 8, 8], strides = [1, 1, 1]} : vector<10x8x8xf32> to vector<8x8x8xf32>
    %106 = vector.extract_strided_slice %66 {offsets = [1, 1, 0], sizes = [1, 1, 8], strides = [1, 1, 1]} : vector<3x3x8xf32> to vector<1x1x8xf32>
    %107 = vector.shape_cast %106 : vector<1x1x8xf32> to vector<8xf32>
    %108 = vector.shape_cast %107 : vector<8xf32> to vector<1x1x8xf32>
    %109 = vector.broadcast %108 : vector<1x1x8xf32> to vector<8x8x8xf32>
    %110 = arith.mulf %105, %109 : vector<8x8x8xf32>
    %111 = arith.addf %104, %110 : vector<8x8x8xf32>
    %112 = vector.extract_strided_slice %75 {offsets = [1, 0, 0], sizes = [8, 8, 8], strides = [1, 1, 1]} : vector<10x8x8xf32> to vector<8x8x8xf32>
    %113 = vector.extract_strided_slice %66 {offsets = [1, 2, 0], sizes = [1, 1, 8], strides = [1, 1, 1]} : vector<3x3x8xf32> to vector<1x1x8xf32>
    %114 = vector.shape_cast %113 : vector<1x1x8xf32> to vector<8xf32>
    %115 = vector.shape_cast %114 : vector<8xf32> to vector<1x1x8xf32>
    %116 = vector.broadcast %115 : vector<1x1x8xf32> to vector<8x8x8xf32>
    %117 = arith.mulf %112, %116 : vector<8x8x8xf32>
    %118 = arith.addf %111, %117 : vector<8x8x8xf32>
    %119 = vector.extract_strided_slice %73 {offsets = [2, 0, 0], sizes = [8, 8, 8], strides = [1, 1, 1]} : vector<10x8x8xf32> to vector<8x8x8xf32>
    %120 = vector.extract_strided_slice %66 {offsets = [2, 0, 0], sizes = [1, 1, 8], strides = [1, 1, 1]} : vector<3x3x8xf32> to vector<1x1x8xf32>
    %121 = vector.shape_cast %120 : vector<1x1x8xf32> to vector<8xf32>
    %122 = vector.shape_cast %121 : vector<8xf32> to vector<1x1x8xf32>
    %123 = vector.broadcast %122 : vector<1x1x8xf32> to vector<8x8x8xf32>
    %124 = arith.mulf %119, %123 : vector<8x8x8xf32>
    %125 = arith.addf %118, %124 : vector<8x8x8xf32>
    %126 = vector.extract_strided_slice %74 {offsets = [2, 0, 0], sizes = [8, 8, 8], strides = [1, 1, 1]} : vector<10x8x8xf32> to vector<8x8x8xf32>
    %127 = vector.extract_strided_slice %66 {offsets = [2, 1, 0], sizes = [1, 1, 8], strides = [1, 1, 1]} : vector<3x3x8xf32> to vector<1x1x8xf32>
    %128 = vector.shape_cast %127 : vector<1x1x8xf32> to vector<8xf32>
    %129 = vector.shape_cast %128 : vector<8xf32> to vector<1x1x8xf32>
    %130 = vector.broadcast %129 : vector<1x1x8xf32> to vector<8x8x8xf32>
    %131 = arith.mulf %126, %130 : vector<8x8x8xf32>
    %132 = arith.addf %125, %131 : vector<8x8x8xf32>
    %133 = vector.extract_strided_slice %75 {offsets = [2, 0, 0], sizes = [8, 8, 8], strides = [1, 1, 1]} : vector<10x8x8xf32> to vector<8x8x8xf32>
    %134 = vector.extract_strided_slice %66 {offsets = [2, 2, 0], sizes = [1, 1, 8], strides = [1, 1, 1]} : vector<3x3x8xf32> to vector<1x1x8xf32>
    %135 = vector.shape_cast %134 : vector<1x1x8xf32> to vector<8xf32>
    %136 = vector.shape_cast %135 : vector<8xf32> to vector<1x1x8xf32>
    %137 = vector.broadcast %136 : vector<1x1x8xf32> to vector<8x8x8xf32>
    %138 = arith.mulf %133, %137 : vector<8x8x8xf32>
    %139 = arith.addf %132, %138 : vector<8x8x8xf32>
    %140 = vector.shape_cast %139 : vector<8x8x8xf32> to vector<64x8xf32>
    %141 = vector.broadcast %67 : vector<1x8xf32> to vector<64x8xf32>
    %142 = arith.addf %140, %141 : vector<64x8xf32>
    %143 = arith.negf %142 : vector<64x8xf32>
    %144 = math.exp %143 : vector<64x8xf32>
    %cst_73 = arith.constant 1.000000e+00 : f32
    %145 = vector.broadcast %cst_73 : f32 to vector<64x8xf32>
    %146 = arith.addf %145, %144 : vector<64x8xf32>
    %147 = arith.divf %145, %146 : vector<64x8xf32>
    %148 = arith.mulf %142, %147 : vector<64x8xf32>
    %149 = arith.truncf %148 : vector<64x8xf32> to vector<64x8xbf16>
    %c0_74 = arith.constant 0 : index
    %c0_75 = arith.constant 0 : index
    %150 = vector.load %arg12[%c0_74, %c0_75] : memref<16x8xbf16, #tpu.memory_space<vmem>>, vector<16x8xbf16>
    "tpu.trace_start"() <{level = 10 : i32, message = "ck,nk->cn"}> : () -> ()
    %cst_76 = arith.constant dense<0.000000e+00> : vector<16x64xf32>
    %151 = tpu.matmul %150, %149, %cst_76 {dimension_numbers = #tpu.dot_dimension_numbers<[1], [1], [0], [0], [0, 0, 1, 0], [], []>} : vector<16x8xbf16>, vector<64x8xbf16>, vector<16x64xf32> -> vector<16x64xf32>
    "tpu.trace_stop"() : () -> ()
    %c0_77 = arith.constant 0 : index
    %c0_78 = arith.constant 0 : index
    %152 = vector.load %arg13[%c0_77, %c0_78] : memref<16x1xf32, #tpu.memory_space<vmem>>, vector<16x1xf32>
    %153 = vector.broadcast %152 : vector<16x1xf32> to vector<16x64xf32>
    %154 = arith.addf %151, %153 : vector<16x64xf32>
    %c0_79 = arith.constant 0 : index
    %c0_80 = arith.constant 0 : index
    %c0_81 = arith.constant 0 : index
    %155 = vector.load %arg26[%c0_79, %c0_80, %c0_81] : memref<1x16x64xf32, #tpu.memory_space<vmem>>, vector<1x16x64xf32>
    %156 = vector.shape_cast %155 : vector<1x16x64xf32> to vector<16x64xf32>
    %157 = vector.shape_cast %154 : vector<16x64xf32> to vector<1x16x64xf32>
    tpu.vector_store %arg26[%c0_79, %c0_80, %c0_81], %157 {strides = array<i32>} : memref<1x16x64xf32, #tpu.memory_space<vmem>>, vector<1x16x64xf32>,
    %c0_82 = arith.constant 0 : index
    %c0_83 = arith.constant 0 : index
    %158 = vector.load %arg10[%c0_82, %c0_83] : memref<8x16xbf16, #tpu.memory_space<vmem>>, vector<8x16xbf16>
    %cst_84 = arith.constant dense<0.000000e+00> : vector<64x16xf32>
    %159 = tpu.matmul %149, %158, %cst_84 {dimension_numbers = #tpu.dot_dimension_numbers<[1], [0], [0], [1], [0, 0, 1, 1], [], []>} : vector<64x8xbf16>, vector<8x16xbf16>, vector<64x16xf32> -> vector<64x16xf32>
    %c0_85 = arith.constant 0 : index
    %c0_86 = arith.constant 0 : index
    %160 = vector.load %arg11[%c0_85, %c0_86] : memref<1x16xf32, #tpu.memory_space<vmem>>, vector<1x16xf32>
    %161 = vector.broadcast %160 : vector<1x16xf32> to vector<64x16xf32>
    %162 = arith.addf %159, %161 : vector<64x16xf32>
    %c0_87 = arith.constant 0 : index
    %c0_88 = arith.constant 0 : index
    %c0_89 = arith.constant 0 : index
    %163 = vector.load %arg14[%c0_87, %c0_88, %c0_89] : memref<3x3x16xf32, #tpu.memory_space<vmem>>, vector<3x3x16xf32>
    %c0_90 = arith.constant 0 : index
    %c0_91 = arith.constant 0 : index
    %164 = vector.load %arg15[%c0_90, %c0_91] : memref<1x16xf32, #tpu.memory_space<vmem>>, vector<1x16xf32>
    %165 = vector.shape_cast %162 : vector<64x16xf32> to vector<8x8x16xf32>
    %cst_92 = arith.constant 0.000000e+00 : f32
    %166 = vector.broadcast %cst_92 : f32 to vector<1x8x16xf32>
    %cst_93 = arith.constant 0.000000e+00 : f32
    %167 = vector.broadcast %cst_93 : f32 to vector<10x1x16xf32>
    %168 = tpu.concatenate %166, %165, %166 in 0 : vector<1x8x16xf32>, vector<8x8x16xf32>, vector<1x8x16xf32> -> vector<10x8x16xf32>
    %169 = tpu.concatenate %167, %168, %167 in 1 : vector<10x1x16xf32>, vector<10x8x16xf32>, vector<10x1x16xf32> -> vector<10x10x16xf32>
    %170 = vector.extract_strided_slice %169 {offsets = [0, 0, 0], sizes = [10, 8, 16], strides = [1, 1, 1]} : vector<10x10x16xf32> to vector<10x8x16xf32>
    %171 = vector.extract_strided_slice %169 {offsets = [0, 1, 0], sizes = [10, 8, 16], strides = [1, 1, 1]} : vector<10x10x16xf32> to vector<10x8x16xf32>
    %172 = vector.extract_strided_slice %169 {offsets = [0, 2, 0], sizes = [10, 8, 16], strides = [1, 1, 1]} : vector<10x10x16xf32> to vector<10x8x16xf32>
    %cst_94 = arith.constant 0.000000e+00 : f32
    %173 = vector.broadcast %cst_94 : f32 to vector<8x8x16xf32>
    %174 = vector.extract_strided_slice %170 {offsets = [0, 0, 0], sizes = [8, 8, 16], strides = [1, 1, 1]} : vector<10x8x16xf32> to vector<8x8x16xf32>
    %175 = vector.extract_strided_slice %163 {offsets = [0, 0, 0], sizes = [1, 1, 16], strides = [1, 1, 1]} : vector<3x3x16xf32> to vector<1x1x16xf32>
    %176 = vector.shape_cast %175 : vector<1x1x16xf32> to vector<16xf32>
    %177 = vector.shape_cast %176 : vector<16xf32> to vector<1x1x16xf32>
    %178 = vector.broadcast %177 : vector<1x1x16xf32> to vector<8x8x16xf32>
    %179 = arith.mulf %174, %178 : vector<8x8x16xf32>
    %180 = arith.addf %173, %179 : vector<8x8x16xf32>
    %181 = vector.extract_strided_slice %171 {offsets = [0, 0, 0], sizes = [8, 8, 16], strides = [1, 1, 1]} : vector<10x8x16xf32> to vector<8x8x16xf32>
    %182 = vector.extract_strided_slice %163 {offsets = [0, 1, 0], sizes = [1, 1, 16], strides = [1, 1, 1]} : vector<3x3x16xf32> to vector<1x1x16xf32>
    %183 = vector.shape_cast %182 : vector<1x1x16xf32> to vector<16xf32>
    %184 = vector.shape_cast %183 : vector<16xf32> to vector<1x1x16xf32>
    %185 = vector.broadcast %184 : vector<1x1x16xf32> to vector<8x8x16xf32>
    %186 = arith.mulf %181, %185 : vector<8x8x16xf32>
    %187 = arith.addf %180, %186 : vector<8x8x16xf32>
    %188 = vector.extract_strided_slice %172 {offsets = [0, 0, 0], sizes = [8, 8, 16], strides = [1, 1, 1]} : vector<10x8x16xf32> to vector<8x8x16xf32>
    %189 = vector.extract_strided_slice %163 {offsets = [0, 2, 0], sizes = [1, 1, 16], strides = [1, 1, 1]} : vector<3x3x16xf32> to vector<1x1x16xf32>
    %190 = vector.shape_cast %189 : vector<1x1x16xf32> to vector<16xf32>
    %191 = vector.shape_cast %190 : vector<16xf32> to vector<1x1x16xf32>
    %192 = vector.broadcast %191 : vector<1x1x16xf32> to vector<8x8x16xf32>
    %193 = arith.mulf %188, %192 : vector<8x8x16xf32>
    %194 = arith.addf %187, %193 : vector<8x8x16xf32>
    %195 = vector.extract_strided_slice %170 {offsets = [1, 0, 0], sizes = [8, 8, 16], strides = [1, 1, 1]} : vector<10x8x16xf32> to vector<8x8x16xf32>
    %196 = vector.extract_strided_slice %163 {offsets = [1, 0, 0], sizes = [1, 1, 16], strides = [1, 1, 1]} : vector<3x3x16xf32> to vector<1x1x16xf32>
    %197 = vector.shape_cast %196 : vector<1x1x16xf32> to vector<16xf32>
    %198 = vector.shape_cast %197 : vector<16xf32> to vector<1x1x16xf32>
    %199 = vector.broadcast %198 : vector<1x1x16xf32> to vector<8x8x16xf32>
    %200 = arith.mulf %195, %199 : vector<8x8x16xf32>
    %201 = arith.addf %194, %200 : vector<8x8x16xf32>
    %202 = vector.extract_strided_slice %171 {offsets = [1, 0, 0], sizes = [8, 8, 16], strides = [1, 1, 1]} : vector<10x8x16xf32> to vector<8x8x16xf32>
    %203 = vector.extract_strided_slice %163 {offsets = [1, 1, 0], sizes = [1, 1, 16], strides = [1, 1, 1]} : vector<3x3x16xf32> to vector<1x1x16xf32>
    %204 = vector.shape_cast %203 : vector<1x1x16xf32> to vector<16xf32>
    %205 = vector.shape_cast %204 : vector<16xf32> to vector<1x1x16xf32>
    %206 = vector.broadcast %205 : vector<1x1x16xf32> to vector<8x8x16xf32>
    %207 = arith.mulf %202, %206 : vector<8x8x16xf32>
    %208 = arith.addf %201, %207 : vector<8x8x16xf32>
    %209 = vector.extract_strided_slice %172 {offsets = [1, 0, 0], sizes = [8, 8, 16], strides = [1, 1, 1]} : vector<10x8x16xf32> to vector<8x8x16xf32>
    %210 = vector.extract_strided_slice %163 {offsets = [1, 2, 0], sizes = [1, 1, 16], strides = [1, 1, 1]} : vector<3x3x16xf32> to vector<1x1x16xf32>
    %211 = vector.shape_cast %210 : vector<1x1x16xf32> to vector<16xf32>
    %212 = vector.shape_cast %211 : vector<16xf32> to vector<1x1x16xf32>
    %213 = vector.broadcast %212 : vector<1x1x16xf32> to vector<8x8x16xf32>
    %214 = arith.mulf %209, %213 : vector<8x8x16xf32>
    %215 = arith.addf %208, %214 : vector<8x8x16xf32>
    %216 = vector.extract_strided_slice %170 {offsets = [2, 0, 0], sizes = [8, 8, 16], strides = [1, 1, 1]} : vector<10x8x16xf32> to vector<8x8x16xf32>
    %217 = vector.extract_strided_slice %163 {offsets = [2, 0, 0], sizes = [1, 1, 16], strides = [1, 1, 1]} : vector<3x3x16xf32> to vector<1x1x16xf32>
    %218 = vector.shape_cast %217 : vector<1x1x16xf32> to vector<16xf32>
    %219 = vector.shape_cast %218 : vector<16xf32> to vector<1x1x16xf32>
    %220 = vector.broadcast %219 : vector<1x1x16xf32> to vector<8x8x16xf32>
    %221 = arith.mulf %216, %220 : vector<8x8x16xf32>
    %222 = arith.addf %215, %221 : vector<8x8x16xf32>
    %223 = vector.extract_strided_slice %171 {offsets = [2, 0, 0], sizes = [8, 8, 16], strides = [1, 1, 1]} : vector<10x8x16xf32> to vector<8x8x16xf32>
    %224 = vector.extract_strided_slice %163 {offsets = [2, 1, 0], sizes = [1, 1, 16], strides = [1, 1, 1]} : vector<3x3x16xf32> to vector<1x1x16xf32>
    %225 = vector.shape_cast %224 : vector<1x1x16xf32> to vector<16xf32>
    %226 = vector.shape_cast %225 : vector<16xf32> to vector<1x1x16xf32>
    %227 = vector.broadcast %226 : vector<1x1x16xf32> to vector<8x8x16xf32>
    %228 = arith.mulf %223, %227 : vector<8x8x16xf32>
    %229 = arith.addf %222, %228 : vector<8x8x16xf32>
    %230 = vector.extract_strided_slice %172 {offsets = [2, 0, 0], sizes = [8, 8, 16], strides = [1, 1, 1]} : vector<10x8x16xf32> to vector<8x8x16xf32>
    %231 = vector.extract_strided_slice %163 {offsets = [2, 2, 0], sizes = [1, 1, 16], strides = [1, 1, 1]} : vector<3x3x16xf32> to vector<1x1x16xf32>
    %232 = vector.shape_cast %231 : vector<1x1x16xf32> to vector<16xf32>
    %233 = vector.shape_cast %232 : vector<16xf32> to vector<1x1x16xf32>
    %234 = vector.broadcast %233 : vector<1x1x16xf32> to vector<8x8x16xf32>
    %235 = arith.mulf %230, %234 : vector<8x8x16xf32>
    %236 = arith.addf %229, %235 : vector<8x8x16xf32>
    %237 = vector.shape_cast %236 : vector<8x8x16xf32> to vector<64x16xf32>
    %238 = vector.broadcast %164 : vector<1x16xf32> to vector<64x16xf32>
    %239 = arith.addf %237, %238 : vector<64x16xf32>
    %240 = arith.negf %239 : vector<64x16xf32>
    %241 = math.exp %240 : vector<64x16xf32>
    %cst_95 = arith.constant 1.000000e+00 : f32
    %242 = vector.broadcast %cst_95 : f32 to vector<64x16xf32>
    %243 = arith.addf %242, %241 : vector<64x16xf32>
    %244 = arith.divf %242, %243 : vector<64x16xf32>
    %245 = arith.mulf %239, %244 : vector<64x16xf32>
    %246 = arith.truncf %245 : vector<64x16xf32> to vector<64x16xbf16>
    %c0_96 = arith.constant 0 : index
    %c0_97 = arith.constant 0 : index
    %247 = vector.load %arg18[%c0_96, %c0_97] : memref<16x16xbf16, #tpu.memory_space<vmem>>, vector<16x16xbf16>
    "tpu.trace_start"() <{level = 10 : i32, message = "ck,nk->cn"}> : () -> ()
    %cst_98 = arith.constant dense<0.000000e+00> : vector<16x64xf32>
    %248 = tpu.matmul %247, %246, %cst_98 {dimension_numbers = #tpu.dot_dimension_numbers<[1], [1], [0], [0], [0, 0, 1, 0], [], []>} : vector<16x16xbf16>, vector<64x16xbf16>, vector<16x64xf32> -> vector<16x64xf32>
    "tpu.trace_stop"() : () -> ()
    %c0_99 = arith.constant 0 : index
    %c0_100 = arith.constant 0 : index
    %249 = vector.load %arg19[%c0_99, %c0_100] : memref<16x1xf32, #tpu.memory_space<vmem>>, vector<16x1xf32>
    %250 = vector.broadcast %249 : vector<16x1xf32> to vector<16x64xf32>
    %251 = arith.addf %248, %250 : vector<16x64xf32>
    %252 = arith.addf %251, %154 : vector<16x64xf32>
    %c0_101 = arith.constant 0 : index
    %c0_102 = arith.constant 0 : index
    %c0_103 = arith.constant 0 : index
    %253 = vector.load %arg27[%c0_101, %c0_102, %c0_103] : memref<1x16x64xf32, #tpu.memory_space<vmem>>, vector<1x16x64xf32>
    %254 = vector.shape_cast %253 : vector<1x16x64xf32> to vector<16x64xf32>
    %255 = vector.shape_cast %252 : vector<16x64xf32> to vector<1x16x64xf32>
    tpu.vector_store %arg27[%c0_101, %c0_102, %c0_103], %255 {strides = array<i32>} : memref<1x16x64xf32, #tpu.memory_space<vmem>>, vector<1x16x64xf32>,
    %c0_104 = arith.constant 0 : index
    %c0_105 = arith.constant 0 : index
    %256 = vector.load %arg20[%c0_104, %c0_105] : memref<32x16xbf16, #tpu.memory_space<vmem>>, vector<32x16xbf16>
    %257 = arith.truncf %252 : vector<16x64xf32> to vector<16x64xbf16>
    %cst_106 = arith.constant dense<0.000000e+00> : vector<32x64xf32>
    %258 = tpu.matmul %256, %257, %cst_106 {dimension_numbers = #tpu.dot_dimension_numbers<[1], [0], [0], [1], [0, 0, 1, 1], [], []>} : vector<32x16xbf16>, vector<16x64xbf16>, vector<32x64xf32> -> vector<32x64xf32>
    %c0_107 = arith.constant 0 : index
    %c0_108 = arith.constant 0 : index
    %259 = vector.load %arg21[%c0_107, %c0_108] : memref<32x1xf32, #tpu.memory_space<vmem>>, vector<32x1xf32>
    %260 = vector.broadcast %259 : vector<32x1xf32> to vector<32x64xf32>
    %261 = arith.mulf %258, %260 : vector<32x64xf32>
    %c0_109 = arith.constant 0 : index
    %c0_110 = arith.constant 0 : index
    %262 = vector.load %arg22[%c0_109, %c0_110] : memref<32x1xf32, #tpu.memory_space<vmem>>, vector<32x1xf32>
    %263 = vector.broadcast %262 : vector<32x1xf32> to vector<32x64xf32>
    %264 = arith.addf %261, %263 : vector<32x64xf32>
    %c0_111 = arith.constant 0 : index
    %c0_112 = arith.constant 0 : index
    %c0_113 = arith.constant 0 : index
    %265 = vector.load %arg28[%c0_111, %c0_112, %c0_113] : memref<1x32x64xf32, #tpu.memory_space<vmem>>, vector<1x32x64xf32>
    %266 = vector.shape_cast %265 : vector<1x32x64xf32> to vector<32x64xf32>
    %267 = vector.shape_cast %258 : vector<32x64xf32> to vector<1x32x64xf32>
    tpu.vector_store %arg28[%c0_111, %c0_112, %c0_113], %267 {strides = array<i32>} : memref<1x32x64xf32, #tpu.memory_space<vmem>>, vector<1x32x64xf32>,
    %c0_114 = arith.constant 0 : index
    %c0_115 = arith.constant 0 : index
    %c0_116 = arith.constant 0 : index
    %268 = vector.load %arg29[%c0_114, %c0_115, %c0_116] : memref<1x32x64xf32, #tpu.memory_space<vmem>>, vector<1x32x64xf32>
    %269 = vector.shape_cast %268 : vector<1x32x64xf32> to vector<32x64xf32>
    %270 = vector.shape_cast %264 : vector<32x64xf32> to vector<1x32x64xf32>
    tpu.vector_store %arg29[%c0_114, %c0_115, %c0_116], %270 {strides = array<i32>} : memref<1x32x64xf32, #tpu.memory_space<vmem>>, vector<1x32x64xf32>,
    %271 = arith.negf %264 : vector<32x64xf32>
    %272 = math.exp %271 : vector<32x64xf32>
    %cst_117 = arith.constant 1.000000e+00 : f32
    %273 = vector.broadcast %cst_117 : f32 to vector<32x64xf32>
    %274 = arith.addf %273, %272 : vector<32x64xf32>
    %275 = arith.divf %273, %274 : vector<32x64xf32>
    %276 = arith.mulf %264, %275 : vector<32x64xf32>
    %c0_118 = arith.constant 0 : index
    %c0_119 = arith.constant 0 : index
    %c0_120 = arith.constant 0 : index
    %277 = vector.load %arg30[%c0_118, %c0_119, %c0_120] : memref<1x32x64xf32, #tpu.memory_space<vmem>>, vector<1x32x64xf32>
    %278 = vector.shape_cast %277 : vector<1x32x64xf32> to vector<32x64xf32>
    %279 = vector.shape_cast %276 : vector<32x64xf32> to vector<1x32x64xf32>
    tpu.vector_store %arg30[%c0_118, %c0_119, %c0_120], %279 {strides = array<i32>} : memref<1x32x64xf32, #tpu.memory_space<vmem>>, vector<1x32x64xf32>,
    return
  }
  func.func @transform_0(%arg0: i32) -> (i32, i32, i32, i32, i32) {
    %c0_i32 = arith.constant 0 : i32
    %c0_i32_0 = arith.constant 0 : i32
    %c0_i32_1 = arith.constant 0 : i32
    %c0_i32_2 = arith.constant 0 : i32
    %c0_i32_3 = arith.constant 0 : i32
    return %arg0, %c0_i32, %c0_i32_0, %c0_i32_1, %c0_i32_2 : i32, i32, i32, i32, i32
  }
  func.func @transform_1(%arg0: i32) -> (i32, i32) {
    %c0_i32 = arith.constant 0 : i32
    %c0_i32_0 = arith.constant 0 : i32
    %c0_i32_1 = arith.constant 0 : i32
    return %c0_i32, %c0_i32_0 : i32, i32
  }
  func.func @transform_2(%arg0: i32) -> (i32, i32) {
    %c0_i32 = arith.constant 0 : i32
    %c0_i32_0 = arith.constant 0 : i32
    %c0_i32_1 = arith.constant 0 : i32
    return %c0_i32, %c0_i32_0 : i32, i32
  }
  func.func @transform_3(%arg0: i32) -> (i32, i32) {
    %c0_i32 = arith.constant 0 : i32
    %c0_i32_0 = arith.constant 0 : i32
    %c0_i32_1 = arith.constant 0 : i32
    return %c0_i32, %c0_i32_0 : i32, i32
  }
  func.func @transform_4(%arg0: i32) -> (i32, i32) {
    %c0_i32 = arith.constant 0 : i32
    %c0_i32_0 = arith.constant 0 : i32
    %c0_i32_1 = arith.constant 0 : i32
    return %c0_i32, %c0_i32_0 : i32, i32
  }
  func.func @transform_5(%arg0: i32) -> (i32, i32) {
    %c0_i32 = arith.constant 0 : i32
    %c0_i32_0 = arith.constant 0 : i32
    %c0_i32_1 = arith.constant 0 : i32
    return %c0_i32, %c0_i32_0 : i32, i32
  }
  func.func @transform_6(%arg0: i32) -> (i32, i32) {
    %c0_i32 = arith.constant 0 : i32
    %c0_i32_0 = arith.constant 0 : i32
    %c0_i32_1 = arith.constant 0 : i32
    return %c0_i32, %c0_i32_0 : i32, i32
  }
  func.func @transform_7(%arg0: i32) -> (i32, i32, i32) {
    %c0_i32 = arith.constant 0 : i32
    %c0_i32_0 = arith.constant 0 : i32
    %c0_i32_1 = arith.constant 0 : i32
    %c0_i32_2 = arith.constant 0 : i32
    return %c0_i32, %c0_i32_0, %c0_i32_1 : i32, i32, i32
  }
  func.func @transform_8(%arg0: i32) -> (i32, i32) {
    %c0_i32 = arith.constant 0 : i32
    %c0_i32_0 = arith.constant 0 : i32
    %c0_i32_1 = arith.constant 0 : i32
    return %c0_i32, %c0_i32_0 : i32, i32
  }
  func.func @transform_9(%arg0: i32) -> (i32, i32) {
    %c0_i32 = arith.constant 0 : i32
    %c0_i32_0 = arith.constant 0 : i32
    %c0_i32_1 = arith.constant 0 : i32
    return %c0_i32, %c0_i32_0 : i32, i32
  }
  func.func @transform_10(%arg0: i32) -> (i32, i32) {
    %c0_i32 = arith.constant 0 : i32
    %c0_i32_0 = arith.constant 0 : i32
    %c0_i32_1 = arith.constant 0 : i32
    return %c0_i32, %c0_i32_0 : i32, i32
  }
  func.func @transform_11(%arg0: i32) -> (i32, i32) {
    %c0_i32 = arith.constant 0 : i32
    %c0_i32_0 = arith.constant 0 : i32
    %c0_i32_1 = arith.constant 0 : i32
    return %c0_i32, %c0_i32_0 : i32, i32
  }
  func.func @transform_12(%arg0: i32) -> (i32, i32) {
    %c0_i32 = arith.constant 0 : i32
    %c0_i32_0 = arith.constant 0 : i32
    %c0_i32_1 = arith.constant 0 : i32
    return %c0_i32, %c0_i32_0 : i32, i32
  }
  func.func @transform_13(%arg0: i32) -> (i32, i32, i32) {
    %c0_i32 = arith.constant 0 : i32
    %c0_i32_0 = arith.constant 0 : i32
    %c0_i32_1 = arith.constant 0 : i32
    %c0_i32_2 = arith.constant 0 : i32
    return %c0_i32, %c0_i32_0, %c0_i32_1 : i32, i32, i32
  }
  func.func @transform_14(%arg0: i32) -> (i32, i32) {
    %c0_i32 = arith.constant 0 : i32
    %c0_i32_0 = arith.constant 0 : i32
    %c0_i32_1 = arith.constant 0 : i32
    return %c0_i32, %c0_i32_0 : i32, i32
  }
  func.func @transform_15(%arg0: i32) -> (i32, i32) {
    %c0_i32 = arith.constant 0 : i32
    %c0_i32_0 = arith.constant 0 : i32
    %c0_i32_1 = arith.constant 0 : i32
    return %c0_i32, %c0_i32_0 : i32, i32
  }
  func.func @transform_16(%arg0: i32) -> (i32, i32) {
    %c0_i32 = arith.constant 0 : i32
    %c0_i32_0 = arith.constant 0 : i32
    %c0_i32_1 = arith.constant 0 : i32
    return %c0_i32, %c0_i32_0 : i32, i32
  }
  func.func @transform_17(%arg0: i32) -> (i32, i32) {
    %c0_i32 = arith.constant 0 : i32
    %c0_i32_0 = arith.constant 0 : i32
    %c0_i32_1 = arith.constant 0 : i32
    return %c0_i32, %c0_i32_0 : i32, i32
  }
  func.func @transform_18(%arg0: i32) -> (i32, i32) {
    %c0_i32 = arith.constant 0 : i32
    %c0_i32_0 = arith.constant 0 : i32
    %c0_i32_1 = arith.constant 0 : i32
    return %c0_i32, %c0_i32_0 : i32, i32
  }
  func.func @transform_19(%arg0: i32) -> (i32, i32) {
    %c0_i32 = arith.constant 0 : i32
    %c0_i32_0 = arith.constant 0 : i32
    %c0_i32_1 = arith.constant 0 : i32
    return %c0_i32, %c0_i32_0 : i32, i32
  }
  func.func @transform_20(%arg0: i32) -> (i32, i32) {
    %c0_i32 = arith.constant 0 : i32
    %c0_i32_0 = arith.constant 0 : i32
    %c0_i32_1 = arith.constant 0 : i32
    return %c0_i32, %c0_i32_0 : i32, i32
  }
  func.func @transform_21(%arg0: i32) -> (i32, i32) {
    %c0_i32 = arith.constant 0 : i32
    %c0_i32_0 = arith.constant 0 : i32
    %c0_i32_1 = arith.constant 0 : i32
    return %c0_i32, %c0_i32_0 : i32, i32
  }
  func.func @transform_22(%arg0: i32) -> (i32, i32, i32) {
    %c0_i32 = arith.constant 0 : i32
    %c0_i32_0 = arith.constant 0 : i32
    %c0_i32_1 = arith.constant 0 : i32
    return %arg0, %c0_i32, %c0_i32_0 : i32, i32, i32
  }
  func.func @transform_23(%arg0: i32) -> (i32, i32, i32) {
    %c0_i32 = arith.constant 0 : i32
    %c0_i32_0 = arith.constant 0 : i32
    %c0_i32_1 = arith.constant 0 : i32
    return %arg0, %c0_i32, %c0_i32_0 : i32, i32, i32
  }
  func.func @transform_24(%arg0: i32) -> (i32, i32, i32) {
    %c0_i32 = arith.constant 0 : i32
    %c0_i32_0 = arith.constant 0 : i32
    %c0_i32_1 = arith.constant 0 : i32
    return %arg0, %c0_i32, %c0_i32_0 : i32, i32, i32
  }
  func.func @transform_25(%arg0: i32) -> (i32, i32, i32) {
    %c0_i32 = arith.constant 0 : i32
    %c0_i32_0 = arith.constant 0 : i32
    %c0_i32_1 = arith.constant 0 : i32
    return %arg0, %c0_i32, %c0_i32_0 : i32, i32, i32
  }
  func.func @transform_26(%arg0: i32) -> (i32, i32, i32) {
    %c0_i32 = arith.constant 0 : i32
    %c0_i32_0 = arith.constant 0 : i32
    %c0_i32_1 = arith.constant 0 : i32
    return %arg0, %c0_i32, %c0_i32_0 : i32, i32, i32
  }
  func.func @transform_27(%arg0: i32) -> (i32, i32, i32) {
    %c0_i32 = arith.constant 0 : i32
    %c0_i32_0 = arith.constant 0 : i32
    %c0_i32_1 = arith.constant 0 : i32
    return %arg0, %c0_i32, %c0_i32_0 : i32, i32, i32
  }
  func.func @transform_28(%arg0: i32) -> (i32, i32, i32) {
    %c0_i32 = arith.constant 0 : i32
    %c0_i32_0 = arith.constant 0 : i32
    %c0_i32_1 = arith.constant 0 : i32
    return %arg0, %c0_i32, %c0_i32_0 : i32, i32, i32
  }
  func.func @transform_29(%arg0: i32) -> (i32, i32, i32) {
    %c0_i32 = arith.constant 0 : i32
    %c0_i32_0 = arith.constant 0 : i32
    %c0_i32_1 = arith.constant 0 : i32
    return %arg0, %c0_i32, %c0_i32_0 : i32, i32, i32
  }
}

</mosaic_0001>

<llo_original>
// kernel: _lambda_.1
$region0: #{_lambda_.1}
  #allocation0 [shape = 'u32[]', space=smem, size = 0x4, offset = 0x4, fixed_abs, tag = 'smem constant byte address 0x4 - core index']
  #allocation1 [shape = 'u32[144,128]{1,0:T(1,128)}', space=vmem, size = 0x12000, scoped, tag = 'internal scratch']
  %s0 = inlined_call_operand.smem [shape: u32[30], index: -1, kind: input, shape index: {}]
  %s1 = sld [smem:[%s0]]
  %s2 = scalar_lea.smem %s0, 1
  %s3 = sld [smem:[%s2]]
  %s4 = scalar_lea.smem %s0, 2
  %s5 = sld [smem:[%s4]]
  %s6 = scalar_lea.smem %s0, 3
  %s7 = sld [smem:[%s6]]
  %s8 = scalar_lea.smem %s0, 4
  %s9 = sld [smem:[%s8]]
  %s10 = scalar_lea.smem %s0, 5
  %s11 = sld [smem:[%s10]]
  %s12 = scalar_lea.smem %s0, 6
  %s13 = sld [smem:[%s12]]
  %s14 = scalar_lea.smem %s0, 7
  %s15 = sld [smem:[%s14]]
  %s16 = scalar_lea.smem %s0, 8
  %s17 = sld [smem:[%s16]]
  %s18 = scalar_lea.smem %s0, 9
  %s19 = sld [smem:[%s18]]
  %s20 = scalar_lea.smem %s0, 10
  %s21 = sld [smem:[%s20]]
  %s22 = scalar_lea.smem %s0, 11
  %s23 = sld [smem:[%s22]]
  %s24 = scalar_lea.smem %s0, 12
  %s25 = sld [smem:[%s24]]
  %s26 = scalar_lea.smem %s0, 13
  %s27 = sld [smem:[%s26]]
  %s28 = scalar_lea.smem %s0, 14
  %s29 = sld [smem:[%s28]]
  %s30 = scalar_lea.smem %s0, 15
  %s31 = sld [smem:[%s30]]
  %s32 = scalar_lea.smem %s0, 16
  %s33 = sld [smem:[%s32]]
  %s34 = scalar_lea.smem %s0, 17
  %s35 = sld [smem:[%s34]]
  %s36 = scalar_lea.smem %s0, 18
  %s37 = sld [smem:[%s36]]
  %s38 = scalar_lea.smem %s0, 19
  %s39 = sld [smem:[%s38]]
  %s40 = scalar_lea.smem %s0, 20
  %s41 = sld [smem:[%s40]]
  %s42 = scalar_lea.smem %s0, 21
  %s43 = sld [smem:[%s42]]
  %s44 = scalar_lea.smem %s0, 22
  %s45 = sld [smem:[%s44]]
  %s46 = scalar_lea.smem %s0, 23
  %s47 = sld [smem:[%s46]]
  %s48 = scalar_lea.smem %s0, 24
  %s49 = sld [smem:[%s48]]
  %s50 = scalar_lea.smem %s0, 25
  %s51 = sld [smem:[%s50]]
  %s52 = scalar_lea.smem %s0, 26
  %s53 = sld [smem:[%s52]]
  %s54 = scalar_lea.smem %s0, 27
  %s55 = sld [smem:[%s54]]
  %s56 = scalar_lea.smem %s0, 28
  %s57 = sld [smem:[%s56]]
  %s58 = scalar_lea.smem %s0, 29
  %s59 = sld [smem:[%s58]]
  %60 = xla_tuple %s45, %s47, %s49, %s51, %s53, %s55, %s57, %s59
  %s61 = sld [smem:[#allocation0]]
  $region177: #{_lambda_.1} parent=0
    _
  %s63 = ssub.s32 1, %s61
  %s64 = scalar_select 0, %s63, %s61
  loop: start=0, step=1, limit=4
  $region2: #{_lambda_.1} parent=0 // loop_pre_header
    _
  $region3: #{_lambda_.1} parent=0 // loop_header
    %s66 = sphi 0, %s70
    %p67 = scmp.ge.s32.totalorder %s66, 4
    %s76 = sphi 0, %s78
    %s79 = sphi 0, %s76
    %s80 = sphi 0, %s79
    %s96 = sphi 0, %s80
    %s100 = sphi 0, %s100
    %s102 = sphi 0, %s100
    %s103 = sphi 0, %s102
    %s117 = sphi 0, %s103
    %s121 = sphi 0, %s121
    %s123 = sphi 0, %s121
    %s124 = sphi 0, %s123
    %s138 = sphi 0, %s124
    %s142 = sphi 0, %s142
    %s144 = sphi 0, %s142
    %s145 = sphi 0, %s144
    %s159 = sphi 0, %s145
    %s163 = sphi 0, %s163
    %s165 = sphi 0, %s163
    %s166 = sphi 0, %s165
    %s180 = sphi 0, %s166
    %s184 = sphi 0, %s184
    %s186 = sphi 0, %s184
    %s187 = sphi 0, %s186
    %s201 = sphi 0, %s187
    %s205 = sphi 0, %s205
    %s207 = sphi 0, %s205
    %s208 = sphi 0, %s207
    %s222 = sphi 0, %s208
    %s226 = sphi 0, %s226
    %s228 = sphi 0, %s226
    %s229 = sphi 0, %s228
    %s243 = sphi 0, %s229
    %s247 = sphi 0, %s247
    %s249 = sphi 0, %s247
    %s250 = sphi 0, %s249
    %s264 = sphi 0, %s250
    %s268 = sphi 0, %s268
    %s270 = sphi 0, %s268
    %s271 = sphi 0, %s270
    %s285 = sphi 0, %s271
    %s289 = sphi 0, %s289
    %s291 = sphi 0, %s289
    %s292 = sphi 0, %s291
    %s306 = sphi 0, %s292
    %s310 = sphi 0, %s310
    %s312 = sphi 0, %s310
    %s313 = sphi 0, %s312
    %s327 = sphi 0, %s313
    %s331 = sphi 0, %s331
    %s333 = sphi 0, %s331
    %s334 = sphi 0, %s333
    %s348 = sphi 0, %s334
    %s352 = sphi 0, %s352
    %s354 = sphi 0, %s352
    %s355 = sphi 0, %s354
    %s369 = sphi 0, %s355
    %s373 = sphi 0, %s373
    %s375 = sphi 0, %s373
    %s376 = sphi 0, %s375
    %s390 = sphi 0, %s376
    %s394 = sphi 0, %s394
    %s396 = sphi 0, %s394
    %s397 = sphi 0, %s396
    %s411 = sphi 0, %s397
    %s415 = sphi 0, %s415
    %s417 = sphi 0, %s415
    %s418 = sphi 0, %s417
    %s432 = sphi 0, %s418
    %s436 = sphi 0, %s436
    %s438 = sphi 0, %s436
    %s439 = sphi 0, %s438
    %s453 = sphi 0, %s439
    %s457 = sphi 0, %s457
    %s459 = sphi 0, %s457
    %s460 = sphi 0, %s459
    %s474 = sphi 0, %s460
    %s478 = sphi 0, %s478
    %s480 = sphi 0, %s478
    %s481 = sphi 0, %s480
    %s495 = sphi 0, %s481
    %s499 = sphi 0, %s499
    %s501 = sphi 0, %s499
    %s502 = sphi 0, %s501
    %s516 = sphi 0, %s502
    %s520 = sphi 0, %s520
    %s522 = sphi 0, %s520
    %s523 = sphi 0, %s522
    %s537 = sphi 0, %s523
    %s543 = sphi 0, %s545
    %s546 = sphi 0, %s543
    %s547 = sphi 0, %s546
    %s563 = sphi 0, %s547
    %s569 = sphi 0, %s571
    %s572 = sphi 0, %s569
    %s573 = sphi 0, %s572
    %s589 = sphi 0, %s573
    %s595 = sphi 0, %s597
    %s598 = sphi 0, %s595
    %s599 = sphi 0, %s598
    %s615 = sphi 0, %s599
    %s621 = sphi 0, %s623
    %s624 = sphi 0, %s621
    %s625 = sphi 0, %s624
    %s641 = sphi 0, %s625
    %s647 = sphi 0, %s649
    %s650 = sphi 0, %s647
    %s651 = sphi 0, %s650
    %s667 = sphi 0, %s651
    %s673 = sphi 0, %s675
    %s676 = sphi 0, %s673
    %s677 = sphi 0, %s676
    %s693 = sphi 0, %s677
    %s699 = sphi 0, %s701
    %s702 = sphi 0, %s699
    %s703 = sphi 0, %s702
    %s719 = sphi 0, %s703
    %s725 = sphi 0, %s727
    %s728 = sphi 0, %s725
    %s729 = sphi 0, %s728
    %s745 = sphi 0, %s729
  $region4: #{_lambda_.1} parent=0 // loop_header_branch
    %69 = sbr.rel (%p67) target = $region8
  $region5: #{_lambda_.1} parent=0 // loop_body
    %s71 = ssub.s32 %s66, 1
    %s72 = ssub.s32 %s66, 2
    %s73 = sadd.s32 %s66, 1
    %s74 = ssub.s32 %s66, %s73
    %p75 = scmp.eq.s32.totalorder %s74, 0
    %s77 = sadd.s32 %s76, 1
    %s78 = scalar_select %p75, %s76, %s77
    %p81 = pneg %p75
    %p82 = scmp.eq.s32.totalorder %s66, 1
    %p83 = por %p81, %p82
    %p84 = scmp.ne.s32.totalorder %s76, %s79
    %p85 = scmp.eq.s32.totalorder %s66, 0
    %p86 = por %p84, %p85
    %p87 = scmp.ne.s32.totalorder %s76, %s79
    %p88 = scmp.eq.s32.totalorder %s71, 1
    %p89 = por %p87, %p88
    %p90 = scmp.ne.s32.totalorder %s79, %s80
    %p91 = scmp.eq.s32.totalorder %s71, 0
    %p92 = por %p90, %p91
    %p93 = scmp.ne.s32.totalorder %s79, %s80
    %p94 = scmp.eq.s32.totalorder %s72, 1
    %p95 = por %p93, %p94
    %p97 = scmp.ne.s32.totalorder %s80, %s96
    %p98 = scmp.eq.s32.totalorder %s72, 0
    %p99 = por %p97, %p98
    %s101 = sadd.s32 %s100, 1
    %p104 = scmp.eq.s32.totalorder %s66, 1
    %p105 = scmp.ne.s32.totalorder %s100, %s102
    %p106 = scmp.eq.s32.totalorder %s66, 0
    %p107 = por %p105, %p106
    %p108 = scmp.ne.s32.totalorder %s100, %s102
    %p109 = scmp.eq.s32.totalorder %s71, 1
    %p110 = por %p108, %p109
    %p111 = scmp.ne.s32.totalorder %s102, %s103
    %p112 = scmp.eq.s32.totalorder %s71, 0
    %p113 = por %p111, %p112
    %p114 = scmp.ne.s32.totalorder %s102, %s103
    %p115 = scmp.eq.s32.totalorder %s72, 1
    %p116 = por %p114, %p115
    %p118 = scmp.ne.s32.totalorder %s103, %s117
    %p119 = scmp.eq.s32.totalorder %s72, 0
    %p120 = por %p118, %p119
    %s122 = sadd.s32 %s121, 1
    %p125 = scmp.eq.s32.totalorder %s66, 1
    %p126 = scmp.ne.s32.totalorder %s121, %s123
    %p127 = scmp.eq.s32.totalorder %s66, 0
    %p128 = por %p126, %p127
    %p129 = scmp.ne.s32.totalorder %s121, %s123
    %p130 = scmp.eq.s32.totalorder %s71, 1
    %p131 = por %p129, %p130
    %p132 = scmp.ne.s32.totalorder %s123, %s124
    %p133 = scmp.eq.s32.totalorder %s71, 0
    %p134 = por %p132, %p133
    %p135 = scmp.ne.s32.totalorder %s123, %s124
    %p136 = scmp.eq.s32.totalorder %s72, 1
    %p137 = por %p135, %p136
    %p139 = scmp.ne.s32.totalorder %s124, %s138
    %p140 = scmp.eq.s32.totalorder %s72, 0
    %p141 = por %p139, %p140
    %s143 = sadd.s32 %s142, 1
    %p146 = scmp.eq.s32.totalorder %s66, 1
    %p147 = scmp.ne.s32.totalorder %s142, %s144
    %p148 = scmp.eq.s32.totalorder %s66, 0
    %p149 = por %p147, %p148
    %p150 = scmp.ne.s32.totalorder %s142, %s144
    %p151 = scmp.eq.s32.totalorder %s71, 1
    %p152 = por %p150, %p151
    %p153 = scmp.ne.s32.totalorder %s144, %s145
    %p154 = scmp.eq.s32.totalorder %s71, 0
    %p155 = por %p153, %p154
    %p156 = scmp.ne.s32.totalorder %s144, %s145
    %p157 = scmp.eq.s32.totalorder %s72, 1
    %p158 = por %p156, %p157
    %p160 = scmp.ne.s32.totalorder %s145, %s159
    %p161 = scmp.eq.s32.totalorder %s72, 0
    %p162 = por %p160, %p161
    %s164 = sadd.s32 %s163, 1
    %p167 = scmp.eq.s32.totalorder %s66, 1
    %p168 = scmp.ne.s32.totalorder %s163, %s165
    %p169 = scmp.eq.s32.totalorder %s66, 0
    %p170 = por %p168, %p169
    %p171 = scmp.ne.s32.totalorder %s163, %s165
    %p172 = scmp.eq.s32.totalorder %s71, 1
    %p173 = por %p171, %p172
    %p174 = scmp.ne.s32.totalorder %s165, %s166
    %p175 = scmp.eq.s32.totalorder %s71, 0
    %p176 = por %p174, %p175
    %p177 = scmp.ne.s32.totalorder %s165, %s166
    %p178 = scmp.eq.s32.totalorder %s72, 1
    %p179 = por %p177, %p178
    %p181 = scmp.ne.s32.totalorder %s166, %s180
    %p182 = scmp.eq.s32.totalorder %s72, 0
    %p183 = por %p181, %p182
    %s185 = sadd.s32 %s184, 1
    %p188 = scmp.eq.s32.totalorder %s66, 1
    %p189 = scmp.ne.s32.totalorder %s184, %s186
    %p190 = scmp.eq.s32.totalorder %s66, 0
    %p191 = por %p189, %p190
    %p192 = scmp.ne.s32.totalorder %s184, %s186
    %p193 = scmp.eq.s32.totalorder %s71, 1
    %p194 = por %p192, %p193
    %p195 = scmp.ne.s32.totalorder %s186, %s187
    %p196 = scmp.eq.s32.totalorder %s71, 0
    %p197 = por %p195, %p196
    %p198 = scmp.ne.s32.totalorder %s186, %s187
    %p199 = scmp.eq.s32.totalorder %s72, 1
    %p200 = por %p198, %p199
    %p202 = scmp.ne.s32.totalorder %s187, %s201
    %p203 = scmp.eq.s32.totalorder %s72, 0
    %p204 = por %p202, %p203
    %s206 = sadd.s32 %s205, 1
    %p209 = scmp.eq.s32.totalorder %s66, 1
    %p210 = scmp.ne.s32.totalorder %s205, %s207
    %p211 = scmp.eq.s32.totalorder %s66, 0
    %p212 = por %p210, %p211
    %p213 = scmp.ne.s32.totalorder %s205, %s207
    %p214 = scmp.eq.s32.totalorder %s71, 1
    %p215 = por %p213, %p214
    %p216 = scmp.ne.s32.totalorder %s207, %s208
    %p217 = scmp.eq.s32.totalorder %s71, 0
    %p218 = por %p216, %p217
    %p219 = scmp.ne.s32.totalorder %s207, %s208
    %p220 = scmp.eq.s32.totalorder %s72, 1
    %p221 = por %p219, %p220
    %p223 = scmp.ne.s32.totalorder %s208, %s222
    %p224 = scmp.eq.s32.totalorder %s72, 0
    %p225 = por %p223, %p224
    %s227 = sadd.s32 %s226, 1
    %p230 = scmp.eq.s32.totalorder %s66, 1
    %p231 = scmp.ne.s32.totalorder %s226, %s228
    %p232 = scmp.eq.s32.totalorder %s66, 0
    %p233 = por %p231, %p232
    %p234 = scmp.ne.s32.totalorder %s226, %s228
    %p235 = scmp.eq.s32.totalorder %s71, 1
    %p236 = por %p234, %p235
    %p237 = scmp.ne.s32.totalorder %s228, %s229
    %p238 = scmp.eq.s32.totalorder %s71, 0
    %p239 = por %p237, %p238
    %p240 = scmp.ne.s32.totalorder %s228, %s229
    %p241 = scmp.eq.s32.totalorder %s72, 1
    %p242 = por %p240, %p241
    %p244 = scmp.ne.s32.totalorder %s229, %s243
    %p245 = scmp.eq.s32.totalorder %s72, 0
    %p246 = por %p244, %p245
    %s248 = sadd.s32 %s247, 1
    %p251 = scmp.eq.s32.totalorder %s66, 1
    %p252 = scmp.ne.s32.totalorder %s247, %s249
    %p253 = scmp.eq.s32.totalorder %s66, 0
    %p254 = por %p252, %p253
    %p255 = scmp.ne.s32.totalorder %s247, %s249
    %p256 = scmp.eq.s32.totalorder %s71, 1
    %p257 = por %p255, %p256
    %p258 = scmp.ne.s32.totalorder %s249, %s250
    %p259 = scmp.eq.s32.totalorder %s71, 0
    %p260 = por %p258, %p259
    %p261 = scmp.ne.s32.totalorder %s249, %s250
    %p262 = scmp.eq.s32.totalorder %s72, 1
    %p263 = por %p261, %p262
    %p265 = scmp.ne.s32.totalorder %s250, %s264
    %p266 = scmp.eq.s32.totalorder %s72, 0
    %p267 = por %p265, %p266
    %s269 = sadd.s32 %s268, 1
    %p272 = scmp.eq.s32.totalorder %s66, 1
    %p273 = scmp.ne.s32.totalorder %s268, %s270
    %p274 = scmp.eq.s32.totalorder %s66, 0
    %p275 = por %p273, %p274
    %p276 = scmp.ne.s32.totalorder %s268, %s270
    %p277 = scmp.eq.s32.totalorder %s71, 1
    %p278 = por %p276, %p277
    %p279 = scmp.ne.s32.totalorder %s270, %s271
    %p280 = scmp.eq.s32.totalorder %s71, 0
    %p281 = por %p279, %p280
    %p282 = scmp.ne.s32.totalorder %s270, %s271
    %p283 = scmp.eq.s32.totalorder %s72, 1
    %p284 = por %p282, %p283
    %p286 = scmp.ne.s32.totalorder %s271, %s285
    %p287 = scmp.eq.s32.totalorder %s72, 0
    %p288 = por %p286, %p287
    %s290 = sadd.s32 %s289, 1
    %p293 = scmp.eq.s32.totalorder %s66, 1
    %p294 = scmp.ne.s32.totalorder %s289, %s291
    %p295 = scmp.eq.s32.totalorder %s66, 0
    %p296 = por %p294, %p295
    %p297 = scmp.ne.s32.totalorder %s289, %s291
    %p298 = scmp.eq.s32.totalorder %s71, 1
    %p299 = por %p297, %p298
    %p300 = scmp.ne.s32.totalorder %s291, %s292
    %p301 = scmp.eq.s32.totalorder %s71, 0
    %p302 = por %p300, %p301
    %p303 = scmp.ne.s32.totalorder %s291, %s292
    %p304 = scmp.eq.s32.totalorder %s72, 1
    %p305 = por %p303, %p304
    %p307 = scmp.ne.s32.totalorder %s292, %s306
    %p308 = scmp.eq.s32.totalorder %s72, 0
    %p309 = por %p307, %p308
    %s311 = sadd.s32 %s310, 1
    %p314 = scmp.eq.s32.totalorder %s66, 1
    %p315 = scmp.ne.s32.totalorder %s310, %s312
    %p316 = scmp.eq.s32.totalorder %s66, 0
    %p317 = por %p315, %p316
    %p318 = scmp.ne.s32.totalorder %s310, %s312
    %p319 = scmp.eq.s32.totalorder %s71, 1
    %p320 = por %p318, %p319
    %p321 = scmp.ne.s32.totalorder %s312, %s313
    %p322 = scmp.eq.s32.totalorder %s71, 0
    %p323 = por %p321, %p322
    %p324 = scmp.ne.s32.totalorder %s312, %s313
    %p325 = scmp.eq.s32.totalorder %s72, 1
    %p326 = por %p324, %p325
    %p328 = scmp.ne.s32.totalorder %s313, %s327
    %p329 = scmp.eq.s32.totalorder %s72, 0
    %p330 = por %p328, %p329
    %s332 = sadd.s32 %s331, 1
    %p335 = scmp.eq.s32.totalorder %s66, 1
    %p336 = scmp.ne.s32.totalorder %s331, %s333
    %p337 = scmp.eq.s32.totalorder %s66, 0
    %p338 = por %p336, %p337
    %p339 = scmp.ne.s32.totalorder %s331, %s333
    %p340 = scmp.eq.s32.totalorder %s71, 1
    %p341 = por %p339, %p340
    %p342 = scmp.ne.s32.totalorder %s333, %s334
    %p343 = scmp.eq.s32.totalorder %s71, 0
    %p344 = por %p342, %p343
    %p345 = scmp.ne.s32.totalorder %s333, %s334
    %p346 = scmp.eq.s32.totalorder %s72, 1
    %p347 = por %p345, %p346
    %p349 = scmp.ne.s32.totalorder %s334, %s348
    %p350 = scmp.eq.s32.totalorder %s72, 0
    %p351 = por %p349, %p350
    %s353 = sadd.s32 %s352, 1
    %p356 = scmp.eq.s32.totalorder %s66, 1
    %p357 = scmp.ne.s32.totalorder %s352, %s354
    %p358 = scmp.eq.s32.totalorder %s66, 0
    %p359 = por %p357, %p358
    %p360 = scmp.ne.s32.totalorder %s352, %s354
    %p361 = scmp.eq.s32.totalorder %s71, 1
    %p362 = por %p360, %p361
    %p363 = scmp.ne.s32.totalorder %s354, %s355
    %p364 = scmp.eq.s32.totalorder %s71, 0
    %p365 = por %p363, %p364
    %p366 = scmp.ne.s32.totalorder %s354, %s355
    %p367 = scmp.eq.s32.totalorder %s72, 1
    %p368 = por %p366, %p367
    %p370 = scmp.ne.s32.totalorder %s355, %s369
    %p371 = scmp.eq.s32.totalorder %s72, 0
    %p372 = por %p370, %p371
    %s374 = sadd.s32 %s373, 1
    %p377 = scmp.eq.s32.totalorder %s66, 1
    %p378 = scmp.ne.s32.totalorder %s373, %s375
    %p379 = scmp.eq.s32.totalorder %s66, 0
    %p380 = por %p378, %p379
    %p381 = scmp.ne.s32.totalorder %s373, %s375
    %p382 = scmp.eq.s32.totalorder %s71, 1
    %p383 = por %p381, %p382
    %p384 = scmp.ne.s32.totalorder %s375, %s376
    %p385 = scmp.eq.s32.totalorder %s71, 0
    %p386 = por %p384, %p385
    %p387 = scmp.ne.s32.totalorder %s375, %s376
    %p388 = scmp.eq.s32.totalorder %s72, 1
    %p389 = por %p387, %p388
    %p391 = scmp.ne.s32.totalorder %s376, %s390
    %p392 = scmp.eq.s32.totalorder %s72, 0
    %p393 = por %p391, %p392
    %s395 = sadd.s32 %s394, 1
    %p398 = scmp.eq.s32.totalorder %s66, 1
    %p399 = scmp.ne.s32.totalorder %s394, %s396
    %p400 = scmp.eq.s32.totalorder %s66, 0
    %p401 = por %p399, %p400
    %p402 = scmp.ne.s32.totalorder %s394, %s396
    %p403 = scmp.eq.s32.totalorder %s71, 1
    %p404 = por %p402, %p403
    %p405 = scmp.ne.s32.totalorder %s396, %s397
    %p406 = scmp.eq.s32.totalorder %s71, 0
    %p407 = por %p405, %p406
    %p408 = scmp.ne.s32.totalorder %s396, %s397
    %p409 = scmp.eq.s32.totalorder %s72, 1
    %p410 = por %p408, %p409
    %p412 = scmp.ne.s32.totalorder %s397, %s411
    %p413 = scmp.eq.s32.totalorder %s72, 0
    %p414 = por %p412, %p413
    %s416 = sadd.s32 %s415, 1
    %p419 = scmp.eq.s32.totalorder %s66, 1
    %p420 = scmp.ne.s32.totalorder %s415, %s417
    %p421 = scmp.eq.s32.totalorder %s66, 0
    %p422 = por %p420, %p421
    %p423 = scmp.ne.s32.totalorder %s415, %s417
    %p424 = scmp.eq.s32.totalorder %s71, 1
    %p425 = por %p423, %p424
    %p426 = scmp.ne.s32.totalorder %s417, %s418
    %p427 = scmp.eq.s32.totalorder %s71, 0
    %p428 = por %p426, %p427
    %p429 = scmp.ne.s32.totalorder %s417, %s418
    %p430 = scmp.eq.s32.totalorder %s72, 1
    %p431 = por %p429, %p430
    %p433 = scmp.ne.s32.totalorder %s418, %s432
    %p434 = scmp.eq.s32.totalorder %s72, 0
    %p435 = por %p433, %p434
    %s437 = sadd.s32 %s436, 1
    %p440 = scmp.eq.s32.totalorder %s66, 1
    %p441 = scmp.ne.s32.totalorder %s436, %s438
    %p442 = scmp.eq.s32.totalorder %s66, 0
    %p443 = por %p441, %p442
    %p444 = scmp.ne.s32.totalorder %s436, %s438
    %p445 = scmp.eq.s32.totalorder %s71, 1
    %p446 = por %p444, %p445
    %p447 = scmp.ne.s32.totalorder %s438, %s439
    %p448 = scmp.eq.s32.totalorder %s71, 0
    %p449 = por %p447, %p448
    %p450 = scmp.ne.s32.totalorder %s438, %s439
    %p451 = scmp.eq.s32.totalorder %s72, 1
    %p452 = por %p450, %p451
    %p454 = scmp.ne.s32.totalorder %s439, %s453
    %p455 = scmp.eq.s32.totalorder %s72, 0
    %p456 = por %p454, %p455
    %s458 = sadd.s32 %s457, 1
    %p461 = scmp.eq.s32.totalorder %s66, 1
    %p462 = scmp.ne.s32.totalorder %s457, %s459
    %p463 = scmp.eq.s32.totalorder %s66, 0
    %p464 = por %p462, %p463
    %p465 = scmp.ne.s32.totalorder %s457, %s459
    %p466 = scmp.eq.s32.totalorder %s71, 1
    %p467 = por %p465, %p466
    %p468 = scmp.ne.s32.totalorder %s459, %s460
    %p469 = scmp.eq.s32.totalorder %s71, 0
    %p470 = por %p468, %p469
    %p471 = scmp.ne.s32.totalorder %s459, %s460
    %p472 = scmp.eq.s32.totalorder %s72, 1
    %p473 = por %p471, %p472
    %p475 = scmp.ne.s32.totalorder %s460, %s474
    %p476 = scmp.eq.s32.totalorder %s72, 0
    %p477 = por %p475, %p476
    %s479 = sadd.s32 %s478, 1
    %p482 = scmp.eq.s32.totalorder %s66, 1
    %p483 = scmp.ne.s32.totalorder %s478, %s480
    %p484 = scmp.eq.s32.totalorder %s66, 0
    %p485 = por %p483, %p484
    %p486 = scmp.ne.s32.totalorder %s478, %s480
    %p487 = scmp.eq.s32.totalorder %s71, 1
    %p488 = por %p486, %p487
    %p489 = scmp.ne.s32.totalorder %s480, %s481
    %p490 = scmp.eq.s32.totalorder %s71, 0
    %p491 = por %p489, %p490
    %p492 = scmp.ne.s32.totalorder %s480, %s481
    %p493 = scmp.eq.s32.totalorder %s72, 1
    %p494 = por %p492, %p493
    %p496 = scmp.ne.s32.totalorder %s481, %s495
    %p497 = scmp.eq.s32.totalorder %s72, 0
    %p498 = por %p496, %p497
    %s500 = sadd.s32 %s499, 1
    %p503 = scmp.eq.s32.totalorder %s66, 1
    %p504 = scmp.ne.s32.totalorder %s499, %s501
    %p505 = scmp.eq.s32.totalorder %s66, 0
    %p506 = por %p504, %p505
    %p507 = scmp.ne.s32.totalorder %s499, %s501
    %p508 = scmp.eq.s32.totalorder %s71, 1
    %p509 = por %p507, %p508
    %p510 = scmp.ne.s32.totalorder %s501, %s502
    %p511 = scmp.eq.s32.totalorder %s71, 0
    %p512 = por %p510, %p511
    %p513 = scmp.ne.s32.totalorder %s501, %s502
    %p514 = scmp.eq.s32.totalorder %s72, 1
    %p515 = por %p513, %p514
    %p517 = scmp.ne.s32.totalorder %s502, %s516
    %p518 = scmp.eq.s32.totalorder %s72, 0
    %p519 = por %p517, %p518
    %s521 = sadd.s32 %s520, 1
    %p524 = scmp.eq.s32.totalorder %s66, 1
    %p525 = scmp.ne.s32.totalorder %s520, %s522
    %p526 = scmp.eq.s32.totalorder %s66, 0
    %p527 = por %p525, %p526
    %p528 = scmp.ne.s32.totalorder %s520, %s522
    %p529 = scmp.eq.s32.totalorder %s71, 1
    %p530 = por %p528, %p529
    %p531 = scmp.ne.s32.totalorder %s522, %s523
    %p532 = scmp.eq.s32.totalorder %s71, 0
    %p533 = por %p531, %p532
    %p534 = scmp.ne.s32.totalorder %s522, %s523
    %p535 = scmp.eq.s32.totalorder %s72, 1
    %p536 = por %p534, %p535
    %p538 = scmp.ne.s32.totalorder %s523, %s537
    %p539 = scmp.eq.s32.totalorder %s72, 0
    %p540 = por %p538, %p539
    %s541 = ssub.s32 %s66, %s73
    %p542 = scmp.eq.s32.totalorder %s541, 0
    %s544 = sadd.s32 %s543, 1
    %s545 = scalar_select %p542, %s543, %s544
    %p548 = pneg %p542
    %p549 = scmp.eq.s32.totalorder %s66, 1
    %p550 = por %p548, %p549
    %p551 = scmp.ne.s32.totalorder %s543, %s546
    %p552 = scmp.eq.s32.totalorder %s66, 0
    %p553 = por %p551, %p552
    %p554 = scmp.ne.s32.totalorder %s543, %s546
    %p555 = scmp.eq.s32.totalorder %s71, 1
    %p556 = por %p554, %p555
    %p557 = scmp.ne.s32.totalorder %s546, %s547
    %p558 = scmp.eq.s32.totalorder %s71, 0
    %p559 = por %p557, %p558
    %p560 = scmp.ne.s32.totalorder %s546, %s547
    %p561 = scmp.eq.s32.totalorder %s72, 1
    %p562 = por %p560, %p561
    %p564 = scmp.ne.s32.totalorder %s547, %s563
    %p565 = scmp.eq.s32.totalorder %s72, 0
    %p566 = por %p564, %p565
    %s567 = ssub.s32 %s66, %s73
    %p568 = scmp.eq.s32.totalorder %s567, 0
    %s570 = sadd.s32 %s569, 1
    %s571 = scalar_select %p568, %s569, %s570
    %p574 = pneg %p568
    %p575 = scmp.eq.s32.totalorder %s66, 1
    %p576 = por %p574, %p575
    %p577 = scmp.ne.s32.totalorder %s569, %s572
    %p578 = scmp.eq.s32.totalorder %s66, 0
    %p579 = por %p577, %p578
    %p580 = scmp.ne.s32.totalorder %s569, %s572
    %p581 = scmp.eq.s32.totalorder %s71, 1
    %p582 = por %p580, %p581
    %p583 = scmp.ne.s32.totalorder %s572, %s573
    %p584 = scmp.eq.s32.totalorder %s71, 0
    %p585 = por %p583, %p584
    %p586 = scmp.ne.s32.totalorder %s572, %s573
    %p587 = scmp.eq.s32.totalorder %s72, 1
    %p588 = por %p586, %p587
    %p590 = scmp.ne.s32.totalorder %s573, %s589
    %p591 = scmp.eq.s32.totalorder %s72, 0
    %p592 = por %p590, %p591
    %s593 = ssub.s32 %s66, %s73
    %p594 = scmp.eq.s32.totalorder %s593, 0
    %s596 = sadd.s32 %s595, 1
    %s597 = scalar_select %p594, %s595, %s596
    %p600 = pneg %p594
    %p601 = scmp.eq.s32.totalorder %s66, 1
    %p602 = por %p600, %p601
    %p603 = scmp.ne.s32.totalorder %s595, %s598
    %p604 = scmp.eq.s32.totalorder %s66, 0
    %p605 = por %p603, %p604
    %p606 = scmp.ne.s32.totalorder %s595, %s598
    %p607 = scmp.eq.s32.totalorder %s71, 1
    %p608 = por %p606, %p607
    %p609 = scmp.ne.s32.totalorder %s598, %s599
    %p610 = scmp.eq.s32.totalorder %s71, 0
    %p611 = por %p609, %p610
    %p612 = scmp.ne.s32.totalorder %s598, %s599
    %p613 = scmp.eq.s32.totalorder %s72, 1
    %p614 = por %p612, %p613
    %p616 = scmp.ne.s32.totalorder %s599, %s615
    %p617 = scmp.eq.s32.totalorder %s72, 0
    %p618 = por %p616, %p617
    %s619 = ssub.s32 %s66, %s73
    %p620 = scmp.eq.s32.totalorder %s619, 0
    %s622 = sadd.s32 %s621, 1
    %s623 = scalar_select %p620, %s621, %s622
    %p626 = pneg %p620
    %p627 = scmp.eq.s32.totalorder %s66, 1
    %p628 = por %p626, %p627
    %p629 = scmp.ne.s32.totalorder %s621, %s624
    %p630 = scmp.eq.s32.totalorder %s66, 0
    %p631 = por %p629, %p630
    %p632 = scmp.ne.s32.totalorder %s621, %s624
    %p633 = scmp.eq.s32.totalorder %s71, 1
    %p634 = por %p632, %p633
    %p635 = scmp.ne.s32.totalorder %s624, %s625
    %p636 = scmp.eq.s32.totalorder %s71, 0
    %p637 = por %p635, %p636
    %p638 = scmp.ne.s32.totalorder %s624, %s625
    %p639 = scmp.eq.s32.totalorder %s72, 1
    %p640 = por %p638, %p639
    %p642 = scmp.ne.s32.totalorder %s625, %s641
    %p643 = scmp.eq.s32.totalorder %s72, 0
    %p644 = por %p642, %p643
    %s645 = ssub.s32 %s66, %s73
    %p646 = scmp.eq.s32.totalorder %s645, 0
    %s648 = sadd.s32 %s647, 1
    %s649 = scalar_select %p646, %s647, %s648
    %p652 = pneg %p646
    %p653 = scmp.eq.s32.totalorder %s66, 1
    %p654 = por %p652, %p653
    %p655 = scmp.ne.s32.totalorder %s647, %s650
    %p656 = scmp.eq.s32.totalorder %s66, 0
    %p657 = por %p655, %p656
    %p658 = scmp.ne.s32.totalorder %s647, %s650
    %p659 = scmp.eq.s32.totalorder %s71, 1
    %p660 = por %p658, %p659
    %p661 = scmp.ne.s32.totalorder %s650, %s651
    %p662 = scmp.eq.s32.totalorder %s71, 0
    %p663 = por %p661, %p662
    %p664 = scmp.ne.s32.totalorder %s650, %s651
    %p665 = scmp.eq.s32.totalorder %s72, 1
    %p666 = por %p664, %p665
    %p668 = scmp.ne.s32.totalorder %s651, %s667
    %p669 = scmp.eq.s32.totalorder %s72, 0
    %p670 = por %p668, %p669
    %s671 = ssub.s32 %s66, %s73
    %p672 = scmp.eq.s32.totalorder %s671, 0
    %s674 = sadd.s32 %s673, 1
    %s675 = scalar_select %p672, %s673, %s674
    %p678 = pneg %p672
    %p679 = scmp.eq.s32.totalorder %s66, 1
    %p680 = por %p678, %p679
    %p681 = scmp.ne.s32.totalorder %s673, %s676
    %p682 = scmp.eq.s32.totalorder %s66, 0
    %p683 = por %p681, %p682
    %p684 = scmp.ne.s32.totalorder %s673, %s676
    %p685 = scmp.eq.s32.totalorder %s71, 1
    %p686 = por %p684, %p685
    %p687 = scmp.ne.s32.totalorder %s676, %s677
    %p688 = scmp.eq.s32.totalorder %s71, 0
    %p689 = por %p687, %p688
    %p690 = scmp.ne.s32.totalorder %s676, %s677
    %p691 = scmp.eq.s32.totalorder %s72, 1
    %p692 = por %p690, %p691
    %p694 = scmp.ne.s32.totalorder %s677, %s693
    %p695 = scmp.eq.s32.totalorder %s72, 0
    %p696 = por %p694, %p695
    %s697 = ssub.s32 %s66, %s73
    %p698 = scmp.eq.s32.totalorder %s697, 0
    %s700 = sadd.s32 %s699, 1
    %s701 = scalar_select %p698, %s699, %s700
    %p704 = pneg %p698
    %p705 = scmp.eq.s32.totalorder %s66, 1
    %p706 = por %p704, %p705
    %p707 = scmp.ne.s32.totalorder %s699, %s702
    %p708 = scmp.eq.s32.totalorder %s66, 0
    %p709 = por %p707, %p708
    %p710 = scmp.ne.s32.totalorder %s699, %s702
    %p711 = scmp.eq.s32.totalorder %s71, 1
    %p712 = por %p710, %p711
    %p713 = scmp.ne.s32.totalorder %s702, %s703
    %p714 = scmp.eq.s32.totalorder %s71, 0
    %p715 = por %p713, %p714
    %p716 = scmp.ne.s32.totalorder %s702, %s703
    %p717 = scmp.eq.s32.totalorder %s72, 1
    %p718 = por %p716, %p717
    %p720 = scmp.ne.s32.totalorder %s703, %s719
    %p721 = scmp.eq.s32.totalorder %s72, 0
    %p722 = por %p720, %p721
    %s723 = ssub.s32 %s66, %s73
    %p724 = scmp.eq.s32.totalorder %s723, 0
    %s726 = sadd.s32 %s725, 1
    %s727 = scalar_select %p724, %s725, %s726
    %p730 = pneg %p724
    %p731 = scmp.eq.s32.totalorder %s66, 1
    %p732 = por %p730, %p731
    %p733 = scmp.ne.s32.totalorder %s725, %s728
    %p734 = scmp.eq.s32.totalorder %s66, 0
    %p735 = por %p733, %p734
    %p736 = scmp.ne.s32.totalorder %s725, %s728
    %p737 = scmp.eq.s32.totalorder %s71, 1
    %p738 = por %p736, %p737
    %p739 = scmp.ne.s32.totalorder %s728, %s729
    %p740 = scmp.eq.s32.totalorder %s71, 0
    %p741 = por %p739, %p740
    %p742 = scmp.ne.s32.totalorder %s728, %s729
    %p743 = scmp.eq.s32.totalorder %s72, 1
    %p744 = por %p742, %p743
    %p746 = scmp.ne.s32.totalorder %s729, %s745
    %p747 = scmp.eq.s32.totalorder %s72, 0
    %p748 = por %p746, %p747
    %p749 = scmp.le.s32.totalorder 1, %s66
    %p750 = scmp.lt.s32.totalorder %s66, 3
    %p751 = pnand %p749, %p750
    %p752 = pneg %p751
    // Predicated region
    $region9: #{_lambda_.1} parent=5 // pred_check
      _
    $region10: #{_lambda_.1} parent=5 // pred_check_branch
      %754 = sbr.rel (%p751) target = $region12
    $region11: #{_lambda_.1} parent=5 // pred_region
      %s755 = ssub.s32 %s66, 1
      // Predicated region
      $region13: #{_lambda_.1} parent=11 // pred_check
        %p756 = pneg %p113
      $region14: #{_lambda_.1} parent=11 // pred_check_branch
        %758 = sbr.rel (%p756) target = $region16
      $region15: #{_lambda_.1} parent=11 // pred_region
        _
      $region16: #{_lambda_.1} parent=11 // pred_fallthru
        _
      // Predicated region
      $region17: #{_lambda_.1} parent=11 // pred_check
        %p759 = pneg %p134
      $region18: #{_lambda_.1} parent=11 // pred_check_branch
        %761 = sbr.rel (%p759) target = $region20
      $region19: #{_lambda_.1} parent=11 // pred_region
        _
      $region20: #{_lambda_.1} parent=11 // pred_fallthru
        _
      // Predicated region
      $region21: #{_lambda_.1} parent=11 // pred_check
        %p762 = pneg %p155
      $region22: #{_lambda_.1} parent=11 // pred_check_branch
        %764 = sbr.rel (%p762) target = $region24
      $region23: #{_lambda_.1} parent=11 // pred_region
        _
      $region24: #{_lambda_.1} parent=11 // pred_fallthru
        _
      // Predicated region
      $region25: #{_lambda_.1} parent=11 // pred_check
        %p765 = pneg %p176
      $region26: #{_lambda_.1} parent=11 // pred_check_branch
        %767 = sbr.rel (%p765) target = $region28
      $region27: #{_lambda_.1} parent=11 // pred_region
        _
      $region28: #{_lambda_.1} parent=11 // pred_fallthru
        _
      // Predicated region
      $region29: #{_lambda_.1} parent=11 // pred_check
        %p768 = pneg %p197
      $region30: #{_lambda_.1} parent=11 // pred_check_branch
        %770 = sbr.rel (%p768) target = $region32
      $region31: #{_lambda_.1} parent=11 // pred_region
        _
      $region32: #{_lambda_.1} parent=11 // pred_fallthru
        _
      // Predicated region
      $region33: #{_lambda_.1} parent=11 // pred_check
        %p771 = pneg %p218
      $region34: #{_lambda_.1} parent=11 // pred_check_branch
        %773 = sbr.rel (%p771) target = $region36
      $region35: #{_lambda_.1} parent=11 // pred_region
        _
      $region36: #{_lambda_.1} parent=11 // pred_fallthru
        _
      // Predicated region
      $region37: #{_lambda_.1} parent=11 // pred_check
        %p774 = pneg %p239
      $region38: #{_lambda_.1} parent=11 // pred_check_branch
        %776 = sbr.rel (%p774) target = $region40
      $region39: #{_lambda_.1} parent=11 // pred_region
        _
      $region40: #{_lambda_.1} parent=11 // pred_fallthru
        _
      // Predicated region
      $region41: #{_lambda_.1} parent=11 // pred_check
        %p777 = pneg %p260
      $region42: #{_lambda_.1} parent=11 // pred_check_branch
        %779 = sbr.rel (%p777) target = $region44
      $region43: #{_lambda_.1} parent=11 // pred_region
        _
      $region44: #{_lambda_.1} parent=11 // pred_fallthru
        _
      // Predicated region
      $region45: #{_lambda_.1} parent=11 // pred_check
        %p780 = pneg %p281
      $region46: #{_lambda_.1} parent=11 // pred_check_branch
        %782 = sbr.rel (%p780) target = $region48
      $region47: #{_lambda_.1} parent=11 // pred_region
        _
      $region48: #{_lambda_.1} parent=11 // pred_fallthru
        _
      // Predicated region
      $region49: #{_lambda_.1} parent=11 // pred_check
        %p783 = pneg %p302
      $region50: #{_lambda_.1} parent=11 // pred_check_branch
        %785 = sbr.rel (%p783) target = $region52
      $region51: #{_lambda_.1} parent=11 // pred_region
        _
      $region52: #{_lambda_.1} parent=11 // pred_fallthru
        _
      // Predicated region
      $region53: #{_lambda_.1} parent=11 // pred_check
        %p786 = pneg %p323
      $region54: #{_lambda_.1} parent=11 // pred_check_branch
        %788 = sbr.rel (%p786) target = $region56
      $region55: #{_lambda_.1} parent=11 // pred_region
        _
      $region56: #{_lambda_.1} parent=11 // pred_fallthru
        _
      // Predicated region
      $region57: #{_lambda_.1} parent=11 // pred_check
        %p789 = pneg %p344
      $region58: #{_lambda_.1} parent=11 // pred_check_branch
        %791 = sbr.rel (%p789) target = $region60
      $region59: #{_lambda_.1} parent=11 // pred_region
        _
      $region60: #{_lambda_.1} parent=11 // pred_fallthru
        _
      // Predicated region
      $region61: #{_lambda_.1} parent=11 // pred_check
        %p792 = pneg %p365
      $region62: #{_lambda_.1} parent=11 // pred_check_branch
        %794 = sbr.rel (%p792) target = $region64
      $region63: #{_lambda_.1} parent=11 // pred_region
        _
      $region64: #{_lambda_.1} parent=11 // pred_fallthru
        _
      // Predicated region
      $region65: #{_lambda_.1} parent=11 // pred_check
        %p795 = pneg %p386
      $region66: #{_lambda_.1} parent=11 // pred_check_branch
        %797 = sbr.rel (%p795) target = $region68
      $region67: #{_lambda_.1} parent=11 // pred_region
        _
      $region68: #{_lambda_.1} parent=11 // pred_fallthru
        _
      // Predicated region
      $region69: #{_lambda_.1} parent=11 // pred_check
        %p798 = pneg %p407
      $region70: #{_lambda_.1} parent=11 // pred_check_branch
        %800 = sbr.rel (%p798) target = $region72
      $region71: #{_lambda_.1} parent=11 // pred_region
        _
      $region72: #{_lambda_.1} parent=11 // pred_fallthru
        _
      // Predicated region
      $region73: #{_lambda_.1} parent=11 // pred_check
        %p801 = pneg %p428
      $region74: #{_lambda_.1} parent=11 // pred_check_branch
        %803 = sbr.rel (%p801) target = $region76
      $region75: #{_lambda_.1} parent=11 // pred_region
        _
      $region76: #{_lambda_.1} parent=11 // pred_fallthru
        _
      // Predicated region
      $region77: #{_lambda_.1} parent=11 // pred_check
        %p804 = pneg %p449
      $region78: #{_lambda_.1} parent=11 // pred_check_branch
        %806 = sbr.rel (%p804) target = $region80
      $region79: #{_lambda_.1} parent=11 // pred_region
        _
      $region80: #{_lambda_.1} parent=11 // pred_fallthru
        _
      // Predicated region
      $region81: #{_lambda_.1} parent=11 // pred_check
        %p807 = pneg %p470
      $region82: #{_lambda_.1} parent=11 // pred_check_branch
        %809 = sbr.rel (%p807) target = $region84
      $region83: #{_lambda_.1} parent=11 // pred_region
        _
      $region84: #{_lambda_.1} parent=11 // pred_fallthru
        _
      // Predicated region
      $region85: #{_lambda_.1} parent=11 // pred_check
        %p810 = pneg %p491
      $region86: #{_lambda_.1} parent=11 // pred_check_branch
        %812 = sbr.rel (%p810) target = $region88
      $region87: #{_lambda_.1} parent=11 // pred_region
        _
      $region88: #{_lambda_.1} parent=11 // pred_fallthru
        _
      // Predicated region
      $region89: #{_lambda_.1} parent=11 // pred_check
        %p813 = pneg %p512
      $region90: #{_lambda_.1} parent=11 // pred_check_branch
        %815 = sbr.rel (%p813) target = $region92
      $region91: #{_lambda_.1} parent=11 // pred_region
        _
      $region92: #{_lambda_.1} parent=11 // pred_fallthru
        _
      // Predicated region
      $region93: #{_lambda_.1} parent=11 // pred_check
        %p816 = pneg %p533
      $region94: #{_lambda_.1} parent=11 // pred_check_branch
        %818 = sbr.rel (%p816) target = $region96
      $region95: #{_lambda_.1} parent=11 // pred_region
        _
      $region96: #{_lambda_.1} parent=11 // pred_fallthru
        _
    $region12: #{_lambda_.1} parent=5 // pred_fallthru
      _
    %p819 = scmp.lt.s32.totalorder %s66, 2
    // Predicated region
    $region97: #{_lambda_.1} parent=5 // pred_check
      %p820 = pneg %p819
    $region98: #{_lambda_.1} parent=5 // pred_check_branch
      %822 = sbr.rel (%p820) target = $region100
    $region99: #{_lambda_.1} parent=5 // pred_region
      // Predicated region
      $region101: #{_lambda_.1} parent=99 // pred_check
        %p823 = pneg %p86
      $region102: #{_lambda_.1} parent=99 // pred_check_branch
        %825 = sbr.rel (%p823) target = $region104
      $region103: #{_lambda_.1} parent=99 // pred_region
        %p826 = scmp.lt.s32.totalorder %s66, 1
        %s827 = scalar_select %p826, %s66, 1
        %s828 = smul.addr %s827, 72
        %s829 = smul.addr %s828, 8
        %s830 = scalar_lea.vmem %s1, %s829
      $region104: #{_lambda_.1} parent=99 // pred_fallthru
        _
    $region100: #{_lambda_.1} parent=5 // pred_fallthru
      _
    %p831 = scmp.le.s32.totalorder 1, %s66
    %p832 = scmp.lt.s32.totalorder %s66, 3
    %p833 = pnand %p831, %p832
    %p834 = pneg %p833
    // Predicated region
    $region105: #{_lambda_.1} parent=5 // pred_check
      _
    $region106: #{_lambda_.1} parent=5 // pred_check_branch
      %836 = sbr.rel (%p833) target = $region108
    $region107: #{_lambda_.1} parent=5 // pred_region
      %s837 = ssub.s32 %s66, 1
      %p838 = scmp.lt.s32.totalorder %s71, 1
      %s839 = scalar_select %p838, %s71, 1
      %s840 = smul.addr %s839, 72
      %s841 = smul.addr %s840, 8
      %s842 = scalar_lea.vmem %s1, %s841
      %p843 = pneg %p92
      %p844 = pneg %p89
      %p845 = pneg %p113
      %p846 = pneg %p110
      %p847 = pneg %p134
      %p848 = pneg %p131
      %p849 = pneg %p155
      %p850 = pneg %p152
      %p851 = pneg %p176
      %p852 = pneg %p173
      %p853 = pneg %p197
      %p854 = pneg %p194
      %p855 = pneg %p218
      %p856 = pneg %p215
      %p857 = pneg %p239
      %p858 = pneg %p236
      %p859 = pneg %p260
      %p860 = pneg %p257
      %p861 = pneg %p281
      %p862 = pneg %p278
      %p863 = pneg %p302
      %p864 = pneg %p299
      %p865 = pneg %p323
      %p866 = pneg %p320
      %p867 = pneg %p344
      %p868 = pneg %p341
      %p869 = pneg %p365
      %p870 = pneg %p362
      %p871 = pneg %p386
      %p872 = pneg %p383
      %p873 = pneg %p407
      %p874 = pneg %p404
      %p875 = pneg %p428
      %p876 = pneg %p425
      %p877 = pneg %p449
      %p878 = pneg %p446
      %p879 = pneg %p470
      %p880 = pneg %p467
      %p881 = pneg %p491
      %p882 = pneg %p488
      %p883 = pneg %p512
      %p884 = pneg %p509
      %p885 = pneg %p533
      %p886 = pneg %p530
      %p887 = pneg %p559
      %p888 = pneg %p556
      %p889 = scmp.lt.s32.totalorder %s71, 1
      %s890 = scalar_select %p889, %s71, 1
      %s891 = smul.addr %s890, 8
      %s892 = scalar_lea.vmem %s45, %s891
      %p893 = pneg %p585
      %p894 = pneg %p582
      %p895 = scmp.lt.s32.totalorder %s71, 1
      %s896 = scalar_select %p895, %s71, 1
      %s897 = smul.addr %s896, 8
      %s898 = scalar_lea.vmem %s47, %s897
      %p899 = pneg %p611
      %p900 = pneg %p608
      %p901 = scmp.lt.s32.totalorder %s71, 1
      %s902 = scalar_select %p901, %s71, 1
      %s903 = smul.addr %s902, 8
      %s904 = scalar_lea.vmem %s49, %s903
      %p905 = pneg %p637
      %p906 = pneg %p634
      %p907 = scmp.lt.s32.totalorder %s71, 1
      %s908 = scalar_select %p907, %s71, 1
      %s909 = smul.addr %s908, 2
      %s910 = smul.addr %s909, 8
      %s911 = scalar_lea.vmem %s51, %s910
      %p912 = pneg %p663
      %p913 = pneg %p660
      %p914 = scmp.lt.s32.totalorder %s71, 1
      %s915 = scalar_select %p914, %s71, 1
      %s916 = smul.addr %s915, 2
      %s917 = smul.addr %s916, 8
      %s918 = scalar_lea.vmem %s53, %s917
      %p919 = pneg %p689
      %p920 = pneg %p686
      %p921 = scmp.lt.s32.totalorder %s71, 1
      %s922 = scalar_select %p921, %s71, 1
      %s923 = smul.addr %s922, 4
      %s924 = smul.addr %s923, 8
      %s925 = scalar_lea.vmem %s55, %s924
      %p926 = pneg %p715
      %p927 = pneg %p712
      %p928 = scmp.lt.s32.totalorder %s71, 1
      %s929 = scalar_select %p928, %s71, 1
      %s930 = smul.addr %s929, 4
      %s931 = smul.addr %s930, 8
      %s932 = scalar_lea.vmem %s57, %s931
      %p933 = pneg %p741
      %p934 = pneg %p738
      %p935 = scmp.lt.s32.totalorder %s71, 1
      %s936 = scalar_select %p935, %s71, 1
      %s937 = smul.addr %s936, 4
      %s938 = smul.addr %s937, 8
      %s939 = scalar_lea.vmem %s59, %s938
      %p940 = scmp.lt.s32.totalorder %s71, 1
      %s941 = scalar_select %p940, %s71, 1
      %s942 = smul.addr %s941, 72
      %s943 = smul.addr %s942, 8
      %s944 = scalar_lea.vmem %s1, %s943
      %p945 = scmp.lt.s32.totalorder %s71, 1
      %s946 = scalar_select %p945, %s71, 1
      %s947 = smul.addr %s946, 8
      %s948 = scalar_lea.vmem %s45, %s947
      %p949 = scmp.lt.s32.totalorder %s71, 1
      %s950 = scalar_select %p949, %s71, 1
      %s951 = smul.addr %s950, 8
      %s952 = scalar_lea.vmem %s47, %s951
      %p953 = scmp.lt.s32.totalorder %s71, 1
      %s954 = scalar_select %p953, %s71, 1
      %s955 = smul.addr %s954, 8
      %s956 = scalar_lea.vmem %s49, %s955
      %p957 = scmp.lt.s32.totalorder %s71, 1
      %s958 = scalar_select %p957, %s71, 1
      %s959 = smul.addr %s958, 2
      %s960 = smul.addr %s959, 8
      %s961 = scalar_lea.vmem %s51, %s960
      %p962 = scmp.lt.s32.totalorder %s71, 1
      %s963 = scalar_select %p962, %s71, 1
      %s964 = smul.addr %s963, 2
      %s965 = smul.addr %s964, 8
      %s966 = scalar_lea.vmem %s53, %s965
      %p967 = scmp.lt.s32.totalorder %s71, 1
      %s968 = scalar_select %p967, %s71, 1
      %s969 = smul.addr %s968, 4
      %s970 = smul.addr %s969, 8
      %s971 = scalar_lea.vmem %s55, %s970
      %p972 = scmp.lt.s32.totalorder %s71, 1
      %s973 = scalar_select %p972, %s71, 1
      %s974 = smul.addr %s973, 4
      %s975 = smul.addr %s974, 8
      %s976 = scalar_lea.vmem %s57, %s975
      %p977 = scmp.lt.s32.totalorder %s71, 1
      %s978 = scalar_select %p977, %s71, 1
      %s979 = smul.addr %s978, 4
      %s980 = smul.addr %s979, 8
      %s981 = scalar_lea.vmem %s59, %s980
      %v983 = vld [vmem:[%s944] sm:$0xff]
      %v984 = vld [vmem:[%s944 + $0x10] sm:$0xff]
      %v985 = vld [vmem:[%s944 + $0x20] sm:$0xff]
      %v986 = vld [vmem:[%s944 + $0x30] sm:$0xff]
      %v987 = vld [vmem:[%s944 + $0x40] sm:$0xff]
      %v988 = vld [vmem:[%s944 + $0x50] sm:$0xff]
      %v989 = vld [vmem:[%s944 + $0x60] sm:$0xff]
      %v990 = vld [vmem:[%s944 + $0x70] sm:$0xff]
      %s991 = scalar_lea.vmem %s944, 144
      %v992 = vld [vmem:[%s991] sm:$0xff]
      %v993 = vld [vmem:[%s991 + $0x10] sm:$0xff]
      %v994 = vld [vmem:[%s991 + $0x20] sm:$0xff]
      %v995 = vld [vmem:[%s991 + $0x30] sm:$0xff]
      %v996 = vld [vmem:[%s991 + $0x40] sm:$0xff]
      %v997 = vld [vmem:[%s991 + $0x50] sm:$0xff]
      %v998 = vld [vmem:[%s991 + $0x60] sm:$0xff]
      %v999 = vld [vmem:[%s991 + $0x70] sm:$0xff]
      %v1000 = vld [vmem:[%s944 + $0x1] sm:$0xff]
      %v1001 = vld [vmem:[%s944 + $0x11] sm:$0xff]
      %v1002 = vld [vmem:[%s944 + $0x21] sm:$0xff]
      %v1003 = vld [vmem:[%s944 + $0x31] sm:$0xff]
      %v1004 = vld [vmem:[%s944 + $0x41] sm:$0xff]
      %v1005 = vld [vmem:[%s944 + $0x51] sm:$0xff]
      %v1006 = vld [vmem:[%s944 + $0x61] sm:$0xff]
      %v1007 = vld [vmem:[%s944 + $0x71] sm:$0xff]
      %s1008 = scalar_lea.vmem %s944, 288
      %v1009 = vld [vmem:[%s1008] sm:$0xff]
      %v1010 = vld [vmem:[%s1008 + $0x10] sm:$0xff]
      %v1011 = vld [vmem:[%s1008 + $0x20] sm:$0xff]
      %v1012 = vld [vmem:[%s1008 + $0x30] sm:$0xff]
      %v1013 = vld [vmem:[%s1008 + $0x40] sm:$0xff]
      %v1014 = vld [vmem:[%s1008 + $0x50] sm:$0xff]
      %v1015 = vld [vmem:[%s1008 + $0x60] sm:$0xff]
      %v1016 = vld [vmem:[%s1008 + $0x70] sm:$0xff]
      %s1017 = scalar_lea.vmem %s944, 432
      %v1018 = vld [vmem:[%s1017] sm:$0xff]
      %v1019 = vld [vmem:[%s1017 + $0x10] sm:$0xff]
      %v1020 = vld [vmem:[%s1017 + $0x20] sm:$0xff]
      %v1021 = vld [vmem:[%s1017 + $0x30] sm:$0xff]
      %v1022 = vld [vmem:[%s1017 + $0x40] sm:$0xff]
      %v1023 = vld [vmem:[%s1017 + $0x50] sm:$0xff]
      %v1024 = vld [vmem:[%s1017 + $0x60] sm:$0xff]
      %v1025 = vld [vmem:[%s1017 + $0x70] sm:$0xff]
      %v1026 = vld [vmem:[%s1008 + $0x1] sm:$0xff]
      %v1027 = vld [vmem:[%s1008 + $0x11] sm:$0xff]
      %v1028 = vld [vmem:[%s1008 + $0x21] sm:$0xff]
      %v1029 = vld [vmem:[%s1008 + $0x31] sm:$0xff]
      %v1030 = vld [vmem:[%s1008 + $0x41] sm:$0xff]
      %v1031 = vld [vmem:[%s1008 + $0x51] sm:$0xff]
      %v1032 = vld [vmem:[%s1008 + $0x61] sm:$0xff]
      %v1033 = vld [vmem:[%s1008 + $0x71] sm:$0xff]
      %s1034 = scalar_lea.vmem %s944, 16
      %v1035 = vld [vmem:[%s1034] sm:$0xff]
      %v1036 = vld [vmem:[%s1034 + $0x10] sm:$0xff]
      %v1037 = vld [vmem:[%s1034 + $0x20] sm:$0xff]
      %v1038 = vld [vmem:[%s1034 + $0x30] sm:$0xff]
      %v1039 = vld [vmem:[%s1034 + $0x40] sm:$0xff]
      %v1040 = vld [vmem:[%s1034 + $0x50] sm:$0xff]
      %v1041 = vld [vmem:[%s1034 + $0x60] sm:$0xff]
      %v1042 = vld [vmem:[%s1034 + $0x70] sm:$0xff]
      %s1043 = scalar_lea.vmem %s944, 160
      %v1044 = vld [vmem:[%s1043] sm:$0xff]
      %v1045 = vld [vmem:[%s1043 + $0x10] sm:$0xff]
      %v1046 = vld [vmem:[%s1043 + $0x20] sm:$0xff]
      %v1047 = vld [vmem:[%s1043 + $0x30] sm:$0xff]
      %v1048 = vld [vmem:[%s1043 + $0x40] sm:$0xff]
      %v1049 = vld [vmem:[%s1043 + $0x50] sm:$0xff]
      %v1050 = vld [vmem:[%s1043 + $0x60] sm:$0xff]
      %v1051 = vld [vmem:[%s1043 + $0x70] sm:$0xff]
      %v1052 = vld [vmem:[%s1034 + $0x1] sm:$0xff]
      %v1053 = vld [vmem:[%s1034 + $0x11] sm:$0xff]
      %v1054 = vld [vmem:[%s1034 + $0x21] sm:$0xff]
      %v1055 = vld [vmem:[%s1034 + $0x31] sm:$0xff]
      %v1056 = vld [vmem:[%s1034 + $0x41] sm:$0xff]
      %v1057 = vld [vmem:[%s1034 + $0x51] sm:$0xff]
      %v1058 = vld [vmem:[%s1034 + $0x61] sm:$0xff]
      %v1059 = vld [vmem:[%s1034 + $0x71] sm:$0xff]
      %1068 = vrot.lane.b32.xlu0 %v992, 4
      %v1069 = vpop.permute.xlu0 %1068
      %1070 = vrot.lane.b32.xlu0 %v993, 4
      %v1071 = vpop.permute.xlu0 %1070
      %1072 = vrot.lane.b32.xlu0 %v994, 4
      %v1073 = vpop.permute.xlu0 %1072
      %1074 = vrot.lane.b32.xlu0 %v995, 4
      %v1075 = vpop.permute.xlu0 %1074
      %1076 = vrot.lane.b32.xlu0 %v996, 4
      %v1077 = vpop.permute.xlu0 %1076
      %1078 = vrot.lane.b32.xlu0 %v997, 4
      %v1079 = vpop.permute.xlu0 %1078
      %1080 = vrot.lane.b32.xlu0 %v998, 4
      %v1081 = vpop.permute.xlu0 %1080
      %1082 = vrot.lane.b32.xlu0 %v999, 4
      %v1083 = vpop.permute.xlu0 %1082
      %1100 = vrot.lane.b32.xlu0 %v1000, 8
      %v1101 = vpop.permute.xlu0 %1100
      %1102 = vrot.lane.b32.xlu0 %v1001, 8
      %v1103 = vpop.permute.xlu0 %1102
      %1104 = vrot.lane.b32.xlu0 %v1002, 8
      %v1105 = vpop.permute.xlu0 %1104
      %1106 = vrot.lane.b32.xlu0 %v1003, 8
      %v1107 = vpop.permute.xlu0 %1106
      %1108 = vrot.lane.b32.xlu0 %v1004, 8
      %v1109 = vpop.permute.xlu0 %1108
      %1110 = vrot.lane.b32.xlu0 %v1005, 8
      %v1111 = vpop.permute.xlu0 %1110
      %1112 = vrot.lane.b32.xlu0 %v1006, 8
      %v1113 = vpop.permute.xlu0 %1112
      %1114 = vrot.lane.b32.xlu0 %v1007, 8
      %v1115 = vpop.permute.xlu0 %1114
      %1132 = vrot.lane.b32.xlu0 %v1009, 12
      %v1133 = vpop.permute.xlu0 %1132
      %1134 = vrot.lane.b32.xlu0 %v1010, 12
      %v1135 = vpop.permute.xlu0 %1134
      %1136 = vrot.lane.b32.xlu0 %v1011, 12
      %v1137 = vpop.permute.xlu0 %1136
      %1138 = vrot.lane.b32.xlu0 %v1012, 12
      %v1139 = vpop.permute.xlu0 %1138
      %1140 = vrot.lane.b32.xlu0 %v1013, 12
      %v1141 = vpop.permute.xlu0 %1140
      %1142 = vrot.lane.b32.xlu0 %v1014, 12
      %v1143 = vpop.permute.xlu0 %1142
      %1144 = vrot.lane.b32.xlu0 %v1015, 12
      %v1145 = vpop.permute.xlu0 %1144
      %1146 = vrot.lane.b32.xlu0 %v1016, 12
      %v1147 = vpop.permute.xlu0 %1146
      %1164 = vrot.lane.b32.xlu0 %v1018, 16
      %v1165 = vpop.permute.xlu0 %1164
      %1166 = vrot.lane.b32.xlu0 %v1019, 16
      %v1167 = vpop.permute.xlu0 %1166
      %1168 = vrot.lane.b32.xlu0 %v1020, 16
      %v1169 = vpop.permute.xlu0 %1168
      %1170 = vrot.lane.b32.xlu0 %v1021, 16
      %v1171 = vpop.permute.xlu0 %1170
      %1172 = vrot.lane.b32.xlu0 %v1022, 16
      %v1173 = vpop.permute.xlu0 %1172
      %1174 = vrot.lane.b32.xlu0 %v1023, 16
      %v1175 = vpop.permute.xlu0 %1174
      %1176 = vrot.lane.b32.xlu0 %v1024, 16
      %v1177 = vpop.permute.xlu0 %1176
      %1178 = vrot.lane.b32.xlu0 %v1025, 16
      %v1179 = vpop.permute.xlu0 %1178
      %1196 = vrot.lane.b32.xlu0 %v1026, 20
      %v1197 = vpop.permute.xlu0 %1196
      %1198 = vrot.lane.b32.xlu0 %v1027, 20
      %v1199 = vpop.permute.xlu0 %1198
      %1200 = vrot.lane.b32.xlu0 %v1028, 20
      %v1201 = vpop.permute.xlu0 %1200
      %1202 = vrot.lane.b32.xlu0 %v1029, 20
      %v1203 = vpop.permute.xlu0 %1202
      %1204 = vrot.lane.b32.xlu0 %v1030, 20
      %v1205 = vpop.permute.xlu0 %1204
      %1206 = vrot.lane.b32.xlu0 %v1031, 20
      %v1207 = vpop.permute.xlu0 %1206
      %1208 = vrot.lane.b32.xlu0 %v1032, 20
      %v1209 = vpop.permute.xlu0 %1208
      %1210 = vrot.lane.b32.xlu0 %v1033, 20
      %v1211 = vpop.permute.xlu0 %1210
      %1228 = vrot.lane.b32.xlu0 %v1035, 24
      %v1229 = vpop.permute.xlu0 %1228
      %1230 = vrot.lane.b32.xlu0 %v1036, 24
      %v1231 = vpop.permute.xlu0 %1230
      %1232 = vrot.lane.b32.xlu0 %v1037, 24
      %v1233 = vpop.permute.xlu0 %1232
      %1234 = vrot.lane.b32.xlu0 %v1038, 24
      %v1235 = vpop.permute.xlu0 %1234
      %1236 = vrot.lane.b32.xlu0 %v1039, 24
      %v1237 = vpop.permute.xlu0 %1236
      %1238 = vrot.lane.b32.xlu0 %v1040, 24
      %v1239 = vpop.permute.xlu0 %1238
      %1240 = vrot.lane.b32.xlu0 %v1041, 24
      %v1241 = vpop.permute.xlu0 %1240
      %1242 = vrot.lane.b32.xlu0 %v1042, 24
      %v1243 = vpop.permute.xlu0 %1242
      %1260 = vrot.lane.b32.xlu0 %v1044, 28
      %v1261 = vpop.permute.xlu0 %1260
      %1262 = vrot.lane.b32.xlu0 %v1045, 28
      %v1263 = vpop.permute.xlu0 %1262
      %1264 = vrot.lane.b32.xlu0 %v1046, 28
      %v1265 = vpop.permute.xlu0 %1264
      %1266 = vrot.lane.b32.xlu0 %v1047, 28
      %v1267 = vpop.permute.xlu0 %1266
      %1268 = vrot.lane.b32.xlu0 %v1048, 28
      %v1269 = vpop.permute.xlu0 %1268
      %1270 = vrot.lane.b32.xlu0 %v1049, 28
      %v1271 = vpop.permute.xlu0 %1270
      %1272 = vrot.lane.b32.xlu0 %v1050, 28
      %v1273 = vpop.permute.xlu0 %1272
      %1274 = vrot.lane.b32.xlu0 %v1051, 28
      %v1275 = vpop.permute.xlu0 %1274
      %1292 = vrot.lane.b32.xlu0 %v1052, 32
      %v1293 = vpop.permute.xlu0 %1292
      %1294 = vrot.lane.b32.xlu0 %v1053, 32
      %v1295 = vpop.permute.xlu0 %1294
      %1296 = vrot.lane.b32.xlu0 %v1054, 32
      %v1297 = vpop.permute.xlu0 %1296
      %1298 = vrot.lane.b32.xlu0 %v1055, 32
      %v1299 = vpop.permute.xlu0 %1298
      %1300 = vrot.lane.b32.xlu0 %v1056, 32
      %v1301 = vpop.permute.xlu0 %1300
      %1302 = vrot.lane.b32.xlu0 %v1057, 32
      %v1303 = vpop.permute.xlu0 %1302
      %1304 = vrot.lane.b32.xlu0 %v1058, 32
      %v1305 = vpop.permute.xlu0 %1304
      %1306 = vrot.lane.b32.xlu0 %v1059, 32
      %v1307 = vpop.permute.xlu0 %1306
      %vm1316 = vcmask 31744
      %v1317 = vsel %vm1316, %v983, %v1069
      %v1318 = vsel %vm1316, %v984, %v1071
      %v1319 = vsel %vm1316, %v985, %v1073
      %v1320 = vsel %vm1316, %v986, %v1075
      %v1321 = vsel %vm1316, %v987, %v1077
      %v1322 = vsel %vm1316, %v988, %v1079
      %v1323 = vsel %vm1316, %v989, %v1081
      %v1324 = vsel %vm1316, %v990, %v1083
      %vm1325 = vcmask 64512
      %v1326 = vsel %vm1325, %v1317, %v1101
      %v1327 = vsel %vm1325, %v1318, %v1103
      %v1328 = vsel %vm1325, %v1319, %v1105
      %v1329 = vsel %vm1325, %v1320, %v1107
      %v1330 = vsel %vm1325, %v1321, %v1109
      %v1331 = vsel %vm1325, %v1322, %v1111
      %v1332 = vsel %vm1325, %v1323, %v1113
      %v1333 = vsel %vm1325, %v1324, %v1115
      %vm1334 = vcmask 97280
      %v1335 = vsel %vm1334, %v1326, %v1133
      %v1336 = vsel %vm1334, %v1327, %v1135
      %v1337 = vsel %vm1334, %v1328, %v1137
      %v1338 = vsel %vm1334, %v1329, %v1139
      %v1339 = vsel %vm1334, %v1330, %v1141
      %v1340 = vsel %vm1334, %v1331, %v1143
      %v1341 = vsel %vm1334, %v1332, %v1145
      %v1342 = vsel %vm1334, %v1333, %v1147
      %vm1343 = vcmask 130048
      %v1344 = vsel %vm1343, %v1335, %v1165
      %v1345 = vsel %vm1343, %v1336, %v1167
      %v1346 = vsel %vm1343, %v1337, %v1169
      %v1347 = vsel %vm1343, %v1338, %v1171
      %v1348 = vsel %vm1343, %v1339, %v1173
      %v1349 = vsel %vm1343, %v1340, %v1175
      %v1350 = vsel %vm1343, %v1341, %v1177
      %v1351 = vsel %vm1343, %v1342, %v1179
      %vm1352 = vcmask 162816
      %v1353 = vsel %vm1352, %v1344, %v1197
      %v1354 = vsel %vm1352, %v1345, %v1199
      %v1355 = vsel %vm1352, %v1346, %v1201
      %v1356 = vsel %vm1352, %v1347, %v1203
      %v1357 = vsel %vm1352, %v1348, %v1205
      %v1358 = vsel %vm1352, %v1349, %v1207
      %v1359 = vsel %vm1352, %v1350, %v1209
      %v1360 = vsel %vm1352, %v1351, %v1211
      %vm1361 = vcmask 195584
      %v1362 = vsel %vm1361, %v1353, %v1229
      %v1363 = vsel %vm1361, %v1354, %v1231
      %v1364 = vsel %vm1361, %v1355, %v1233
      %v1365 = vsel %vm1361, %v1356, %v1235
      %v1366 = vsel %vm1361, %v1357, %v1237
      %v1367 = vsel %vm1361, %v1358, %v1239
      %v1368 = vsel %vm1361, %v1359, %v1241
      %v1369 = vsel %vm1361, %v1360, %v1243
      %vm1370 = vcmask 228352
      %v1371 = vsel %vm1370, %v1362, %v1261
      %v1372 = vsel %vm1370, %v1363, %v1263
      %v1373 = vsel %vm1370, %v1364, %v1265
      %v1374 = vsel %vm1370, %v1365, %v1267
      %v1375 = vsel %vm1370, %v1366, %v1269
      %v1376 = vsel %vm1370, %v1367, %v1271
      %v1377 = vsel %vm1370, %v1368, %v1273
      %v1378 = vsel %vm1370, %v1369, %v1275
      %vm1379 = vcmask 261120
      %v1380 = vsel %vm1379, %v1371, %v1293
      %v1381 = vsel %vm1379, %v1372, %v1295
      %v1382 = vsel %vm1379, %v1373, %v1297
      %v1383 = vsel %vm1379, %v1374, %v1299
      %v1384 = vsel %vm1379, %v1375, %v1301
      %v1385 = vsel %vm1379, %v1376, %v1303
      %v1386 = vsel %vm1379, %v1377, %v1305
      %v1387 = vsel %vm1379, %v1378, %v1307
      %v1388 = vpack.c.bf16 %v1381, %v1380
      %v1389 = vpack.c.bf16 %v1383, %v1382
      %v1390 = vpack.c.bf16 %v1385, %v1384
      %v1391 = vpack.c.bf16 %v1387, %v1386
      %v1392 = vld [vmem:[%s9] sm:$0xf]
      %vm1393 = vcmask 293888
      %v1395 = vsel %vm1393, %v1392, 0
      %v1398 = vsel %vm1393, %v1388, 0
      %v1401 = vsel %vm1393, %v1389, 0
      %v1404 = vsel %vm1393, %v1390, 0
      %v1407 = vsel %vm1393, %v1391, 0
      %1409 = vmatprep.subr.bf16.mxu0 0
      %1410 = vmatpush1.bf16.xpose.msra.mxu0 %v1398
      %1411 = vmatprep.subr.bf16.mxu0 0
      %1412 = vmatpush1.bf16.xpose.msra.mxu0 %v1401
      %1413 = vmatprep.subr.bf16.mxu0 0
      %1414 = vmatpush1.bf16.xpose.msra.mxu0 %v1404
      %1415 = vmatprep.subr.bf16.mxu0 0
      %1416 = vmatpush1.bf16.xpose.msra.mxu0 %v1407
      %1417 = vmatprep.subr.bf16.mxu0 0
      %1418 = vmatpush1.bf16.xpose.msra.mxu0 0
      %1419 = vmatprep.subr.bf16.mxu0 0
      %1420 = vmatpush1.bf16.xpose.msra.mxu0 0
      %1421 = vmatprep.subr.bf16.mxu0 0
      %1422 = vmatpush1.bf16.xpose.msra.mxu0 0
      %1423 = vmatprep.subr.bf16.mxu0 0
      %1424 = vmatpush1.bf16.xpose.msra.mxu0 0
      %1425 = vmatprep.subr.bf16.mxu0 0
      %1426 = vmatpush1.bf16.xpose.msra.mxu0 0
      %1427 = vmatprep.subr.bf16.mxu0 0
      %1428 = vmatpush1.bf16.xpose.msra.mxu0 0
      %1429 = vmatprep.subr.bf16.mxu0 0
      %1430 = vmatpush1.bf16.xpose.msra.mxu0 0
      %1431 = vmatprep.subr.bf16.mxu0 0
      %1432 = vmatpush1.bf16.xpose.msra.mxu0 0
      %1433 = vmatprep.subr.bf16.mxu0 0
      %1434 = vmatpush1.bf16.xpose.msra.mxu0 0
      %1435 = vmatprep.subr.bf16.mxu0 0
      %1436 = vmatpush1.bf16.xpose.msra.mxu0 0
      %1437 = vmatprep.subr.bf16.mxu0 0
      %1438 = vmatpush1.bf16.xpose.msra.mxu0 0
      %1439 = vmatprep.subr.bf16.mxu0 0
      %1440 = vmatpush1.bf16.xpose.msra.mxu0 0
      %1441 = vmatprep.mubr.bf16.mxu0 0
      %1442 = vmatmul.mubr.bf16.gmra.mrb[0].mxu0 %v1395
      %v1443 = vpop.f32.mrb[0].mxu0
      %v1444 = vadd.f32 0.0, %v1443
      %v1445 = vpop.f32.mrb[0].mxu0
      %v1446 = vpop.f32.mrb[0].mxu0
      %v1447 = vpop.f32.mrb[0].mxu0
      %1448 = vdwg.mxu0
      %v1449 = vld [vmem:[%s11] sm:$0xff]
      %1451 = vset.pattern.permute.xlu0 0
      %1452 = vperm.xlu0 %1451, %v1449
      %v1453 = vpop.permute.xlu0 %1452
      %v1455 = vmul.f32 %v1444, %v1453
      %v1456 = vld [vmem:[%s13] sm:$0xff]
      %1458 = vset.pattern.permute.xlu0 0
      %1459 = vperm.xlu0 %1458, %v1456
      %v1460 = vpop.permute.xlu0 %1459
      %v1462 = vadd.f32 %v1455, %v1460
      %v1463 = vxor.u32 %v1462, 2147483648
      %v1464 = vmul.f32 %v1463, 1.442695
      %v1465 = vpow.pop %v1464
      %v1466 = vadd.f32 %v1465, 1.0
      %v1467 = vrcp.pop %v1466
      %v1468 = vmul.f32 1.0, %v1467
      %v1469 = vmul.f32 %v1462, %v1468
      %vm1470 = vcmask 523264
      %1471 = vst.msk [vmem:[%s948] sm:$0xff] %vm1470, %v1444
      %1472 = vst.msk [vmem:[%s952] sm:$0xff] %vm1470, %v1462
      %1473 = vst.msk [vmem:[%s956] sm:$0xff] %vm1470, %v1469
      %v1474 = vld [vmem:[%s3] sm:$0xf]
      %v1475 = vld [vmem:[%s3 + $0x4] sm:$0xf]
      %v1476 = vld [vmem:[%s3 + $0x8] sm:$0xf]
      %v1477 = vld [vmem:[%s3 + $0xc] sm:$0xf]
      %v1478 = vld [vmem:[%s3 + $0x10] sm:$0x3]
      %v1484 = vunpack.c.l.b16 %v1474
      %v1485 = vunpack.c.l.b16 %v1475
      %v1486 = vunpack.c.l.b16 %v1476
      %v1487 = vunpack.c.l.b16 %v1477
      %v1488 = vunpack.c.l.b16 %v1478
      %v1489 = vpack.c.b16 %v1485, %v1484
      %v1490 = vpack.c.b16 %v1487, %v1486
      %v1491 = vpack.c.b16 %v1488, %v1488
      %vm1494 = vcmask 1041408
      %v1496 = vsel %vm1494, %v1491, 0
      %1498 = vmatprep.subr.bf16.mxu0 0
      %1499 = vmatpush1.bf16.msra.mxu0 %v1489
      %1500 = vmatprep.subr.bf16.mxu0 0
      %1501 = vmatpush1.bf16.msra.mxu0 %v1490
      %1502 = vmatprep.subr.bf16.mxu0 0
      %1503 = vmatpush1.bf16.msra.mxu0 %v1496
      %1504 = vmatprep.subr.bf16.mxu0 0
      %1505 = vmatpush1.bf16.msra.mxu0 0
      %1506 = vmatprep.subr.bf16.mxu0 0
      %1507 = vmatpush1.bf16.msra.mxu0 0
      %1508 = vmatprep.subr.bf16.mxu0 0
      %1509 = vmatpush1.bf16.msra.mxu0 0
      %1510 = vmatprep.subr.bf16.mxu0 0
      %1511 = vmatpush1.bf16.msra.mxu0 0
      %1512 = vmatprep.subr.bf16.mxu0 0
      %1513 = vmatpush1.bf16.msra.mxu0 0
      %1514 = vmatprep.subr.bf16.mxu0 0
      %1515 = vmatpush1.bf16.msra.mxu0 0
      %1516 = vmatprep.subr.bf16.mxu0 0
      %1517 = vmatpush1.bf16.msra.mxu0 0
      %1518 = vmatprep.subr.bf16.mxu0 0
      %1519 = vmatpush1.bf16.msra.mxu0 0
      %1520 = vmatprep.subr.bf16.mxu0 0
      %1521 = vmatpush1.bf16.msra.mxu0 0
      %1522 = vmatprep.subr.bf16.mxu0 0
      %1523 = vmatpush1.bf16.msra.mxu0 0
      %1524 = vmatprep.subr.bf16.mxu0 0
      %1525 = vmatpush1.bf16.msra.mxu0 0
      %1526 = vmatprep.subr.bf16.mxu0 0
      %1527 = vmatpush1.bf16.msra.mxu0 0
      %1528 = vmatprep.subr.bf16.mxu0 0
      %1529 = vmatpush1.bf16.msra.mxu0 0
      %1530 = vmatprep.mubr.bf16.mxu0 0
      %1531 = vmatmul.mubr.bf16.gmra.mrb[0].mxu0 %v1398
      %v1532 = vpop.f32.mrb[0].mxu0
      %v1533 = vadd.f32 0.0, %v1532
      %v1534 = vpop.f32.mrb[0].mxu0
      %v1535 = vpop.f32.mrb[0].mxu0
      %v1536 = vadd.f32 0.0, %v1535
      %v1537 = vpop.f32.mrb[0].mxu0
      %1538 = vmatprep.mubr.bf16.mxu0 0
      %1539 = vmatmul.mubr.bf16.gmra.mrb[0].mxu0 %v1401
      %v1540 = vpop.f32.mrb[0].mxu0
      %v1541 = vadd.f32 0.0, %v1540
      %v1542 = vpop.f32.mrb[0].mxu0
      %v1543 = vpop.f32.mrb[0].mxu0
      %v1544 = vadd.f32 0.0, %v1543
      %v1545 = vpop.f32.mrb[0].mxu0
      %1546 = vmatprep.mubr.bf16.mxu0 0
      %1547 = vmatmul.mubr.bf16.gmra.mrb[0].mxu0 %v1404
      %v1548 = vpop.f32.mrb[0].mxu0
      %v1549 = vadd.f32 0.0, %v1548
      %v1550 = vpop.f32.mrb[0].mxu0
      %v1551 = vpop.f32.mrb[0].mxu0
      %v1552 = vadd.f32 0.0, %v1551
      %v1553 = vpop.f32.mrb[0].mxu0
      %1554 = vmatprep.mubr.bf16.mxu0 0
      %1555 = vmatmul.mubr.bf16.gmra.mrb[0].mxu0 %v1407
      %v1556 = vpop.f32.mrb[0].mxu0
      %v1557 = vadd.f32 0.0, %v1556
      %v1558 = vpop.f32.mrb[0].mxu0
      %v1559 = vpop.f32.mrb[0].mxu0
      %v1560 = vadd.f32 0.0, %v1559
      %v1561 = vpop.f32.mrb[0].mxu0
      %1562 = vdwg.mxu0
      %v1563 = vld [vmem:[%s5] sm:$0x1]
      %v1565 = vlaneseq
      %v1566 = vshrl.u32 %v1565, 7
      %v1567 = vsub.s32 0, %v1566
      %v1568 = vrot.slane %v1563, %v1567
      %v1570 = vmul.f32 %v1533, %v1568
      %v1571 = vmul.f32 %v1536, %v1568
      %v1572 = vmul.f32 %v1541, %v1568
      %v1573 = vmul.f32 %v1544, %v1568
      %v1574 = vmul.f32 %v1549, %v1568
      %v1575 = vmul.f32 %v1552, %v1568
      %v1576 = vmul.f32 %v1557, %v1568
      %v1577 = vmul.f32 %v1560, %v1568
      %v1578 = vld [vmem:[%s7] sm:$0x1]
      %v1580 = vlaneseq
      %v1581 = vshrl.u32 %v1580, 7
      %v1582 = vsub.s32 0, %v1581
      %v1583 = vrot.slane %v1578, %v1582
      %v1585 = vadd.f32 %v1570, %v1583
      %v1586 = vadd.f32 %v1571, %v1583
      %v1587 = vadd.f32 %v1572, %v1583
      %v1588 = vadd.f32 %v1573, %v1583
      %v1589 = vadd.f32 %v1574, %v1583
      %v1590 = vadd.f32 %v1575, %v1583
      %v1591 = vadd.f32 %v1576, %v1583
      %v1592 = vadd.f32 %v1577, %v1583
      %v1593 = vxor.u32 %v1585, 2147483648
      %v1594 = vxor.u32 %v1586, 2147483648
      %v1595 = vxor.u32 %v1587, 2147483648
      %v1596 = vxor.u32 %v1588, 2147483648
      %v1597 = vxor.u32 %v1589, 2147483648
      %v1598 = vxor.u32 %v1590, 2147483648
      %v1599 = vxor.u32 %v1591, 2147483648
      %v1600 = vxor.u32 %v1592, 2147483648
      %v1601 = vmul.f32 %v1593, 1.442695
      %v1602 = vpow.pop %v1601
      %v1603 = vmul.f32 %v1594, 1.442695
      %v1604 = vpow.pop %v1603
      %v1605 = vmul.f32 %v1595, 1.442695
      %v1606 = vpow.pop %v1605
      %v1607 = vmul.f32 %v1596, 1.442695
      %v1608 = vpow.pop %v1607
      %v1609 = vmul.f32 %v1597, 1.442695
      %v1610 = vpow.pop %v1609
      %v1611 = vmul.f32 %v1598, 1.442695
      %v1612 = vpow.pop %v1611
      %v1613 = vmul.f32 %v1599, 1.442695
      %v1614 = vpow.pop %v1613
      %v1615 = vmul.f32 %v1600, 1.442695
      %v1616 = vpow.pop %v1615
      %v1617 = vadd.f32 %v1602, 1.0
      %v1618 = vadd.f32 %v1604, 1.0
      %v1619 = vadd.f32 %v1606, 1.0
      %v1620 = vadd.f32 %v1608, 1.0
      %v1621 = vadd.f32 %v1610, 1.0
      %v1622 = vadd.f32 %v1612, 1.0
      %v1623 = vadd.f32 %v1614, 1.0
      %v1624 = vadd.f32 %v1616, 1.0
      %v1625 = vrcp.pop %v1617
      %v1626 = vmul.f32 1.0, %v1625
      %v1627 = vrcp.pop %v1618
      %v1628 = vmul.f32 1.0, %v1627
      %v1629 = vrcp.pop %v1619
      %v1630 = vmul.f32 1.0, %v1629
      %v1631 = vrcp.pop %v1620
      %v1632 = vmul.f32 1.0, %v1631
      %v1633 = vrcp.pop %v1621
      %v1634 = vmul.f32 1.0, %v1633
      %v1635 = vrcp.pop %v1622
      %v1636 = vmul.f32 1.0, %v1635
      %v1637 = vrcp.pop %v1623
      %v1638 = vmul.f32 1.0, %v1637
      %v1639 = vrcp.pop %v1624
      %v1640 = vmul.f32 1.0, %v1639
      %v1641 = vmul.f32 %v1585, %v1626
      %v1642 = vmul.f32 %v1586, %v1628
      %v1643 = vmul.f32 %v1587, %v1630
      %v1644 = vmul.f32 %v1588, %v1632
      %v1645 = vmul.f32 %v1589, %v1634
      %v1646 = vmul.f32 %v1590, %v1636
      %v1647 = vmul.f32 %v1591, %v1638
      %v1648 = vmul.f32 %v1592, %v1640
      %v1649 = vld [vmem:[%s15] sm:$0x7]
      %v1650 = vld [vmem:[%s15 + $0x4] sm:$0x7]
      %v1651 = vld [vmem:[%s15 + $0x8] sm:$0x7]
      %v1652 = vld [vmem:[%s17] sm:$0x1]
      %v1662 = vrot.slane 0.0, 7
      %v1663 = vrot.slane %v1641, 7
      %v1664 = vrot.slane %v1642, 7
      %v1665 = vrot.slane %v1643, 7
      %v1666 = vrot.slane %v1644, 7
      %v1667 = vrot.slane %v1645, 7
      %v1668 = vrot.slane %v1646, 7
      %v1669 = vrot.slane %v1647, 7
      %v1670 = vrot.slane %v1648, 7
      %vm1680 = vcmask 1040384
      %v1681 = vsel %vm1680, 0.0, %v1662
      %v1682 = vsel %vm1680, 0.0, %v1663
      %v1683 = vsel %vm1680, 0.0, %v1664
      %v1684 = vsel %vm1680, 0.0, %v1665
      %v1685 = vsel %vm1680, 0.0, %v1666
      %v1686 = vsel %vm1680, 0.0, %v1667
      %v1687 = vsel %vm1680, 0.0, %v1668
      %v1688 = vsel %vm1680, 0.0, %v1669
      %v1689 = vsel %vm1680, 0.0, %v1670
      %v1690 = vsel %vm1680, %v1662, 0.0
      %v1691 = vsel %vm1680, %v1663, 0.0
      %v1692 = vsel %vm1680, %v1664, 0.0
      %v1693 = vsel %vm1680, %v1665, 0.0
      %v1694 = vsel %vm1680, %v1666, 0.0
      %v1695 = vsel %vm1680, %v1667, 0.0
      %v1696 = vsel %vm1680, %v1668, 0.0
      %v1697 = vsel %vm1680, %v1669, 0.0
      %v1698 = vsel %vm1680, %v1670, 0.0
      %v1699 = vlaneseq
      %v1700 = vshrl.u32 %v1699, 7
      %v1701 = vsub.s32 0, %v1700
      %v1702 = vrot.slane %v1649, %v1701
      %v1703 = vmul.f32 %v1681, %v1702
      %v1704 = vmul.f32 %v1682, %v1702
      %v1705 = vmul.f32 %v1683, %v1702
      %v1706 = vmul.f32 %v1684, %v1702
      %v1707 = vmul.f32 %v1685, %v1702
      %v1708 = vmul.f32 %v1686, %v1702
      %v1709 = vmul.f32 %v1687, %v1702
      %v1710 = vmul.f32 %v1688, %v1702
      %v1711 = vadd.f32 %v1703, 0.0
      %v1712 = vadd.f32 %v1704, 0.0
      %v1713 = vadd.f32 %v1705, 0.0
      %v1714 = vadd.f32 %v1706, 0.0
      %v1715 = vadd.f32 %v1707, 0.0
      %v1716 = vadd.f32 %v1708, 0.0
      %v1717 = vadd.f32 %v1709, 0.0
      %v1718 = vadd.f32 %v1710, 0.0
      %v1719 = vlaneseq
      %v1720 = vshrl.u32 %v1719, 7
      %v1721 = vsub.s32 1, %v1720
      %v1722 = vrot.slane %v1649, %v1721
      %v1723 = vmul.f32 %v1681, %v1722
      %v1724 = vmul.f32 %v1690, %v1722
      %v1725 = vmul.f32 %v1682, %v1722
      %v1726 = vmul.f32 %v1691, %v1722
      %v1727 = vmul.f32 %v1683, %v1722
      %v1728 = vmul.f32 %v1692, %v1722
      %v1729 = vmul.f32 %v1684, %v1722
      %v1730 = vmul.f32 %v1693, %v1722
      %v1731 = vmul.f32 %v1685, %v1722
      %v1732 = vmul.f32 %v1694, %v1722
      %v1733 = vmul.f32 %v1686, %v1722
      %v1734 = vmul.f32 %v1695, %v1722
      %v1735 = vmul.f32 %v1687, %v1722
      %v1736 = vmul.f32 %v1696, %v1722
      %v1737 = vmul.f32 %v1688, %v1722
      %v1738 = vmul.f32 %v1697, %v1722
      %vm1755 = vcmask 1046528
      %v1756 = vrot.slane %v1723, 1
      %v1757 = vrot.slane %v1724, 1
      %v1758 = vsel %vm1755, %v1756, %v1757
      %v1759 = vrot.slane %v1725, 1
      %v1760 = vrot.slane %v1726, 1
      %v1761 = vsel %vm1755, %v1759, %v1760
      %v1762 = vrot.slane %v1727, 1
      %v1763 = vrot.slane %v1728, 1
      %v1764 = vsel %vm1755, %v1762, %v1763
      %v1765 = vrot.slane %v1729, 1
      %v1766 = vrot.slane %v1730, 1
      %v1767 = vsel %vm1755, %v1765, %v1766
      %v1768 = vrot.slane %v1731, 1
      %v1769 = vrot.slane %v1732, 1
      %v1770 = vsel %vm1755, %v1768, %v1769
      %v1771 = vrot.slane %v1733, 1
      %v1772 = vrot.slane %v1734, 1
      %v1773 = vsel %vm1755, %v1771, %v1772
      %v1774 = vrot.slane %v1735, 1
      %v1775 = vrot.slane %v1736, 1
      %v1776 = vsel %vm1755, %v1774, %v1775
      %v1777 = vrot.slane %v1737, 1
      %v1778 = vrot.slane %v1738, 1
      %v1779 = vsel %vm1755, %v1777, %v1778
      %v1788 = vadd.f32 %v1711, %v1758
      %v1789 = vadd.f32 %v1712, %v1761
      %v1790 = vadd.f32 %v1713, %v1764
      %v1791 = vadd.f32 %v1714, %v1767
      %v1792 = vadd.f32 %v1715, %v1770
      %v1793 = vadd.f32 %v1716, %v1773
      %v1794 = vadd.f32 %v1717, %v1776
      %v1795 = vadd.f32 %v1718, %v1779
      %v1796 = vlaneseq
      %v1797 = vshrl.u32 %v1796, 7
      %v1798 = vsub.s32 2, %v1797
      %v1799 = vrot.slane %v1649, %v1798
      %v1800 = vmul.f32 %v1681, %v1799
      %v1801 = vmul.f32 %v1690, %v1799
      %v1802 = vmul.f32 %v1682, %v1799
      %v1803 = vmul.f32 %v1691, %v1799
      %v1804 = vmul.f32 %v1683, %v1799
      %v1805 = vmul.f32 %v1692, %v1799
      %v1806 = vmul.f32 %v1684, %v1799
      %v1807 = vmul.f32 %v1693, %v1799
      %v1808 = vmul.f32 %v1685, %v1799
      %v1809 = vmul.f32 %v1694, %v1799
      %v1810 = vmul.f32 %v1686, %v1799
      %v1811 = vmul.f32 %v1695, %v1799
      %v1812 = vmul.f32 %v1687, %v1799
      %v1813 = vmul.f32 %v1696, %v1799
      %v1814 = vmul.f32 %v1688, %v1799
      %v1815 = vmul.f32 %v1697, %v1799
      %vm1832 = vcmask 1045504
      %v1833 = vrot.slane %v1800, 2
      %v1834 = vrot.slane %v1801, 2
      %v1835 = vsel %vm1832, %v1833, %v1834
      %v1836 = vrot.slane %v1802, 2
      %v1837 = vrot.slane %v1803, 2
      %v1838 = vsel %vm1832, %v1836, %v1837
      %v1839 = vrot.slane %v1804, 2
      %v1840 = vrot.slane %v1805, 2
      %v1841 = vsel %vm1832, %v1839, %v1840
      %v1842 = vrot.slane %v1806, 2
      %v1843 = vrot.slane %v1807, 2
      %v1844 = vsel %vm1832, %v1842, %v1843
      %v1845 = vrot.slane %v1808, 2
      %v1846 = vrot.slane %v1809, 2
      %v1847 = vsel %vm1832, %v1845, %v1846
      %v1848 = vrot.slane %v1810, 2
      %v1849 = vrot.slane %v1811, 2
      %v1850 = vsel %vm1832, %v1848, %v1849
      %v1851 = vrot.slane %v1812, 2
      %v1852 = vrot.slane %v1813, 2
      %v1853 = vsel %vm1832, %v1851, %v1852
      %v1854 = vrot.slane %v1814, 2
      %v1855 = vrot.slane %v1815, 2
      %v1856 = vsel %vm1832, %v1854, %v1855
      %v1865 = vadd.f32 %v1788, %v1835
      %v1866 = vadd.f32 %v1789, %v1838
      %v1867 = vadd.f32 %v1790, %v1841
      %v1868 = vadd.f32 %v1791, %v1844
      %v1869 = vadd.f32 %v1792, %v1847
      %v1870 = vadd.f32 %v1793, %v1850
      %v1871 = vadd.f32 %v1794, %v1853
      %v1872 = vadd.f32 %v1795, %v1856
      %v1873 = vlaneseq
      %v1874 = vshrl.u32 %v1873, 7
      %v1875 = vsub.s32 0, %v1874
      %v1876 = vrot.slane %v1650, %v1875
      %v1877 = vmul.f32 %v1682, %v1876
      %v1878 = vmul.f32 %v1683, %v1876
      %v1879 = vmul.f32 %v1684, %v1876
      %v1880 = vmul.f32 %v1685, %v1876
      %v1881 = vmul.f32 %v1686, %v1876
      %v1882 = vmul.f32 %v1687, %v1876
      %v1883 = vmul.f32 %v1688, %v1876
      %v1884 = vmul.f32 %v1689, %v1876
      %v1885 = vadd.f32 %v1865, %v1877
      %v1886 = vadd.f32 %v1866, %v1878
      %v1887 = vadd.f32 %v1867, %v1879
      %v1888 = vadd.f32 %v1868, %v1880
      %v1889 = vadd.f32 %v1869, %v1881
      %v1890 = vadd.f32 %v1870, %v1882
      %v1891 = vadd.f32 %v1871, %v1883
      %v1892 = vadd.f32 %v1872, %v1884
      %v1893 = vlaneseq
      %v1894 = vshrl.u32 %v1893, 7
      %v1895 = vsub.s32 1, %v1894
      %v1896 = vrot.slane %v1650, %v1895
      %v1897 = vmul.f32 %v1682, %v1896
      %v1898 = vmul.f32 %v1691, %v1896
      %v1899 = vmul.f32 %v1683, %v1896
      %v1900 = vmul.f32 %v1692, %v1896
      %v1901 = vmul.f32 %v1684, %v1896
      %v1902 = vmul.f32 %v1693, %v1896
      %v1903 = vmul.f32 %v1685, %v1896
      %v1904 = vmul.f32 %v1694, %v1896
      %v1905 = vmul.f32 %v1686, %v1896
      %v1906 = vmul.f32 %v1695, %v1896
      %v1907 = vmul.f32 %v1687, %v1896
      %v1908 = vmul.f32 %v1696, %v1896
      %v1909 = vmul.f32 %v1688, %v1896
      %v1910 = vmul.f32 %v1697, %v1896
      %v1911 = vmul.f32 %v1689, %v1896
      %v1912 = vmul.f32 %v1698, %v1896
      %v1929 = vrot.slane %v1897, 1
      %v1930 = vrot.slane %v1898, 1
      %v1931 = vsel %vm1755, %v1929, %v1930
      %v1932 = vrot.slane %v1899, 1
      %v1933 = vrot.slane %v1900, 1
      %v1934 = vsel %vm1755, %v1932, %v1933
      %v1935 = vrot.slane %v1901, 1
      %v1936 = vrot.slane %v1902, 1
      %v1937 = vsel %vm1755, %v1935, %v1936
      %v1938 = vrot.slane %v1903, 1
      %v1939 = vrot.slane %v1904, 1
      %v1940 = vsel %vm1755, %v1938, %v1939
      %v1941 = vrot.slane %v1905, 1
      %v1942 = vrot.slane %v1906, 1
      %v1943 = vsel %vm1755, %v1941, %v1942
      %v1944 = vrot.slane %v1907, 1
      %v1945 = vrot.slane %v1908, 1
      %v1946 = vsel %vm1755, %v1944, %v1945
      %v1947 = vrot.slane %v1909, 1
      %v1948 = vrot.slane %v1910, 1
      %v1949 = vsel %vm1755, %v1947, %v1948
      %v1950 = vrot.slane %v1911, 1
      %v1951 = vrot.slane %v1912, 1
      %v1952 = vsel %vm1755, %v1950, %v1951
      %v1961 = vadd.f32 %v1885, %v1931
      %v1962 = vadd.f32 %v1886, %v1934
      %v1963 = vadd.f32 %v1887, %v1937
      %v1964 = vadd.f32 %v1888, %v1940
      %v1965 = vadd.f32 %v1889, %v1943
      %v1966 = vadd.f32 %v1890, %v1946
      %v1967 = vadd.f32 %v1891, %v1949
      %v1968 = vadd.f32 %v1892, %v1952
      %v1969 = vlaneseq
      %v1970 = vshrl.u32 %v1969, 7
      %v1971 = vsub.s32 2, %v1970
      %v1972 = vrot.slane %v1650, %v1971
      %v1973 = vmul.f32 %v1682, %v1972
      %v1974 = vmul.f32 %v1691, %v1972
      %v1975 = vmul.f32 %v1683, %v1972
      %v1976 = vmul.f32 %v1692, %v1972
      %v1977 = vmul.f32 %v1684, %v1972
      %v1978 = vmul.f32 %v1693, %v1972
      %v1979 = vmul.f32 %v1685, %v1972
      %v1980 = vmul.f32 %v1694, %v1972
      %v1981 = vmul.f32 %v1686, %v1972
      %v1982 = vmul.f32 %v1695, %v1972
      %v1983 = vmul.f32 %v1687, %v1972
      %v1984 = vmul.f32 %v1696, %v1972
      %v1985 = vmul.f32 %v1688, %v1972
      %v1986 = vmul.f32 %v1697, %v1972
      %v1987 = vmul.f32 %v1689, %v1972
      %v1988 = vmul.f32 %v1698, %v1972
      %v2005 = vrot.slane %v1973, 2
      %v2006 = vrot.slane %v1974, 2
      %v2007 = vsel %vm1832, %v2005, %v2006
      %v2008 = vrot.slane %v1975, 2
      %v2009 = vrot.slane %v1976, 2
      %v2010 = vsel %vm1832, %v2008, %v2009
      %v2011 = vrot.slane %v1977, 2
      %v2012 = vrot.slane %v1978, 2
      %v2013 = vsel %vm1832, %v2011, %v2012
      %v2014 = vrot.slane %v1979, 2
      %v2015 = vrot.slane %v1980, 2
      %v2016 = vsel %vm1832, %v2014, %v2015
      %v2017 = vrot.slane %v1981, 2
      %v2018 = vrot.slane %v1982, 2
      %v2019 = vsel %vm1832, %v2017, %v2018
      %v2020 = vrot.slane %v1983, 2
      %v2021 = vrot.slane %v1984, 2
      %v2022 = vsel %vm1832, %v2020, %v2021
      %v2023 = vrot.slane %v1985, 2
      %v2024 = vrot.slane %v1986, 2
      %v2025 = vsel %vm1832, %v2023, %v2024
      %v2026 = vrot.slane %v1987, 2
      %v2027 = vrot.slane %v1988, 2
      %v2028 = vsel %vm1832, %v2026, %v2027
      %v2037 = vadd.f32 %v1961, %v2007
      %v2038 = vadd.f32 %v1962, %v2010
      %v2039 = vadd.f32 %v1963, %v2013
      %v2040 = vadd.f32 %v1964, %v2016
      %v2041 = vadd.f32 %v1965, %v2019
      %v2042 = vadd.f32 %v1966, %v2022
      %v2043 = vadd.f32 %v1967, %v2025
      %v2044 = vadd.f32 %v1968, %v2028
      %v2045 = vlaneseq
      %v2046 = vshrl.u32 %v2045, 7
      %v2047 = vsub.s32 0, %v2046
      %v2048 = vrot.slane %v1651, %v2047
      %v2049 = vmul.f32 %v1683, %v2048
      %v2050 = vmul.f32 %v1684, %v2048
      %v2051 = vmul.f32 %v1685, %v2048
      %v2052 = vmul.f32 %v1686, %v2048
      %v2053 = vmul.f32 %v1687, %v2048
      %v2054 = vmul.f32 %v1688, %v2048
      %v2055 = vmul.f32 %v1689, %v2048
      %v2056 = vmul.f32 %v1681, %v2048
      %v2057 = vadd.f32 %v2037, %v2049
      %v2058 = vadd.f32 %v2038, %v2050
      %v2059 = vadd.f32 %v2039, %v2051
      %v2060 = vadd.f32 %v2040, %v2052
      %v2061 = vadd.f32 %v2041, %v2053
      %v2062 = vadd.f32 %v2042, %v2054
      %v2063 = vadd.f32 %v2043, %v2055
      %v2064 = vadd.f32 %v2044, %v2056
      %v2065 = vlaneseq
      %v2066 = vshrl.u32 %v2065, 7
      %v2067 = vsub.s32 1, %v2066
      %v2068 = vrot.slane %v1651, %v2067
      %v2069 = vmul.f32 %v1683, %v2068
      %v2070 = vmul.f32 %v1692, %v2068
      %v2071 = vmul.f32 %v1684, %v2068
      %v2072 = vmul.f32 %v1693, %v2068
      %v2073 = vmul.f32 %v1685, %v2068
      %v2074 = vmul.f32 %v1694, %v2068
      %v2075 = vmul.f32 %v1686, %v2068
      %v2076 = vmul.f32 %v1695, %v2068
      %v2077 = vmul.f32 %v1687, %v2068
      %v2078 = vmul.f32 %v1696, %v2068
      %v2079 = vmul.f32 %v1688, %v2068
      %v2080 = vmul.f32 %v1697, %v2068
      %v2081 = vmul.f32 %v1689, %v2068
      %v2082 = vmul.f32 %v1698, %v2068
      %v2083 = vmul.f32 %v1681, %v2068
      %v2084 = vmul.f32 %v1690, %v2068
      %v2101 = vrot.slane %v2069, 1
      %v2102 = vrot.slane %v2070, 1
      %v2103 = vsel %vm1755, %v2101, %v2102
      %v2104 = vrot.slane %v2071, 1
      %v2105 = vrot.slane %v2072, 1
      %v2106 = vsel %vm1755, %v2104, %v2105
      %v2107 = vrot.slane %v2073, 1
      %v2108 = vrot.slane %v2074, 1
      %v2109 = vsel %vm1755, %v2107, %v2108
      %v2110 = vrot.slane %v2075, 1
      %v2111 = vrot.slane %v2076, 1
      %v2112 = vsel %vm1755, %v2110, %v2111
      %v2113 = vrot.slane %v2077, 1
      %v2114 = vrot.slane %v2078, 1
      %v2115 = vsel %vm1755, %v2113, %v2114
      %v2116 = vrot.slane %v2079, 1
      %v2117 = vrot.slane %v2080, 1
      %v2118 = vsel %vm1755, %v2116, %v2117
      %v2119 = vrot.slane %v2081, 1
      %v2120 = vrot.slane %v2082, 1
      %v2121 = vsel %vm1755, %v2119, %v2120
      %v2122 = vrot.slane %v2083, 1
      %v2123 = vrot.slane %v2084, 1
      %v2124 = vsel %vm1755, %v2122, %v2123
      %v2133 = vadd.f32 %v2057, %v2103
      %v2134 = vadd.f32 %v2058, %v2106
      %v2135 = vadd.f32 %v2059, %v2109
      %v2136 = vadd.f32 %v2060, %v2112
      %v2137 = vadd.f32 %v2061, %v2115
      %v2138 = vadd.f32 %v2062, %v2118
      %v2139 = vadd.f32 %v2063, %v2121
      %v2140 = vadd.f32 %v2064, %v2124
      %v2141 = vlaneseq
      %v2142 = vshrl.u32 %v2141, 7
      %v2143 = vsub.s32 2, %v2142
      %v2144 = vrot.slane %v1651, %v2143
      %v2145 = vmul.f32 %v1683, %v2144
      %v2146 = vmul.f32 %v1692, %v2144
      %v2147 = vmul.f32 %v1684, %v2144
      %v2148 = vmul.f32 %v1693, %v2144
      %v2149 = vmul.f32 %v1685, %v2144
      %v2150 = vmul.f32 %v1694, %v2144
      %v2151 = vmul.f32 %v1686, %v2144
      %v2152 = vmul.f32 %v1695, %v2144
      %v2153 = vmul.f32 %v1687, %v2144
      %v2154 = vmul.f32 %v1696, %v2144
      %v2155 = vmul.f32 %v1688, %v2144
      %v2156 = vmul.f32 %v1697, %v2144
      %v2157 = vmul.f32 %v1689, %v2144
      %v2158 = vmul.f32 %v1698, %v2144
      %v2159 = vmul.f32 %v1681, %v2144
      %v2160 = vmul.f32 %v1690, %v2144
      %v2177 = vrot.slane %v2145, 2
      %v2178 = vrot.slane %v2146, 2
      %v2179 = vsel %vm1832, %v2177, %v2178
      %v2180 = vrot.slane %v2147, 2
      %v2181 = vrot.slane %v2148, 2
      %v2182 = vsel %vm1832, %v2180, %v2181
      %v2183 = vrot.slane %v2149, 2
      %v2184 = vrot.slane %v2150, 2
      %v2185 = vsel %vm1832, %v2183, %v2184
      %v2186 = vrot.slane %v2151, 2
      %v2187 = vrot.slane %v2152, 2
      %v2188 = vsel %vm1832, %v2186, %v2187
      %v2189 = vrot.slane %v2153, 2
      %v2190 = vrot.slane %v2154, 2
      %v2191 = vsel %vm1832, %v2189, %v2190
      %v2192 = vrot.slane %v2155, 2
      %v2193 = vrot.slane %v2156, 2
      %v2194 = vsel %vm1832, %v2192, %v2193
      %v2195 = vrot.slane %v2157, 2
      %v2196 = vrot.slane %v2158, 2
      %v2197 = vsel %vm1832, %v2195, %v2196
      %v2198 = vrot.slane %v2159, 2
      %v2199 = vrot.slane %v2160, 2
      %v2200 = vsel %vm1832, %v2198, %v2199
      %v2209 = vadd.f32 %v2133, %v2179
      %v2210 = vadd.f32 %v2134, %v2182
      %v2211 = vadd.f32 %v2135, %v2185
      %v2212 = vadd.f32 %v2136, %v2188
      %v2213 = vadd.f32 %v2137, %v2191
      %v2214 = vadd.f32 %v2138, %v2194
      %v2215 = vadd.f32 %v2139, %v2197
      %v2216 = vadd.f32 %v2140, %v2200
      %v2218 = vlaneseq
      %v2219 = vshrl.u32 %v2218, 7
      %v2220 = vsub.s32 0, %v2219
      %v2221 = vrot.slane %v1652, %v2220
      %v2223 = vadd.f32 %v2209, %v2221
      %v2224 = vadd.f32 %v2210, %v2221
      %v2225 = vadd.f32 %v2211, %v2221
      %v2226 = vadd.f32 %v2212, %v2221
      %v2227 = vadd.f32 %v2213, %v2221
      %v2228 = vadd.f32 %v2214, %v2221
      %v2229 = vadd.f32 %v2215, %v2221
      %v2230 = vadd.f32 %v2216, %v2221
      %v2231 = vxor.u32 %v2223, 2147483648
      %v2232 = vxor.u32 %v2224, 2147483648
      %v2233 = vxor.u32 %v2225, 2147483648
      %v2234 = vxor.u32 %v2226, 2147483648
      %v2235 = vxor.u32 %v2227, 2147483648
      %v2236 = vxor.u32 %v2228, 2147483648
      %v2237 = vxor.u32 %v2229, 2147483648
      %v2238 = vxor.u32 %v2230, 2147483648
      %v2239 = vmul.f32 %v2231, 1.442695
      %v2240 = vpow.pop %v2239
      %v2241 = vmul.f32 %v2232, 1.442695
      %v2242 = vpow.pop %v2241
      %v2243 = vmul.f32 %v2233, 1.442695
      %v2244 = vpow.pop %v2243
      %v2245 = vmul.f32 %v2234, 1.442695
      %v2246 = vpow.pop %v2245
      %v2247 = vmul.f32 %v2235, 1.442695
      %v2248 = vpow.pop %v2247
      %v2249 = vmul.f32 %v2236, 1.442695
      %v2250 = vpow.pop %v2249
      %v2251 = vmul.f32 %v2237, 1.442695
      %v2252 = vpow.pop %v2251
      %v2253 = vmul.f32 %v2238, 1.442695
      %v2254 = vpow.pop %v2253
      %v2255 = vadd.f32 %v2240, 1.0
      %v2256 = vadd.f32 %v2242, 1.0
      %v2257 = vadd.f32 %v2244, 1.0
      %v2258 = vadd.f32 %v2246, 1.0
      %v2259 = vadd.f32 %v2248, 1.0
      %v2260 = vadd.f32 %v2250, 1.0
      %v2261 = vadd.f32 %v2252, 1.0
      %v2262 = vadd.f32 %v2254, 1.0
      %v2263 = vrcp.pop %v2255
      %v2264 = vmul.f32 1.0, %v2263
      %v2265 = vrcp.pop %v2256
      %v2266 = vmul.f32 1.0, %v2265
      %v2267 = vrcp.pop %v2257
      %v2268 = vmul.f32 1.0, %v2267
      %v2269 = vrcp.pop %v2258
      %v2270 = vmul.f32 1.0, %v2269
      %v2271 = vrcp.pop %v2259
      %v2272 = vmul.f32 1.0, %v2271
      %v2273 = vrcp.pop %v2260
      %v2274 = vmul.f32 1.0, %v2273
      %v2275 = vrcp.pop %v2261
      %v2276 = vmul.f32 1.0, %v2275
      %v2277 = vrcp.pop %v2262
      %v2278 = vmul.f32 1.0, %v2277
      %v2279 = vmul.f32 %v2223, %v2264
      %v2280 = vmul.f32 %v2224, %v2266
      %v2281 = vmul.f32 %v2225, %v2268
      %v2282 = vmul.f32 %v2226, %v2270
      %v2283 = vmul.f32 %v2227, %v2272
      %v2284 = vmul.f32 %v2228, %v2274
      %v2285 = vmul.f32 %v2229, %v2276
      %v2286 = vmul.f32 %v2230, %v2278
      %v2287 = vpack.c.bf16 %v2280, %v2279
      %v2288 = vpack.c.bf16 %v2282, %v2281
      %v2289 = vpack.c.bf16 %v2284, %v2283
      %v2290 = vpack.c.bf16 %v2286, %v2285
      %v2291 = vld [vmem:[%s23] sm:$0xf]
      %v2292 = vld [vmem:[%s23 + $0x4] sm:$0xf]
      %v2293 = vld [vmem:[%s25] sm:$0xff]
      %v2294 = vld [vmem:[%s25 + $0x8] sm:$0xff]
      %2296 = vset.pattern.permute.xlu0 0
      %2297 = vperm.xlu0 %2296, %v2293
      %v2298 = vpop.permute.xlu0 %2297
      %2301 = vset.pattern.permute.xlu0 0
      %2302 = vperm.xlu0 %2301, %v2294
      %v2303 = vpop.permute.xlu0 %2302
      %v2307 = vunpack.c.l.b16 %v2291
      %v2308 = vunpack.c.l.b16 %v2292
      %v2309 = vpack.c.b16 %v2308, %v2307
      %v2311 = vsel %vm1325, %v2309, 0
      %v2314 = vsel %vm1325, %v2287, 0
      %v2317 = vsel %vm1325, %v2288, 0
      %v2320 = vsel %vm1325, %v2289, 0
      %v2323 = vsel %vm1325, %v2290, 0
      %2325 = vmatprep.subr.bf16.mxu0 0
      %2326 = vmatpush1.bf16.xpose.msra.mxu0 %v2314
      %2327 = vmatprep.subr.bf16.mxu0 0
      %2328 = vmatpush1.bf16.xpose.msra.mxu0 %v2317
      %2329 = vmatprep.subr.bf16.mxu0 0
      %2330 = vmatpush1.bf16.xpose.msra.mxu0 %v2320
      %2331 = vmatprep.subr.bf16.mxu0 0
      %2332 = vmatpush1.bf16.xpose.msra.mxu0 %v2323
      %2333 = vmatprep.subr.bf16.mxu0 0
      %2334 = vmatpush1.bf16.xpose.msra.mxu0 0
      %2335 = vmatprep.subr.bf16.mxu0 0
      %2336 = vmatpush1.bf16.xpose.msra.mxu0 0
      %2337 = vmatprep.subr.bf16.mxu0 0
      %2338 = vmatpush1.bf16.xpose.msra.mxu0 0
      %2339 = vmatprep.subr.bf16.mxu0 0
      %2340 = vmatpush1.bf16.xpose.msra.mxu0 0
      %2341 = vmatprep.subr.bf16.mxu0 0
      %2342 = vmatpush1.bf16.xpose.msra.mxu0 0
      %2343 = vmatprep.subr.bf16.mxu0 0
      %2344 = vmatpush1.bf16.xpose.msra.mxu0 0
      %2345 = vmatprep.subr.bf16.mxu0 0
      %2346 = vmatpush1.bf16.xpose.msra.mxu0 0
      %2347 = vmatprep.subr.bf16.mxu0 0
      %2348 = vmatpush1.bf16.xpose.msra.mxu0 0
      %2349 = vmatprep.subr.bf16.mxu0 0
      %2350 = vmatpush1.bf16.xpose.msra.mxu0 0
      %2351 = vmatprep.subr.bf16.mxu0 0
      %2352 = vmatpush1.bf16.xpose.msra.mxu0 0
      %2353 = vmatprep.subr.bf16.mxu0 0
      %2354 = vmatpush1.bf16.xpose.msra.mxu0 0
      %2355 = vmatprep.subr.bf16.mxu0 0
      %2356 = vmatpush1.bf16.xpose.msra.mxu0 0
      %2357 = vmatprep.mubr.bf16.mxu0 0
      %2358 = vmatmul.mubr.bf16.gmra.mrb[0].mxu0 %v2311
      %v2359 = vpop.f32.mrb[0].mxu0
      %v2360 = vadd.f32 %v2298, %v2359
      %v2361 = vpop.f32.mrb[0].mxu0
      %v2362 = vpop.f32.mrb[0].mxu0
      %v2363 = vadd.f32 %v2303, %v2362
      %v2364 = vpop.f32.mrb[0].mxu0
      %2365 = vdwg.mxu0
      %2366 = vst.msk [vmem:[%s961] sm:$0xff] %vm1470, %v2360
      %2367 = vst.msk [vmem:[%s961 + $0x8] sm:$0xff] %vm1470, %v2363
      %v2368 = vld [vmem:[%s19] sm:$0xf]
      %v2369 = vld [vmem:[%s21] sm:$0x1]
      %v2371 = vlaneseq
      %v2372 = vshrl.u32 %v2371, 7
      %v2373 = vsub.s32 0, %v2372
      %v2374 = vrot.slane %v2369, %v2373
      %vm2376 = vcmask 1043456
      %v2378 = vsel %vm2376, %v2368, 0
      %2380 = vmatprep.subr.bf16.mxu0 0
      %2381 = vmatpush1.bf16.msra.mxu0 %v2378
      %2382 = vmatprep.subr.bf16.mxu0 0
      %2383 = vmatpush1.bf16.msra.mxu0 0
      %2384 = vmatprep.subr.bf16.mxu0 0
      %2385 = vmatpush1.bf16.msra.mxu0 0
      %2386 = vmatprep.subr.bf16.mxu0 0
      %2387 = vmatpush1.bf16.msra.mxu0 0
      %2388 = vmatprep.subr.bf16.mxu0 0
      %2389 = vmatpush1.bf16.msra.mxu0 0
      %2390 = vmatprep.subr.bf16.mxu0 0
      %2391 = vmatpush1.bf16.msra.mxu0 0
      %2392 = vmatprep.subr.bf16.mxu0 0
      %2393 = vmatpush1.bf16.msra.mxu0 0
      %2394 = vmatprep.subr.bf16.mxu0 0
      %2395 = vmatpush1.bf16.msra.mxu0 0
      %2396 = vmatprep.subr.bf16.mxu0 0
      %2397 = vmatpush1.bf16.msra.mxu0 0
      %2398 = vmatprep.subr.bf16.mxu0 0
      %2399 = vmatpush1.bf16.msra.mxu0 0
      %2400 = vmatprep.subr.bf16.mxu0 0
      %2401 = vmatpush1.bf16.msra.mxu0 0
      %2402 = vmatprep.subr.bf16.mxu0 0
      %2403 = vmatpush1.bf16.msra.mxu0 0
      %2404 = vmatprep.subr.bf16.mxu0 0
      %2405 = vmatpush1.bf16.msra.mxu0 0
      %2406 = vmatprep.subr.bf16.mxu0 0
      %2407 = vmatpush1.bf16.msra.mxu0 0
      %2408 = vmatprep.subr.bf16.mxu0 0
      %2409 = vmatpush1.bf16.msra.mxu0 0
      %2410 = vmatprep.subr.bf16.mxu0 0
      %2411 = vmatpush1.bf16.msra.mxu0 0
      %2412 = vmatprep.mubr.bf16.mxu0 0
      %2413 = vmatmul.mubr.bf16.gmra.mrb[0].mxu0 %v2314
      %v2414 = vpop.f32.mrb[0].mxu0
      %v2415 = vadd.f32 %v2374, %v2414
      %v2416 = vpop.f32.mrb[0].mxu0
      %v2417 = vpop.f32.mrb[0].mxu0
      %v2418 = vadd.f32 %v2374, %v2417
      %v2419 = vpop.f32.mrb[0].mxu0
      %2420 = vmatprep.mubr.bf16.mxu0 0
      %2421 = vmatmul.mubr.bf16.gmra.mrb[0].mxu0 %v2317
      %v2422 = vpop.f32.mrb[0].mxu0
      %v2423 = vadd.f32 %v2374, %v2422
      %v2424 = vpop.f32.mrb[0].mxu0
      %v2425 = vpop.f32.mrb[0].mxu0
      %v2426 = vadd.f32 %v2374, %v2425
      %v2427 = vpop.f32.mrb[0].mxu0
      %2428 = vmatprep.mubr.bf16.mxu0 0
      %2429 = vmatmul.mubr.bf16.gmra.mrb[0].mxu0 %v2320
      %v2430 = vpop.f32.mrb[0].mxu0
      %v2431 = vadd.f32 %v2374, %v2430
      %v2432 = vpop.f32.mrb[0].mxu0
      %v2433 = vpop.f32.mrb[0].mxu0
      %v2434 = vadd.f32 %v2374, %v2433
      %v2435 = vpop.f32.mrb[0].mxu0
      %2436 = vmatprep.mubr.bf16.mxu0 0
      %2437 = vmatmul.mubr.bf16.gmra.mrb[0].mxu0 %v2323
      %v2438 = vpop.f32.mrb[0].mxu0
      %v2439 = vadd.f32 %v2374, %v2438
      %v2440 = vpop.f32.mrb[0].mxu0
      %v2441 = vpop.f32.mrb[0].mxu0
      %v2442 = vadd.f32 %v2374, %v2441
      %v2443 = vpop.f32.mrb[0].mxu0
      %2444 = vdwg.mxu0
      %v2445 = vld [vmem:[%s27] sm:$0x7]
      %v2446 = vld [vmem:[%s27 + $0x4] sm:$0x7]
      %v2447 = vld [vmem:[%s27 + $0x8] sm:$0x7]
      %v2448 = vld [vmem:[%s29] sm:$0x1]
      %v2457 = vrot.slane %v2415, 7
      %v2458 = vrot.slane %v2418, 7
      %v2459 = vrot.slane %v2423, 7
      %v2460 = vrot.slane %v2426, 7
      %v2461 = vrot.slane %v2431, 7
      %v2462 = vrot.slane %v2434, 7
      %v2463 = vrot.slane %v2439, 7
      %v2464 = vrot.slane %v2442, 7
      %v2473 = vsel %vm1680, 0.0, %v2457
      %v2474 = vsel %vm1680, 0.0, %v2458
      %v2475 = vsel %vm1680, 0.0, %v2459
      %v2476 = vsel %vm1680, 0.0, %v2460
      %v2477 = vsel %vm1680, 0.0, %v2461
      %v2478 = vsel %vm1680, 0.0, %v2462
      %v2479 = vsel %vm1680, 0.0, %v2463
      %v2480 = vsel %vm1680, 0.0, %v2464
      %v2481 = vsel %vm1680, %v2457, 0.0
      %v2482 = vsel %vm1680, %v2458, 0.0
      %v2483 = vsel %vm1680, %v2459, 0.0
      %v2484 = vsel %vm1680, %v2460, 0.0
      %v2485 = vsel %vm1680, %v2461, 0.0
      %v2486 = vsel %vm1680, %v2462, 0.0
      %v2487 = vsel %vm1680, %v2463, 0.0
      %v2488 = vsel %vm1680, %v2464, 0.0
      %v2489 = vlaneseq
      %v2490 = vshrl.u32 %v2489, 7
      %v2491 = vsub.s32 0, %v2490
      %v2492 = vrot.slane %v2445, %v2491
      %v2493 = vmul.f32 %v1681, %v2492
      %v2494 = vmul.f32 %v2473, %v2492
      %v2495 = vmul.f32 %v2474, %v2492
      %v2496 = vmul.f32 %v2475, %v2492
      %v2497 = vmul.f32 %v2476, %v2492
      %v2498 = vmul.f32 %v2477, %v2492
      %v2499 = vmul.f32 %v2478, %v2492
      %v2500 = vmul.f32 %v2479, %v2492
      %v2501 = vadd.f32 %v2493, 0.0
      %v2502 = vadd.f32 %v2494, 0.0
      %v2503 = vadd.f32 %v2495, 0.0
      %v2504 = vadd.f32 %v2496, 0.0
      %v2505 = vadd.f32 %v2497, 0.0
      %v2506 = vadd.f32 %v2498, 0.0
      %v2507 = vadd.f32 %v2499, 0.0
      %v2508 = vadd.f32 %v2500, 0.0
      %v2509 = vlaneseq
      %v2510 = vshrl.u32 %v2509, 7
      %v2511 = vsub.s32 1, %v2510
      %v2512 = vrot.slane %v2445, %v2511
      %v2513 = vmul.f32 %v1681, %v2512
      %v2514 = vmul.f32 %v1690, %v2512
      %v2515 = vmul.f32 %v2473, %v2512
      %v2516 = vmul.f32 %v2481, %v2512
      %v2517 = vmul.f32 %v2474, %v2512
      %v2518 = vmul.f32 %v2482, %v2512
      %v2519 = vmul.f32 %v2475, %v2512
      %v2520 = vmul.f32 %v2483, %v2512
      %v2521 = vmul.f32 %v2476, %v2512
      %v2522 = vmul.f32 %v2484, %v2512
      %v2523 = vmul.f32 %v2477, %v2512
      %v2524 = vmul.f32 %v2485, %v2512
      %v2525 = vmul.f32 %v2478, %v2512
      %v2526 = vmul.f32 %v2486, %v2512
      %v2527 = vmul.f32 %v2479, %v2512
      %v2528 = vmul.f32 %v2487, %v2512
      %v2545 = vrot.slane %v2513, 1
      %v2546 = vrot.slane %v2514, 1
      %v2547 = vsel %vm1755, %v2545, %v2546
      %v2548 = vrot.slane %v2515, 1
      %v2549 = vrot.slane %v2516, 1
      %v2550 = vsel %vm1755, %v2548, %v2549
      %v2551 = vrot.slane %v2517, 1
      %v2552 = vrot.slane %v2518, 1
      %v2553 = vsel %vm1755, %v2551, %v2552
      %v2554 = vrot.slane %v2519, 1
      %v2555 = vrot.slane %v2520, 1
      %v2556 = vsel %vm1755, %v2554, %v2555
      %v2557 = vrot.slane %v2521, 1
      %v2558 = vrot.slane %v2522, 1
      %v2559 = vsel %vm1755, %v2557, %v2558
      %v2560 = vrot.slane %v2523, 1
      %v2561 = vrot.slane %v2524, 1
      %v2562 = vsel %vm1755, %v2560, %v2561
      %v2563 = vrot.slane %v2525, 1
      %v2564 = vrot.slane %v2526, 1
      %v2565 = vsel %vm1755, %v2563, %v2564
      %v2566 = vrot.slane %v2527, 1
      %v2567 = vrot.slane %v2528, 1
      %v2568 = vsel %vm1755, %v2566, %v2567
      %v2577 = vadd.f32 %v2501, %v2547
      %v2578 = vadd.f32 %v2502, %v2550
      %v2579 = vadd.f32 %v2503, %v2553
      %v2580 = vadd.f32 %v2504, %v2556
      %v2581 = vadd.f32 %v2505, %v2559
      %v2582 = vadd.f32 %v2506, %v2562
      %v2583 = vadd.f32 %v2507, %v2565
      %v2584 = vadd.f32 %v2508, %v2568
      %v2585 = vlaneseq
      %v2586 = vshrl.u32 %v2585, 7
      %v2587 = vsub.s32 2, %v2586
      %v2588 = vrot.slane %v2445, %v2587
      %v2589 = vmul.f32 %v1681, %v2588
      %v2590 = vmul.f32 %v1690, %v2588
      %v2591 = vmul.f32 %v2473, %v2588
      %v2592 = vmul.f32 %v2481, %v2588
      %v2593 = vmul.f32 %v2474, %v2588
      %v2594 = vmul.f32 %v2482, %v2588
      %v2595 = vmul.f32 %v2475, %v2588
      %v2596 = vmul.f32 %v2483, %v2588
      %v2597 = vmul.f32 %v2476, %v2588
      %v2598 = vmul.f32 %v2484, %v2588
      %v2599 = vmul.f32 %v2477, %v2588
      %v2600 = vmul.f32 %v2485, %v2588
      %v2601 = vmul.f32 %v2478, %v2588
      %v2602 = vmul.f32 %v2486, %v2588
      %v2603 = vmul.f32 %v2479, %v2588
      %v2604 = vmul.f32 %v2487, %v2588
      %v2621 = vrot.slane %v2589, 2
      %v2622 = vrot.slane %v2590, 2
      %v2623 = vsel %vm1832, %v2621, %v2622
      %v2624 = vrot.slane %v2591, 2
      %v2625 = vrot.slane %v2592, 2
      %v2626 = vsel %vm1832, %v2624, %v2625
      %v2627 = vrot.slane %v2593, 2
      %v2628 = vrot.slane %v2594, 2
      %v2629 = vsel %vm1832, %v2627, %v2628
      %v2630 = vrot.slane %v2595, 2
      %v2631 = vrot.slane %v2596, 2
      %v2632 = vsel %vm1832, %v2630, %v2631
      %v2633 = vrot.slane %v2597, 2
      %v2634 = vrot.slane %v2598, 2
      %v2635 = vsel %vm1832, %v2633, %v2634
      %v2636 = vrot.slane %v2599, 2
      %v2637 = vrot.slane %v2600, 2
      %v2638 = vsel %vm1832, %v2636, %v2637
      %v2639 = vrot.slane %v2601, 2
      %v2640 = vrot.slane %v2602, 2
      %v2641 = vsel %vm1832, %v2639, %v2640
      %v2642 = vrot.slane %v2603, 2
      %v2643 = vrot.slane %v2604, 2
      %v2644 = vsel %vm1832, %v2642, %v2643
      %v2653 = vadd.f32 %v2577, %v2623
      %v2654 = vadd.f32 %v2578, %v2626
      %v2655 = vadd.f32 %v2579, %v2629
      %v2656 = vadd.f32 %v2580, %v2632
      %v2657 = vadd.f32 %v2581, %v2635
      %v2658 = vadd.f32 %v2582, %v2638
      %v2659 = vadd.f32 %v2583, %v2641
      %v2660 = vadd.f32 %v2584, %v2644
      %v2661 = vlaneseq
      %v2662 = vshrl.u32 %v2661, 7
      %v2663 = vsub.s32 0, %v2662
      %v2664 = vrot.slane %v2446, %v2663
      %v2665 = vmul.f32 %v2473, %v2664
      %v2666 = vmul.f32 %v2474, %v2664
      %v2667 = vmul.f32 %v2475, %v2664
      %v2668 = vmul.f32 %v2476, %v2664
      %v2669 = vmul.f32 %v2477, %v2664
      %v2670 = vmul.f32 %v2478, %v2664
      %v2671 = vmul.f32 %v2479, %v2664
      %v2672 = vmul.f32 %v2480, %v2664
      %v2673 = vadd.f32 %v2653, %v2665
      %v2674 = vadd.f32 %v2654, %v2666
      %v2675 = vadd.f32 %v2655, %v2667
      %v2676 = vadd.f32 %v2656, %v2668
      %v2677 = vadd.f32 %v2657, %v2669
      %v2678 = vadd.f32 %v2658, %v2670
      %v2679 = vadd.f32 %v2659, %v2671
      %v2680 = vadd.f32 %v2660, %v2672
      %v2681 = vlaneseq
      %v2682 = vshrl.u32 %v2681, 7
      %v2683 = vsub.s32 1, %v2682
      %v2684 = vrot.slane %v2446, %v2683
      %v2685 = vmul.f32 %v2473, %v2684
      %v2686 = vmul.f32 %v2481, %v2684
      %v2687 = vmul.f32 %v2474, %v2684
      %v2688 = vmul.f32 %v2482, %v2684
      %v2689 = vmul.f32 %v2475, %v2684
      %v2690 = vmul.f32 %v2483, %v2684
      %v2691 = vmul.f32 %v2476, %v2684
      %v2692 = vmul.f32 %v2484, %v2684
      %v2693 = vmul.f32 %v2477, %v2684
      %v2694 = vmul.f32 %v2485, %v2684
      %v2695 = vmul.f32 %v2478, %v2684
      %v2696 = vmul.f32 %v2486, %v2684
      %v2697 = vmul.f32 %v2479, %v2684
      %v2698 = vmul.f32 %v2487, %v2684
      %v2699 = vmul.f32 %v2480, %v2684
      %v2700 = vmul.f32 %v2488, %v2684
      %v2717 = vrot.slane %v2685, 1
      %v2718 = vrot.slane %v2686, 1
      %v2719 = vsel %vm1755, %v2717, %v2718
      %v2720 = vrot.slane %v2687, 1
      %v2721 = vrot.slane %v2688, 1
      %v2722 = vsel %vm1755, %v2720, %v2721
      %v2723 = vrot.slane %v2689, 1
      %v2724 = vrot.slane %v2690, 1
      %v2725 = vsel %vm1755, %v2723, %v2724
      %v2726 = vrot.slane %v2691, 1
      %v2727 = vrot.slane %v2692, 1
      %v2728 = vsel %vm1755, %v2726, %v2727
      %v2729 = vrot.slane %v2693, 1
      %v2730 = vrot.slane %v2694, 1
      %v2731 = vsel %vm1755, %v2729, %v2730
      %v2732 = vrot.slane %v2695, 1
      %v2733 = vrot.slane %v2696, 1
      %v2734 = vsel %vm1755, %v2732, %v2733
      %v2735 = vrot.slane %v2697, 1
      %v2736 = vrot.slane %v2698, 1
      %v2737 = vsel %vm1755, %v2735, %v2736
      %v2738 = vrot.slane %v2699, 1
      %v2739 = vrot.slane %v2700, 1
      %v2740 = vsel %vm1755, %v2738, %v2739
      %v2749 = vadd.f32 %v2673, %v2719
      %v2750 = vadd.f32 %v2674, %v2722
      %v2751 = vadd.f32 %v2675, %v2725
      %v2752 = vadd.f32 %v2676, %v2728
      %v2753 = vadd.f32 %v2677, %v2731
      %v2754 = vadd.f32 %v2678, %v2734
      %v2755 = vadd.f32 %v2679, %v2737
      %v2756 = vadd.f32 %v2680, %v2740
      %v2757 = vlaneseq
      %v2758 = vshrl.u32 %v2757, 7
      %v2759 = vsub.s32 2, %v2758
      %v2760 = vrot.slane %v2446, %v2759
      %v2761 = vmul.f32 %v2473, %v2760
      %v2762 = vmul.f32 %v2481, %v2760
      %v2763 = vmul.f32 %v2474, %v2760
      %v2764 = vmul.f32 %v2482, %v2760
      %v2765 = vmul.f32 %v2475, %v2760
      %v2766 = vmul.f32 %v2483, %v2760
      %v2767 = vmul.f32 %v2476, %v2760
      %v2768 = vmul.f32 %v2484, %v2760
      %v2769 = vmul.f32 %v2477, %v2760
      %v2770 = vmul.f32 %v2485, %v2760
      %v2771 = vmul.f32 %v2478, %v2760
      %v2772 = vmul.f32 %v2486, %v2760
      %v2773 = vmul.f32 %v2479, %v2760
      %v2774 = vmul.f32 %v2487, %v2760
      %v2775 = vmul.f32 %v2480, %v2760
      %v2776 = vmul.f32 %v2488, %v2760
      %v2793 = vrot.slane %v2761, 2
      %v2794 = vrot.slane %v2762, 2
      %v2795 = vsel %vm1832, %v2793, %v2794
      %v2796 = vrot.slane %v2763, 2
      %v2797 = vrot.slane %v2764, 2
      %v2798 = vsel %vm1832, %v2796, %v2797
      %v2799 = vrot.slane %v2765, 2
      %v2800 = vrot.slane %v2766, 2
      %v2801 = vsel %vm1832, %v2799, %v2800
      %v2802 = vrot.slane %v2767, 2
      %v2803 = vrot.slane %v2768, 2
      %v2804 = vsel %vm1832, %v2802, %v2803
      %v2805 = vrot.slane %v2769, 2
      %v2806 = vrot.slane %v2770, 2
      %v2807 = vsel %vm1832, %v2805, %v2806
      %v2808 = vrot.slane %v2771, 2
      %v2809 = vrot.slane %v2772, 2
      %v2810 = vsel %vm1832, %v2808, %v2809
      %v2811 = vrot.slane %v2773, 2
      %v2812 = vrot.slane %v2774, 2
      %v2813 = vsel %vm1832, %v2811, %v2812
      %v2814 = vrot.slane %v2775, 2
      %v2815 = vrot.slane %v2776, 2
      %v2816 = vsel %vm1832, %v2814, %v2815
      %v2825 = vadd.f32 %v2749, %v2795
      %v2826 = vadd.f32 %v2750, %v2798
      %v2827 = vadd.f32 %v2751, %v2801
      %v2828 = vadd.f32 %v2752, %v2804
      %v2829 = vadd.f32 %v2753, %v2807
      %v2830 = vadd.f32 %v2754, %v2810
      %v2831 = vadd.f32 %v2755, %v2813
      %v2832 = vadd.f32 %v2756, %v2816
      %v2833 = vlaneseq
      %v2834 = vshrl.u32 %v2833, 7
      %v2835 = vsub.s32 0, %v2834
      %v2836 = vrot.slane %v2447, %v2835
      %v2837 = vmul.f32 %v2474, %v2836
      %v2838 = vmul.f32 %v2475, %v2836
      %v2839 = vmul.f32 %v2476, %v2836
      %v2840 = vmul.f32 %v2477, %v2836
      %v2841 = vmul.f32 %v2478, %v2836
      %v2842 = vmul.f32 %v2479, %v2836
      %v2843 = vmul.f32 %v2480, %v2836
      %v2844 = vmul.f32 %v1681, %v2836
      %v2845 = vadd.f32 %v2825, %v2837
      %v2846 = vadd.f32 %v2826, %v2838
      %v2847 = vadd.f32 %v2827, %v2839
      %v2848 = vadd.f32 %v2828, %v2840
      %v2849 = vadd.f32 %v2829, %v2841
      %v2850 = vadd.f32 %v2830, %v2842
      %v2851 = vadd.f32 %v2831, %v2843
      %v2852 = vadd.f32 %v2832, %v2844
      %v2853 = vlaneseq
      %v2854 = vshrl.u32 %v2853, 7
      %v2855 = vsub.s32 1, %v2854
      %v2856 = vrot.slane %v2447, %v2855
      %v2857 = vmul.f32 %v2474, %v2856
      %v2858 = vmul.f32 %v2482, %v2856
      %v2859 = vmul.f32 %v2475, %v2856
      %v2860 = vmul.f32 %v2483, %v2856
      %v2861 = vmul.f32 %v2476, %v2856
      %v2862 = vmul.f32 %v2484, %v2856
      %v2863 = vmul.f32 %v2477, %v2856
      %v2864 = vmul.f32 %v2485, %v2856
      %v2865 = vmul.f32 %v2478, %v2856
      %v2866 = vmul.f32 %v2486, %v2856
      %v2867 = vmul.f32 %v2479, %v2856
      %v2868 = vmul.f32 %v2487, %v2856
      %v2869 = vmul.f32 %v2480, %v2856
      %v2870 = vmul.f32 %v2488, %v2856
      %v2871 = vmul.f32 %v1681, %v2856
      %v2872 = vmul.f32 %v1690, %v2856
      %v2889 = vrot.slane %v2857, 1
      %v2890 = vrot.slane %v2858, 1
      %v2891 = vsel %vm1755, %v2889, %v2890
      %v2892 = vrot.slane %v2859, 1
      %v2893 = vrot.slane %v2860, 1
      %v2894 = vsel %vm1755, %v2892, %v2893
      %v2895 = vrot.slane %v2861, 1
      %v2896 = vrot.slane %v2862, 1
      %v2897 = vsel %vm1755, %v2895, %v2896
      %v2898 = vrot.slane %v2863, 1
      %v2899 = vrot.slane %v2864, 1
      %v2900 = vsel %vm1755, %v2898, %v2899
      %v2901 = vrot.slane %v2865, 1
      %v2902 = vrot.slane %v2866, 1
      %v2903 = vsel %vm1755, %v2901, %v2902
      %v2904 = vrot.slane %v2867, 1
      %v2905 = vrot.slane %v2868, 1
      %v2906 = vsel %vm1755, %v2904, %v2905
      %v2907 = vrot.slane %v2869, 1
      %v2908 = vrot.slane %v2870, 1
      %v2909 = vsel %vm1755, %v2907, %v2908
      %v2910 = vrot.slane %v2871, 1
      %v2911 = vrot.slane %v2872, 1
      %v2912 = vsel %vm1755, %v2910, %v2911
      %v2921 = vadd.f32 %v2845, %v2891
      %v2922 = vadd.f32 %v2846, %v2894
      %v2923 = vadd.f32 %v2847, %v2897
      %v2924 = vadd.f32 %v2848, %v2900
      %v2925 = vadd.f32 %v2849, %v2903
      %v2926 = vadd.f32 %v2850, %v2906
      %v2927 = vadd.f32 %v2851, %v2909
      %v2928 = vadd.f32 %v2852, %v2912
      %v2929 = vlaneseq
      %v2930 = vshrl.u32 %v2929, 7
      %v2931 = vsub.s32 2, %v2930
      %v2932 = vrot.slane %v2447, %v2931
      %v2933 = vmul.f32 %v2474, %v2932
      %v2934 = vmul.f32 %v2482, %v2932
      %v2935 = vmul.f32 %v2475, %v2932
      %v2936 = vmul.f32 %v2483, %v2932
      %v2937 = vmul.f32 %v2476, %v2932
      %v2938 = vmul.f32 %v2484, %v2932
      %v2939 = vmul.f32 %v2477, %v2932
      %v2940 = vmul.f32 %v2485, %v2932
      %v2941 = vmul.f32 %v2478, %v2932
      %v2942 = vmul.f32 %v2486, %v2932
      %v2943 = vmul.f32 %v2479, %v2932
      %v2944 = vmul.f32 %v2487, %v2932
      %v2945 = vmul.f32 %v2480, %v2932
      %v2946 = vmul.f32 %v2488, %v2932
      %v2947 = vmul.f32 %v1681, %v2932
      %v2948 = vmul.f32 %v1690, %v2932
      %v2965 = vrot.slane %v2933, 2
      %v2966 = vrot.slane %v2934, 2
      %v2967 = vsel %vm1832, %v2965, %v2966
      %v2968 = vrot.slane %v2935, 2
      %v2969 = vrot.slane %v2936, 2
      %v2970 = vsel %vm1832, %v2968, %v2969
      %v2971 = vrot.slane %v2937, 2
      %v2972 = vrot.slane %v2938, 2
      %v2973 = vsel %vm1832, %v2971, %v2972
      %v2974 = vrot.slane %v2939, 2
      %v2975 = vrot.slane %v2940, 2
      %v2976 = vsel %vm1832, %v2974, %v2975
      %v2977 = vrot.slane %v2941, 2
      %v2978 = vrot.slane %v2942, 2
      %v2979 = vsel %vm1832, %v2977, %v2978
      %v2980 = vrot.slane %v2943, 2
      %v2981 = vrot.slane %v2944, 2
      %v2982 = vsel %vm1832, %v2980, %v2981
      %v2983 = vrot.slane %v2945, 2
      %v2984 = vrot.slane %v2946, 2
      %v2985 = vsel %vm1832, %v2983, %v2984
      %v2986 = vrot.slane %v2947, 2
      %v2987 = vrot.slane %v2948, 2
      %v2988 = vsel %vm1832, %v2986, %v2987
      %v2997 = vadd.f32 %v2921, %v2967
      %v2998 = vadd.f32 %v2922, %v2970
      %v2999 = vadd.f32 %v2923, %v2973
      %v3000 = vadd.f32 %v2924, %v2976
      %v3001 = vadd.f32 %v2925, %v2979
      %v3002 = vadd.f32 %v2926, %v2982
      %v3003 = vadd.f32 %v2927, %v2985
      %v3004 = vadd.f32 %v2928, %v2988
      %v3006 = vlaneseq
      %v3007 = vshrl.u32 %v3006, 7
      %v3008 = vsub.s32 0, %v3007
      %v3009 = vrot.slane %v2448, %v3008
      %v3011 = vadd.f32 %v2997, %v3009
      %v3012 = vadd.f32 %v2998, %v3009
      %v3013 = vadd.f32 %v2999, %v3009
      %v3014 = vadd.f32 %v3000, %v3009
      %v3015 = vadd.f32 %v3001, %v3009
      %v3016 = vadd.f32 %v3002, %v3009
      %v3017 = vadd.f32 %v3003, %v3009
      %v3018 = vadd.f32 %v3004, %v3009
      %v3019 = vxor.u32 %v3011, 2147483648
      %v3020 = vxor.u32 %v3012, 2147483648
      %v3021 = vxor.u32 %v3013, 2147483648
      %v3022 = vxor.u32 %v3014, 2147483648
      %v3023 = vxor.u32 %v3015, 2147483648
      %v3024 = vxor.u32 %v3016, 2147483648
      %v3025 = vxor.u32 %v3017, 2147483648
      %v3026 = vxor.u32 %v3018, 2147483648
      %v3027 = vmul.f32 %v3019, 1.442695
      %v3028 = vpow.pop %v3027
      %v3029 = vmul.f32 %v3020, 1.442695
      %v3030 = vpow.pop %v3029
      %v3031 = vmul.f32 %v3021, 1.442695
      %v3032 = vpow.pop %v3031
      %v3033 = vmul.f32 %v3022, 1.442695
      %v3034 = vpow.pop %v3033
      %v3035 = vmul.f32 %v3023, 1.442695
      %v3036 = vpow.pop %v3035
      %v3037 = vmul.f32 %v3024, 1.442695
      %v3038 = vpow.pop %v3037
      %v3039 = vmul.f32 %v3025, 1.442695
      %v3040 = vpow.pop %v3039
      %v3041 = vmul.f32 %v3026, 1.442695
      %v3042 = vpow.pop %v3041
      %v3043 = vadd.f32 %v3028, 1.0
      %v3044 = vadd.f32 %v3030, 1.0
      %v3045 = vadd.f32 %v3032, 1.0
      %v3046 = vadd.f32 %v3034, 1.0
      %v3047 = vadd.f32 %v3036, 1.0
      %v3048 = vadd.f32 %v3038, 1.0
      %v3049 = vadd.f32 %v3040, 1.0
      %v3050 = vadd.f32 %v3042, 1.0
      %v3051 = vrcp.pop %v3043
      %v3052 = vmul.f32 1.0, %v3051
      %v3053 = vrcp.pop %v3044
      %v3054 = vmul.f32 1.0, %v3053
      %v3055 = vrcp.pop %v3045
      %v3056 = vmul.f32 1.0, %v3055
      %v3057 = vrcp.pop %v3046
      %v3058 = vmul.f32 1.0, %v3057
      %v3059 = vrcp.pop %v3047
      %v3060 = vmul.f32 1.0, %v3059
      %v3061 = vrcp.pop %v3048
      %v3062 = vmul.f32 1.0, %v3061
      %v3063 = vrcp.pop %v3049
      %v3064 = vmul.f32 1.0, %v3063
      %v3065 = vrcp.pop %v3050
      %v3066 = vmul.f32 1.0, %v3065
      %v3067 = vmul.f32 %v3011, %v3052
      %v3068 = vmul.f32 %v3012, %v3054
      %v3069 = vmul.f32 %v3013, %v3056
      %v3070 = vmul.f32 %v3014, %v3058
      %v3071 = vmul.f32 %v3015, %v3060
      %v3072 = vmul.f32 %v3016, %v3062
      %v3073 = vmul.f32 %v3017, %v3064
      %v3074 = vmul.f32 %v3018, %v3066
      %v3075 = vpack.c.bf16 %v3068, %v3067
      %v3076 = vpack.c.bf16 %v3070, %v3069
      %v3077 = vpack.c.bf16 %v3072, %v3071
      %v3078 = vpack.c.bf16 %v3074, %v3073
      %v3079 = vld [vmem:[%s35] sm:$0xf]
      %v3080 = vld [vmem:[%s35 + $0x4] sm:$0xf]
      %v3081 = vld [vmem:[%s37] sm:$0xff]
      %v3082 = vld [vmem:[%s37 + $0x8] sm:$0xff]
      %3084 = vset.pattern.permute.xlu0 0
      %3085 = vperm.xlu0 %3084, %v3081
      %v3086 = vpop.permute.xlu0 %3085
      %3089 = vset.pattern.permute.xlu0 0
      %3090 = vperm.xlu0 %3089, %v3082
      %v3091 = vpop.permute.xlu0 %3090
      %v3095 = vunpack.c.l.b16 %v3079
      %v3096 = vunpack.c.l.b16 %v3080
      %v3097 = vpack.c.b16 %v3096, %v3095
      %v3099 = vsel %vm1343, %v3097, 0
      %v3102 = vsel %vm1343, %v3075, 0
      %v3105 = vsel %vm1343, %v3076, 0
      %v3108 = vsel %vm1343, %v3077, 0
      %v3111 = vsel %vm1343, %v3078, 0
      %3113 = vmatprep.subr.bf16.mxu0 0
      %3114 = vmatpush1.bf16.xpose.msra.mxu0 %v3102
      %3115 = vmatprep.subr.bf16.mxu0 0
      %3116 = vmatpush1.bf16.xpose.msra.mxu0 %v3105
      %3117 = vmatprep.subr.bf16.mxu0 0
      %3118 = vmatpush1.bf16.xpose.msra.mxu0 %v3108
      %3119 = vmatprep.subr.bf16.mxu0 0
      %3120 = vmatpush1.bf16.xpose.msra.mxu0 %v3111
      %3121 = vmatprep.subr.bf16.mxu0 0
      %3122 = vmatpush1.bf16.xpose.msra.mxu0 0
      %3123 = vmatprep.subr.bf16.mxu0 0
      %3124 = vmatpush1.bf16.xpose.msra.mxu0 0
      %3125 = vmatprep.subr.bf16.mxu0 0
      %3126 = vmatpush1.bf16.xpose.msra.mxu0 0
      %3127 = vmatprep.subr.bf16.mxu0 0
      %3128 = vmatpush1.bf16.xpose.msra.mxu0 0
      %3129 = vmatprep.subr.bf16.mxu0 0
      %3130 = vmatpush1.bf16.xpose.msra.mxu0 0
      %3131 = vmatprep.subr.bf16.mxu0 0
      %3132 = vmatpush1.bf16.xpose.msra.mxu0 0
      %3133 = vmatprep.subr.bf16.mxu0 0
      %3134 = vmatpush1.bf16.xpose.msra.mxu0 0
      %3135 = vmatprep.subr.bf16.mxu0 0
      %3136 = vmatpush1.bf16.xpose.msra.mxu0 0
      %3137 = vmatprep.subr.bf16.mxu0 0
      %3138 = vmatpush1.bf16.xpose.msra.mxu0 0
      %3139 = vmatprep.subr.bf16.mxu0 0
      %3140 = vmatpush1.bf16.xpose.msra.mxu0 0
      %3141 = vmatprep.subr.bf16.mxu0 0
      %3142 = vmatpush1.bf16.xpose.msra.mxu0 0
      %3143 = vmatprep.subr.bf16.mxu0 0
      %3144 = vmatpush1.bf16.xpose.msra.mxu0 0
      %3145 = vmatprep.mubr.bf16.mxu0 0
      %3146 = vmatmul.mubr.bf16.gmra.mrb[0].mxu0 %v3099
      %v3147 = vpop.f32.mrb[0].mxu0
      %v3148 = vadd.f32 %v3086, %v3147
      %v3149 = vpop.f32.mrb[0].mxu0
      %v3150 = vpop.f32.mrb[0].mxu0
      %v3151 = vadd.f32 %v3091, %v3150
      %v3152 = vpop.f32.mrb[0].mxu0
      %3153 = vdwg.mxu0
      %v3154 = vadd.f32 %v3148, %v2360
      %v3155 = vadd.f32 %v3151, %v2363
      %3156 = vst.msk [vmem:[%s966] sm:$0xff] %vm1470, %v3154
      %3157 = vst.msk [vmem:[%s966 + $0x8] sm:$0xff] %vm1470, %v3155
      %v3158 = vld [vmem:[%s39] sm:$0xf]
      %v3159 = vld [vmem:[%s39 + $0x4] sm:$0xf]
      %v3160 = vld [vmem:[%s39 + $0x8] sm:$0xf]
      %v3161 = vld [vmem:[%s39 + $0xc] sm:$0xf]
      %v3162 = vpack.c.bf16 %v3155, %v3154
      %v3167 = vunpack.c.l.b16 %v3158
      %v3168 = vunpack.c.l.b16 %v3159
      %v3169 = vunpack.c.l.b16 %v3160
      %v3170 = vunpack.c.l.b16 %v3161
      %v3171 = vpack.c.b16 %v3168, %v3167
      %v3172 = vpack.c.b16 %v3170, %v3169
      %v3174 = vsel %vm1343, %v3171, 0
      %v3177 = vsel %vm1343, %v3172, 0
      %3179 = vmatprep.subr.bf16.mxu0 0
      %3180 = vmatpush1.bf16.msra.mxu0 %v3162
      %3181 = vmatprep.subr.bf16.mxu0 0
      %3182 = vmatpush1.bf16.msra.mxu0 0
      %3183 = vmatprep.subr.bf16.mxu0 0
      %3184 = vmatpush1.bf16.msra.mxu0 0
      %3185 = vmatprep.subr.bf16.mxu0 0
      %3186 = vmatpush1.bf16.msra.mxu0 0
      %3187 = vmatprep.subr.bf16.mxu0 0
      %3188 = vmatpush1.bf16.msra.mxu0 0
      %3189 = vmatprep.subr.bf16.mxu0 0
      %3190 = vmatpush1.bf16.msra.mxu0 0
      %3191 = vmatprep.subr.bf16.mxu0 0
      %3192 = vmatpush1.bf16.msra.mxu0 0
      %3193 = vmatprep.subr.bf16.mxu0 0
      %3194 = vmatpush1.bf16.msra.mxu0 0
      %3195 = vmatprep.subr.bf16.mxu0 0
      %3196 = vmatpush1.bf16.msra.mxu0 0
      %3197 = vmatprep.subr.bf16.mxu0 0
      %3198 = vmatpush1.bf16.msra.mxu0 0
      %3199 = vmatprep.subr.bf16.mxu0 0
      %3200 = vmatpush1.bf16.msra.mxu0 0
      %3201 = vmatprep.subr.bf16.mxu0 0
      %3202 = vmatpush1.bf16.msra.mxu0 0
      %3203 = vmatprep.subr.bf16.mxu0 0
      %3204 = vmatpush1.bf16.msra.mxu0 0
      %3205 = vmatprep.subr.bf16.mxu0 0
      %3206 = vmatpush1.bf16.msra.mxu0 0
      %3207 = vmatprep.subr.bf16.mxu0 0
      %3208 = vmatpush1.bf16.msra.mxu0 0
      %3209 = vmatprep.subr.bf16.mxu0 0
      %3210 = vmatpush1.bf16.msra.mxu0 0
      %3211 = vmatprep.mubr.bf16.mxu0 0
      %3212 = vmatmul.mubr.bf16.gmra.mrb[0].mxu0 %v3174
      %v3213 = vpop.f32.mrb[0].mxu0
      %v3214 = vadd.f32 0.0, %v3213
      %v3215 = vpop.f32.mrb[0].mxu0
      %v3216 = vpop.f32.mrb[0].mxu0
      %v3217 = vadd.f32 0.0, %v3216
      %v3218 = vpop.f32.mrb[0].mxu0
      %3219 = vmatprep.mubr.bf16.mxu0 0
      %3220 = vmatmul.mubr.bf16.gmra.mrb[0].mxu0 %v3177
      %v3221 = vpop.f32.mrb[0].mxu0
      %v3222 = vadd.f32 0.0, %v3221
      %v3223 = vpop.f32.mrb[0].mxu0
      %v3224 = vpop.f32.mrb[0].mxu0
      %v3225 = vadd.f32 0.0, %v3224
      %v3226 = vpop.f32.mrb[0].mxu0
      %3227 = vdwg.mxu0
      %v3228 = vld [vmem:[%s41] sm:$0xff]
      %v3229 = vld [vmem:[%s41 + $0x8] sm:$0xff]
      %v3230 = vld [vmem:[%s41 + $0x10] sm:$0xff]
      %v3231 = vld [vmem:[%s41 + $0x18] sm:$0xff]
      %3233 = vset.pattern.permute.xlu0 0
      %3234 = vperm.xlu0 %3233, %v3228
      %v3235 = vpop.permute.xlu0 %3234
      %3238 = vset.pattern.permute.xlu0 0
      %3239 = vperm.xlu0 %3238, %v3229
      %v3240 = vpop.permute.xlu0 %3239
      %3243 = vset.pattern.permute.xlu0 0
      %3244 = vperm.xlu0 %3243, %v3230
      %v3245 = vpop.permute.xlu0 %3244
      %3248 = vset.pattern.permute.xlu0 0
      %3249 = vperm.xlu0 %3248, %v3231
      %v3250 = vpop.permute.xlu0 %3249
      %v3252 = vmul.f32 %v3214, %v3235
      %v3253 = vmul.f32 %v3217, %v3240
      %v3254 = vmul.f32 %v3222, %v3245
      %v3255 = vmul.f32 %v3225, %v3250
      %v3256 = vld [vmem:[%s43] sm:$0xff]
      %v3257 = vld [vmem:[%s43 + $0x8] sm:$0xff]
      %v3258 = vld [vmem:[%s43 + $0x10] sm:$0xff]
      %v3259 = vld [vmem:[%s43 + $0x18] sm:$0xff]
      %3261 = vset.pattern.permute.xlu0 0
      %3262 = vperm.xlu0 %3261, %v3256
      %v3263 = vpop.permute.xlu0 %3262
      %3266 = vset.pattern.permute.xlu0 0
      %3267 = vperm.xlu0 %3266, %v3257
      %v3268 = vpop.permute.xlu0 %3267
      %3271 = vset.pattern.permute.xlu0 0
      %3272 = vperm.xlu0 %3271, %v3258
      %v3273 = vpop.permute.xlu0 %3272
      %3276 = vset.pattern.permute.xlu0 0
      %3277 = vperm.xlu0 %3276, %v3259
      %v3278 = vpop.permute.xlu0 %3277
      %v3280 = vadd.f32 %v3252, %v3263
      %v3281 = vadd.f32 %v3253, %v3268
      %v3282 = vadd.f32 %v3254, %v3273
      %v3283 = vadd.f32 %v3255, %v3278
      %3284 = vst.msk [vmem:[%s971] sm:$0xff] %vm1470, %v3214
      %3285 = vst.msk [vmem:[%s971 + $0x8] sm:$0xff] %vm1470, %v3217
      %3286 = vst.msk [vmem:[%s971 + $0x10] sm:$0xff] %vm1470, %v3222
      %3287 = vst.msk [vmem:[%s971 + $0x18] sm:$0xff] %vm1470, %v3225
      %3288 = vst.msk [vmem:[%s976] sm:$0xff] %vm1470, %v3280
      %3289 = vst.msk [vmem:[%s976 + $0x8] sm:$0xff] %vm1470, %v3281
      %3290 = vst.msk [vmem:[%s976 + $0x10] sm:$0xff] %vm1470, %v3282
      %3291 = vst.msk [vmem:[%s976 + $0x18] sm:$0xff] %vm1470, %v3283
      %v3292 = vxor.u32 %v3280, 2147483648
      %v3293 = vxor.u32 %v3281, 2147483648
      %v3294 = vxor.u32 %v3282, 2147483648
      %v3295 = vxor.u32 %v3283, 2147483648
      %v3296 = vmul.f32 %v3292, 1.442695
      %v3297 = vpow.pop %v3296
      %v3298 = vmul.f32 %v3293, 1.442695
      %v3299 = vpow.pop %v3298
      %v3300 = vmul.f32 %v3294, 1.442695
      %v3301 = vpow.pop %v3300
      %v3302 = vmul.f32 %v3295, 1.442695
      %v3303 = vpow.pop %v3302
      %v3304 = vadd.f32 %v3297, 1.0
      %v3305 = vadd.f32 %v3299, 1.0
      %v3306 = vadd.f32 %v3301, 1.0
      %v3307 = vadd.f32 %v3303, 1.0
      %v3308 = vrcp.pop %v3304
      %v3309 = vmul.f32 1.0, %v3308
      %v3310 = vrcp.pop %v3305
      %v3311 = vmul.f32 1.0, %v3310
      %v3312 = vrcp.pop %v3306
      %v3313 = vmul.f32 1.0, %v3312
      %v3314 = vrcp.pop %v3307
      %v3315 = vmul.f32 1.0, %v3314
      %v3316 = vmul.f32 %v3280, %v3309
      %v3317 = vmul.f32 %v3281, %v3311
      %v3318 = vmul.f32 %v3282, %v3313
      %v3319 = vmul.f32 %v3283, %v3315
      %3320 = vst.msk [vmem:[%s981] sm:$0xff] %vm1470, %v3316
      %3321 = vst.msk [vmem:[%s981 + $0x8] sm:$0xff] %vm1470, %v3317
      %3322 = vst.msk [vmem:[%s981 + $0x10] sm:$0xff] %vm1470, %v3318
      %3323 = vst.msk [vmem:[%s981 + $0x18] sm:$0xff] %vm1470, %v3319
      %p3324 = scmp.lt.s32.totalorder %s71, 1
      %s3325 = scalar_select %p3324, %s71, 1
      %s3326 = smul.addr %s3325, 8
      %s3327 = scalar_lea.vmem %s45, %s3326
      %p3328 = scmp.lt.s32.totalorder %s71, 1
      %s3329 = scalar_select %p3328, %s71, 1
      %s3330 = smul.addr %s3329, 8
      %s3331 = scalar_lea.vmem %s47, %s3330
      %p3332 = scmp.lt.s32.totalorder %s71, 1
      %s3333 = scalar_select %p3332, %s71, 1
      %s3334 = smul.addr %s3333, 8
      %s3335 = scalar_lea.vmem %s49, %s3334
      %p3336 = scmp.lt.s32.totalorder %s71, 1
      %s3337 = scalar_select %p3336, %s71, 1
      %s3338 = smul.addr %s3337, 2
      %s3339 = smul.addr %s3338, 8
      %s3340 = scalar_lea.vmem %s51, %s3339
      %p3341 = scmp.lt.s32.totalorder %s71, 1
      %s3342 = scalar_select %p3341, %s71, 1
      %s3343 = smul.addr %s3342, 2
      %s3344 = smul.addr %s3343, 8
      %s3345 = scalar_lea.vmem %s53, %s3344
      %p3346 = scmp.lt.s32.totalorder %s71, 1
      %s3347 = scalar_select %p3346, %s71, 1
      %s3348 = smul.addr %s3347, 4
      %s3349 = smul.addr %s3348, 8
      %s3350 = scalar_lea.vmem %s55, %s3349
      %p3351 = scmp.lt.s32.totalorder %s71, 1
      %s3352 = scalar_select %p3351, %s71, 1
      %s3353 = smul.addr %s3352, 4
      %s3354 = smul.addr %s3353, 8
      %s3355 = scalar_lea.vmem %s57, %s3354
      %p3356 = scmp.lt.s32.totalorder %s71, 1
      %s3357 = scalar_select %p3356, %s71, 1
      %s3358 = smul.addr %s3357, 4
      %s3359 = smul.addr %s3358, 8
      %s3360 = scalar_lea.vmem %s59, %s3359
      // Predicated region
      $region109: #{_lambda_.1} parent=107 // pred_check
        %p3361 = pneg %p556
      $region110: #{_lambda_.1} parent=107 // pred_check_branch
        %3363 = sbr.rel (%p3361) target = $region112
      $region111: #{_lambda_.1} parent=107 // pred_region
        _
      $region112: #{_lambda_.1} parent=107 // pred_fallthru
        _
      // Predicated region
      $region113: #{_lambda_.1} parent=107 // pred_check
        %p3364 = pneg %p582
      $region114: #{_lambda_.1} parent=107 // pred_check_branch
        %3366 = sbr.rel (%p3364) target = $region116
      $region115: #{_lambda_.1} parent=107 // pred_region
        _
      $region116: #{_lambda_.1} parent=107 // pred_fallthru
        _
      // Predicated region
      $region117: #{_lambda_.1} parent=107 // pred_check
        %p3367 = pneg %p608
      $region118: #{_lambda_.1} parent=107 // pred_check_branch
        %3369 = sbr.rel (%p3367) target = $region120
      $region119: #{_lambda_.1} parent=107 // pred_region
        _
      $region120: #{_lambda_.1} parent=107 // pred_fallthru
        _
      // Predicated region
      $region121: #{_lambda_.1} parent=107 // pred_check
        %p3370 = pneg %p634
      $region122: #{_lambda_.1} parent=107 // pred_check_branch
        %3372 = sbr.rel (%p3370) target = $region124
      $region123: #{_lambda_.1} parent=107 // pred_region
        _
      $region124: #{_lambda_.1} parent=107 // pred_fallthru
        _
      // Predicated region
      $region125: #{_lambda_.1} parent=107 // pred_check
        %p3373 = pneg %p660
      $region126: #{_lambda_.1} parent=107 // pred_check_branch
        %3375 = sbr.rel (%p3373) target = $region128
      $region127: #{_lambda_.1} parent=107 // pred_region
        _
      $region128: #{_lambda_.1} parent=107 // pred_fallthru
        _
      // Predicated region
      $region129: #{_lambda_.1} parent=107 // pred_check
        %p3376 = pneg %p686
      $region130: #{_lambda_.1} parent=107 // pred_check_branch
        %3378 = sbr.rel (%p3376) target = $region132
      $region131: #{_lambda_.1} parent=107 // pred_region
        _
      $region132: #{_lambda_.1} parent=107 // pred_fallthru
        _
      // Predicated region
      $region133: #{_lambda_.1} parent=107 // pred_check
        %p3379 = pneg %p712
      $region134: #{_lambda_.1} parent=107 // pred_check_branch
        %3381 = sbr.rel (%p3379) target = $region136
      $region135: #{_lambda_.1} parent=107 // pred_region
        _
      $region136: #{_lambda_.1} parent=107 // pred_fallthru
        _
      // Predicated region
      $region137: #{_lambda_.1} parent=107 // pred_check
        %p3382 = pneg %p738
      $region138: #{_lambda_.1} parent=107 // pred_check_branch
        %3384 = sbr.rel (%p3382) target = $region140
      $region139: #{_lambda_.1} parent=107 // pred_region
        _
      $region140: #{_lambda_.1} parent=107 // pred_fallthru
        _
    $region108: #{_lambda_.1} parent=5 // pred_fallthru
      _
    %p3385 = scmp.le.s32.totalorder 2, %s66
    // Predicated region
    $region141: #{_lambda_.1} parent=5 // pred_check
      %p3386 = pneg %p3385
    $region142: #{_lambda_.1} parent=5 // pred_check_branch
      %3388 = sbr.rel (%p3386) target = $region144
    $region143: #{_lambda_.1} parent=5 // pred_region
      %s3389 = ssub.s32 %s66, 2
      // Predicated region
      $region145: #{_lambda_.1} parent=143 // pred_check
        %p3390 = pneg %p562
      $region146: #{_lambda_.1} parent=143 // pred_check_branch
        %3392 = sbr.rel (%p3390) target = $region148
      $region147: #{_lambda_.1} parent=143 // pred_region
        %p3393 = scmp.lt.s32.totalorder %s72, 1
        %s3394 = scalar_select %p3393, %s72, 1
        %s3395 = smul.addr %s3394, 8
        %s3396 = scalar_lea.vmem %s45, %s3395
      $region148: #{_lambda_.1} parent=143 // pred_fallthru
        _
      // Predicated region
      $region149: #{_lambda_.1} parent=143 // pred_check
        %p3397 = pneg %p588
      $region150: #{_lambda_.1} parent=143 // pred_check_branch
        %3399 = sbr.rel (%p3397) target = $region152
      $region151: #{_lambda_.1} parent=143 // pred_region
        %p3400 = scmp.lt.s32.totalorder %s72, 1
        %s3401 = scalar_select %p3400, %s72, 1
        %s3402 = smul.addr %s3401, 8
        %s3403 = scalar_lea.vmem %s47, %s3402
      $region152: #{_lambda_.1} parent=143 // pred_fallthru
        _
      // Predicated region
      $region153: #{_lambda_.1} parent=143 // pred_check
        %p3404 = pneg %p614
      $region154: #{_lambda_.1} parent=143 // pred_check_branch
        %3406 = sbr.rel (%p3404) target = $region156
      $region155: #{_lambda_.1} parent=143 // pred_region
        %p3407 = scmp.lt.s32.totalorder %s72, 1
        %s3408 = scalar_select %p3407, %s72, 1
        %s3409 = smul.addr %s3408, 8
        %s3410 = scalar_lea.vmem %s49, %s3409
      $region156: #{_lambda_.1} parent=143 // pred_fallthru
        _
      // Predicated region
      $region157: #{_lambda_.1} parent=143 // pred_check
        %p3411 = pneg %p640
      $region158: #{_lambda_.1} parent=143 // pred_check_branch
        %3413 = sbr.rel (%p3411) target = $region160
      $region159: #{_lambda_.1} parent=143 // pred_region
        %p3414 = scmp.lt.s32.totalorder %s72, 1
        %s3415 = scalar_select %p3414, %s72, 1
        %s3416 = smul.addr %s3415, 2
        %s3417 = smul.addr %s3416, 8
        %s3418 = scalar_lea.vmem %s51, %s3417
      $region160: #{_lambda_.1} parent=143 // pred_fallthru
        _
      // Predicated region
      $region161: #{_lambda_.1} parent=143 // pred_check
        %p3419 = pneg %p666
      $region162: #{_lambda_.1} parent=143 // pred_check_branch
        %3421 = sbr.rel (%p3419) target = $region164
      $region163: #{_lambda_.1} parent=143 // pred_region
        %p3422 = scmp.lt.s32.totalorder %s72, 1
        %s3423 = scalar_select %p3422, %s72, 1
        %s3424 = smul.addr %s3423, 2
        %s3425 = smul.addr %s3424, 8
        %s3426 = scalar_lea.vmem %s53, %s3425
      $region164: #{_lambda_.1} parent=143 // pred_fallthru
        _
      // Predicated region
      $region165: #{_lambda_.1} parent=143 // pred_check
        %p3427 = pneg %p692
      $region166: #{_lambda_.1} parent=143 // pred_check_branch
        %3429 = sbr.rel (%p3427) target = $region168
      $region167: #{_lambda_.1} parent=143 // pred_region
        %p3430 = scmp.lt.s32.totalorder %s72, 1
        %s3431 = scalar_select %p3430, %s72, 1
        %s3432 = smul.addr %s3431, 4
        %s3433 = smul.addr %s3432, 8
        %s3434 = scalar_lea.vmem %s55, %s3433
      $region168: #{_lambda_.1} parent=143 // pred_fallthru
        _
      // Predicated region
      $region169: #{_lambda_.1} parent=143 // pred_check
        %p3435 = pneg %p718
      $region170: #{_lambda_.1} parent=143 // pred_check_branch
        %3437 = sbr.rel (%p3435) target = $region172
      $region171: #{_lambda_.1} parent=143 // pred_region
        %p3438 = scmp.lt.s32.totalorder %s72, 1
        %s3439 = scalar_select %p3438, %s72, 1
        %s3440 = smul.addr %s3439, 4
        %s3441 = smul.addr %s3440, 8
        %s3442 = scalar_lea.vmem %s57, %s3441
      $region172: #{_lambda_.1} parent=143 // pred_fallthru
        _
      // Predicated region
      $region173: #{_lambda_.1} parent=143 // pred_check
        %p3443 = pneg %p744
      $region174: #{_lambda_.1} parent=143 // pred_check_branch
        %3445 = sbr.rel (%p3443) target = $region176
      $region175: #{_lambda_.1} parent=143 // pred_region
        %p3446 = scmp.lt.s32.totalorder %s72, 1
        %s3447 = scalar_select %p3446, %s72, 1
        %s3448 = smul.addr %s3447, 4
        %s3449 = smul.addr %s3448, 8
        %s3450 = scalar_lea.vmem %s59, %s3449
      $region176: #{_lambda_.1} parent=143 // pred_fallthru
        _
    $region144: #{_lambda_.1} parent=5 // pred_fallthru
      _
  $region6: #{_lambda_.1} parent=0 // loop_footer
    %s70 = sadd.s32 1, %s66
  $region7: #{_lambda_.1} parent=0 // loop_footer_branch
    %65 = sbr.rel target = $region3
  $region8: #{_lambda_.1} parent=0 // loop_exit
    _

</llo_original>
